<compile_context>
chip_gen: v5e
topology: v5e:2x2
jax: 0.10.0
libtpu: 0.0.40
codegen_flags: <defaults>
</compile_context>

<pallas_src>
import functools

import jax
import jax.numpy as jnp
from jax.experimental import pallas as pl
from jax.experimental.pallas import tpu as pltpu

NH = 1  # number of attention heads (fixed model config; out_proj fusion assumes nh == 1)


# ----------------------------- Pallas kernels -----------------------------

def _conv_kernel(p_ref, w_ref, s_ref, b_ref, o_ref, *, relu):
    acc = jnp.dot(w_ref[...], p_ref[...], preferred_element_type=jnp.float32)
    acc = acc * s_ref[...] + b_ref[...]
    if relu:
        acc = jnp.maximum(acc, 0.0)
    o_ref[...] = acc


def _conv_res_kernel(p_ref, w_ref, s_ref, b_ref, r_ref, o_ref):
    # conv + folded BN + residual add + ReLU in one epilogue.
    acc = jnp.dot(w_ref[...], p_ref[...], preferred_element_type=jnp.float32)
    o_ref[...] = jnp.maximum(acc * s_ref[...] + b_ref[...] + r_ref[...], 0.0)


def conv_cm(patches, w_mat, scale, bias, *, relu=True, residual=None, n_split=1):
    """W (Cout,K) @ patches (K,M) + folded BN affine (+residual) (+ReLU).

    Output is (Cout, M) with M = B*H*W on lanes (lane-dense stores).  For the
    large M=512 layers the M axis is split across a parallel grid so the
    second TensorCore on v7x gets used.
    """
    K, M = patches.shape
    cout = w_mat.shape[0]
    bm = M // n_split
    scale = scale.reshape(cout, 1).astype(jnp.float32)
    bias = bias.reshape(cout, 1).astype(jnp.float32)
    in_specs = [pl.BlockSpec((K, bm), lambda i: (0, i)),
                pl.BlockSpec((cout, K), lambda i: (0, 0)),
                pl.BlockSpec((cout, 1), lambda i: (0, 0)),
                pl.BlockSpec((cout, 1), lambda i: (0, 0))]
    args = [patches, w_mat, scale, bias]
    if residual is None:
        kern = functools.partial(_conv_kernel, relu=relu)
    else:
        kern = _conv_res_kernel
        in_specs.append(pl.BlockSpec((cout, bm), lambda i: (0, i)))
        args.append(residual)
    return pl.pallas_call(
        kern,
        out_shape=jax.ShapeDtypeStruct((cout, M), jnp.float32),
        grid=(n_split,),
        in_specs=in_specs,
        out_specs=pl.BlockSpec((cout, bm), lambda i: (0, i)),
        compiler_params=pltpu.CompilerParams(dimension_semantics=("parallel",)),
    )(*args)


def _aa_front_kernel(p_ref, wc_ref, s_ref, b_ref, wq_ref, conv_ref, qkv_ref, *, cin):
    """3x3 conv branch (+BN slice +ReLU) and the qkv 1x1 projection fused.

    The qkv 1x1 stride-s projection input equals the center tap of the 3x3
    stride-s patches, so both matmuls share one patch operand.
    """
    patches = p_ref[...]                                       # (9*Cin, M) bf16
    acc = jnp.dot(wc_ref[...], patches, preferred_element_type=jnp.float32)
    conv_ref[...] = jnp.maximum(acc * s_ref[...] + b_ref[...], 0.0)
    center = patches[4 * cin:5 * cin, :]                       # (Cin, M)
    qkv_ref[...] = jnp.dot(wq_ref[...], center, preferred_element_type=jnp.float32)


def aa_front(patches, w_conv, scale, bias, w_qkv, cin):
    K, M = patches.shape
    c_conv = w_conv.shape[0]
    c_qkv = w_qkv.shape[0]
    return pl.pallas_call(
        functools.partial(_aa_front_kernel, cin=cin),
        out_shape=(jax.ShapeDtypeStruct((c_conv, M), jnp.float32),
                   jax.ShapeDtypeStruct((c_qkv, M), jnp.float32)),
        grid=(1,),
        in_specs=[pl.BlockSpec((K, M), lambda i: (0, 0)),
                  pl.BlockSpec((c_conv, K), lambda i: (0, 0)),
                  pl.BlockSpec((c_conv, 1), lambda i: (0, 0)),
                  pl.BlockSpec((c_conv, 1), lambda i: (0, 0)),
                  pl.BlockSpec((c_qkv, cin), lambda i: (0, 0))],
        out_specs=(pl.BlockSpec((c_conv, M), lambda i: (0, 0)),
                   pl.BlockSpec((c_qkv, M), lambda i: (0, 0))),
        compiler_params=pltpu.CompilerParams(dimension_semantics=("parallel",)),
    )(patches, w_conv, scale.reshape(c_conv, 1).astype(jnp.float32),
      bias.reshape(c_conv, 1).astype(jnp.float32), w_qkv)


def _attn_kernel(q_ref, k_ref, v_ref, rel_ref, wop_ref, s_ref, b_ref, o_ref):
    """All B*nh heads in one grid step: softmax(q@kT + rel) @ v, then the
    out_proj 1x1 conv + BN slice + ReLU fused into the epilogue."""
    logits = jnp.einsum('bld,bmd->blm', q_ref[...], k_ref[...],
                        preferred_element_type=jnp.float32) + rel_ref[...]
    m = jnp.max(logits, axis=-1, keepdims=True)
    p = jnp.exp(logits - m)
    w = p * pl.reciprocal(jnp.sum(p, axis=-1, keepdims=True), approx=True)
    attn = jnp.einsum('blm,bmd->bld', w.astype(jnp.bfloat16), v_ref[...],
                      preferred_element_type=jnp.float32)       # (BN, L, dvh)
    a2 = attn.reshape(-1, attn.shape[-1]).astype(jnp.bfloat16)  # (BN*L, dvh)
    y = jnp.dot(a2, wop_ref[...], preferred_element_type=jnp.float32)
    o_ref[...] = jnp.maximum(y * s_ref[...] + b_ref[...], 0.0)


def attention_block(q, k, v, rel, wop_t, scale, bias):
    BN, L, dkh = q.shape
    dvh = v.shape[-1]
    dv = wop_t.shape[1]
    return pl.pallas_call(
        _attn_kernel,
        out_shape=jax.ShapeDtypeStruct((BN * L, dv), jnp.float32),
        grid=(1,),
        in_specs=[pl.BlockSpec((BN, L, dkh), lambda i: (0, 0, 0)),
                  pl.BlockSpec((BN, L, dkh), lambda i: (0, 0, 0)),
                  pl.BlockSpec((BN, L, dvh), lambda i: (0, 0, 0)),
                  pl.BlockSpec((BN, L, L), lambda i: (0, 0, 0)),
                  pl.BlockSpec((dvh, dv), lambda i: (0, 0)),
                  pl.BlockSpec((1, dv), lambda i: (0, 0)),
                  pl.BlockSpec((1, dv), lambda i: (0, 0))],
        out_specs=pl.BlockSpec((BN * L, dv), lambda i: (0, 0)),
        compiler_params=pltpu.CompilerParams(dimension_semantics=("parallel",)),
    )(q, k, v, rel, wop_t,
      scale.reshape(1, dv).astype(jnp.float32),
      bias.reshape(1, dv).astype(jnp.float32))


def _aa_back_kernel(p_ref, w2_ref, s2_ref, b2_ref, xd_ref, wd_ref, sd_ref,
                    bd_ref, o_ref):
    """conv2 + BN2 + 1x1 strided downsample + BN + residual add + ReLU."""
    acc = jnp.dot(w2_ref[...], p_ref[...], preferred_element_type=jnp.float32)
    acc = acc * s2_ref[...] + b2_ref[...]
    ident = jnp.dot(wd_ref[...], xd_ref[...], preferred_element_type=jnp.float32)
    ident = ident * sd_ref[...] + bd_ref[...]
    o_ref[...] = jnp.maximum(acc + ident, 0.0)


def _aa_back_head_kernel(p_ref, w2_ref, s2_ref, b2_ref, xd_ref, wd_ref, sd_ref,
                         bd_ref, pool_ref, wfc_ref, bfc_ref, o_ref):
    """Same as _aa_back_kernel plus fused global-avg-pool (as a matmul with a
    pooling matrix) and the final FC -> logits (num_classes, B)."""
    acc = jnp.dot(w2_ref[...], p_ref[...], preferred_element_type=jnp.float32)
    acc = acc * s2_ref[...] + b2_ref[...]
    ident = jnp.dot(wd_ref[...], xd_ref[...], preferred_element_type=jnp.float32)
    ident = ident * sd_ref[...] + bd_ref[...]
    y = jnp.maximum(acc + ident, 0.0)                            # (planes, M)
    pooled = jnp.dot(y, pool_ref[...], preferred_element_type=jnp.float32)   # (planes, B)
    o_ref[...] = jnp.dot(wfc_ref[...], pooled,
                         preferred_element_type=jnp.float32) + bfc_ref[...]


def aa_back(patches, w2, s2, b2, x_ds, w_ds, s_ds, b_ds, *, head=None):
    K, M = patches.shape
    cout = w2.shape[0]
    cin = w_ds.shape[1]
    in_specs = [pl.BlockSpec((K, M), lambda i: (0, 0)),
                pl.BlockSpec((cout, K), lambda i: (0, 0)),
                pl.BlockSpec((cout, 1), lambda i: (0, 0)),
                pl.BlockSpec((cout, 1), lambda i: (0, 0)),
                pl.BlockSpec((cin, M), lambda i: (0, 0)),
                pl.BlockSpec((cout, cin), lambda i: (0, 0)),
                pl.BlockSpec((cout, 1), lambda i: (0, 0)),
                pl.BlockSpec((cout, 1), lambda i: (0, 0))]
    args = [patches, w2,
            s2.reshape(cout, 1).astype(jnp.float32),
            b2.reshape(cout, 1).astype(jnp.float32),
            x_ds, w_ds,
            s_ds.reshape(cout, 1).astype(jnp.float32),
            b_ds.reshape(cout, 1).astype(jnp.float32)]
    if head is None:
        kern = _aa_back_kernel
        out_shape = jax.ShapeDtypeStruct((cout, M), jnp.float32)
        out_spec = pl.BlockSpec((cout, M), lambda i: (0, 0))
    else:
        pool_mat, w_fc, b_fc = head
        ncls = w_fc.shape[0]
        B = pool_mat.shape[1]
        kern = _aa_back_head_kernel
        in_specs += [pl.BlockSpec((M, B), lambda i: (0, 0)),
                     pl.BlockSpec((ncls, cout), lambda i: (0, 0)),
                     pl.BlockSpec((ncls, 1), lambda i: (0, 0))]
        args += [pool_mat.astype(jnp.float32),
                 w_fc.astype(jnp.float32),
                 b_fc.reshape(ncls, 1).astype(jnp.float32)]
        out_shape = jax.ShapeDtypeStruct((ncls, B), jnp.float32)
        out_spec = pl.BlockSpec((ncls, B), lambda i: (0, 0))
    return pl.pallas_call(
        kern, out_shape=out_shape, grid=(1,),
        in_specs=in_specs, out_specs=out_spec,
        compiler_params=pltpu.CompilerParams(dimension_semantics=("parallel",)),
    )(*args)


# ----------------------------- JAX glue -----------------------------------

def im2col_T(x_cm, B, H, W, kh, kw, stride, pad):
    """x_cm: (C, B*H*W) channels-first -> transposed patches (kh*kw*C, B*Ho*Wo)
    in bf16, rows ordered (tap_i, tap_j, c), columns ordered (b, ho, wo)."""
    C = x_cm.shape[0]
    x4 = x_cm.reshape(C, B, H, W)
    if pad:
        x4 = jnp.pad(x4, ((0, 0), (0, 0), (pad, pad), (pad, pad)))
    Hp, Wp = H + 2 * pad, W + 2 * pad
    Ho = (Hp - kh) // stride + 1
    Wo = (Wp - kw) // stride + 1
    taps = [x4[:, :, i:i + stride * (Ho - 1) + 1:stride,
               j:j + stride * (Wo - 1) + 1:stride]
            for i in range(kh) for j in range(kw)]
    p = jnp.stack(taps, axis=0).reshape(kh * kw * C, B * Ho * Wo)
    return p.astype(jnp.bfloat16), Ho, Wo


def conv_w_mat(w):
    """PyTorch OIHW conv weight -> (Cout, kh*kw*Cin) bf16 matching im2col_T rows."""
    cout, cin, kh, kw = w.shape
    return jnp.transpose(w, (0, 2, 3, 1)).reshape(cout, kh * kw * cin).astype(jnp.bfloat16)


def strided_cm(x_cm, B, H, W, stride):
    C = x_cm.shape[0]
    return x_cm.reshape(C, B, H, W)[:, :, ::stride, ::stride].reshape(C, -1)


def rel_to_abs(x):
    B, nh, L, _ = x.shape
    x = jnp.pad(x, ((0, 0), (0, 0), (0, 0), (0, 1)))
    x = x.reshape(B, nh, L * 2 * L)
    x = jnp.pad(x, ((0, 0), (0, 0), (0, L - 1)))
    x = x.reshape(B, nh, L + 1, 2 * L - 1)
    return x[:, :, :L, L - 1:]


def relative_logits_1d(q, rel_k):
    """q: (B,nh,H,W,dkh), rel_k: (dkh, 2W-1) -> (B,nh,H,H,W,W)."""
    B, nh, H, W, dkh = q.shape
    rel_logits = jnp.einsum('bnhwd,dm->bnhwm', q, rel_k)
    rel_logits = rel_logits.reshape(B, nh * H, W, 2 * W - 1)
    rel_logits = rel_to_abs(rel_logits)
    rel_logits = rel_logits.reshape(B, nh, H, 1, W, W)
    return jnp.broadcast_to(rel_logits, (B, nh, H, H, W, W))


def basic_block_attn(x_cm, B, H, W, p, stride=2, head=None):
    """BasicBlock whose conv1 is AAConv2d (layers 2 & 3), with downsample.
    BN/ReLU of the enclosing block commute with the channel concat, so each
    branch fuses the corresponding BN channel-slice into its kernel."""
    aa = p['aa']
    dv = aa['out_proj_w'].shape[0]
    qkv_c = aa['qkv_w'].shape[0]
    dk = (qkv_c - dv) // 2
    nh = NH
    dkh, dvh = dk // nh, dv // nh
    c_conv = aa['conv_w'].shape[0]
    cin = x_cm.shape[0]

    # --- fused kernel 1: 3x3 conv branch (+BN+ReLU) and qkv 1x1 projection --
    patches, Ho, Wo = im2col_T(x_cm, B, H, W, 3, 3, stride, 1)
    conv_out, qkv = aa_front(patches, conv_w_mat(aa['conv_w']),
                             p['bn1_scale'][:c_conv], p['bn1_bias'][:c_conv],
                             conv_w_mat(aa['qkv_w']), cin)
    L = Ho * Wo

    # --- glue: split q/k/v, build relative-position bias --------------------
    q_cm = qkv[:dk]
    k_cm = qkv[dk:2 * dk]
    v_cm = qkv[2 * dk:]

    def to_blhd(t, dh):
        return t.reshape(nh, dh, B, L).transpose(2, 0, 3, 1)    # (B, nh, L, dh)

    q = to_blhd(q_cm, dkh) * dkh ** (-0.5)
    k = to_blhd(k_cm, dkh)
    v = to_blhd(v_cm, dvh)

    q5 = q.reshape(B, nh, Ho, Wo, dkh)
    w_rel = relative_logits_1d(q5, aa['key_rel_w'])
    w_rel = w_rel.transpose(0, 1, 2, 4, 3, 5).reshape(B, nh, L, L)
    h_rel = relative_logits_1d(q5.transpose(0, 1, 3, 2, 4), aa['key_rel_h'])
    h_rel = h_rel.transpose(0, 1, 4, 2, 5, 3).reshape(B, nh, L, L)
    rel = (w_rel + h_rel).reshape(B * nh, L, L).astype(jnp.float32)

    # --- fused kernel 2: attention + out_proj + BN slice + ReLU -------------
    wop_t = aa['out_proj_w'][:, :, 0, 0].T.astype(jnp.bfloat16)
    attn2d = attention_block(q.reshape(B * nh, L, dkh).astype(jnp.bfloat16),
                             k.reshape(B * nh, L, dkh).astype(jnp.bfloat16),
                             v.reshape(B * nh, L, dvh).astype(jnp.bfloat16),
                             rel, wop_t,
                             p['bn1_scale'][c_conv:], p['bn1_bias'][c_conv:])
    attn_cm = attn2d.T                                          # (dv, B*L)

    y_cm = jnp.concatenate([conv_out, attn_cm], axis=0)         # (planes, B*L)

    # --- fused kernel 3: conv2 + BN2 + downsample + residual + ReLU [+head] -
    p2, _, _ = im2col_T(y_cm, B, Ho, Wo, 3, 3, 1, 1)
    x_ds = strided_cm(x_cm, B, H, W, stride).astype(jnp.bfloat16)
    out = aa_back(p2, conv_w_mat(p['conv2_w']), p['bn2_scale'], p['bn2_bias'],
                  x_ds, conv_w_mat(p['ds_w']), p['ds_bn_scale'], p['ds_bn_bias'],
                  head=head)
    return out, Ho, Wo


def wide_resnet_forward(params, x_nchw):
    B, C_in, H, W = x_nchw.shape
    x_cm = x_nchw.astype(jnp.float32).transpose(1, 0, 2, 3).reshape(C_in, -1)

    # stem conv + BN + ReLU
    pch, _, _ = im2col_T(x_cm, B, H, W, 3, 3, 1, 1)
    x_cm = conv_cm(pch, conv_w_mat(params['conv1_w']),
                   params['bn1_scale'], params['bn1_bias'],
                   relu=True, n_split=2)

    # layer1: plain BasicBlock; residual add + ReLU fused into the conv2 kernel.
    l1 = params['layer1']
    pch, _, _ = im2col_T(x_cm, B, H, W, 3, 3, 1, 1)
    h = conv_cm(pch, conv_w_mat(l1['conv1_w']), l1['bn1_scale'], l1['bn1_bias'],
                relu=True, n_split=2)
    pch, _, _ = im2col_T(h, B, H, W, 3, 3, 1, 1)
    x_cm = conv_cm(pch, conv_w_mat(l1['conv2_w']), l1['bn2_scale'], l1['bn2_bias'],
                   residual=x_cm, n_split=2)

    # layer2 (attention-augmented, stride 2): 16x16 -> 8x8
    x_cm, H, W = basic_block_attn(x_cm, B, H, W, params['layer2'])

    # layer3 (attention-augmented, stride 2) with avgpool + FC fused into its
    # last kernel: 8x8 -> 4x4 -> logits.
    HW_out = (H // 2) * (W // 2)
    M_out = B * HW_out
    cols = jnp.arange(M_out) // HW_out
    pool_mat = (cols[:, None] == jnp.arange(B)[None, :]).astype(jnp.float32) / HW_out
    logits_t, _, _ = basic_block_attn(
        x_cm, B, H, W, params['layer3'],
        head=(pool_mat, params['fc_w'], params['fc_b']))
    return logits_t.T                                            # (B, num_classes)


# ----------------------------- parameter init ------------------------------

def _bn_fold(c, eps=1e-5):
    gamma = jnp.ones((c,), jnp.float32)
    beta = jnp.zeros((c,), jnp.float32)
    mean = jnp.zeros((c,), jnp.float32)
    var = jnp.ones((c,), jnp.float32)
    scale = gamma / jnp.sqrt(var + eps)
    bias = beta - mean * scale
    return scale, bias


def _kaiming_conv(key, cout, cin, kh, kw):
    fan_out = cout * kh * kw
    std = (2.0 / fan_out) ** 0.5
    return jax.random.normal(key, (cout, cin, kh, kw), jnp.float32) * std


def init_params(key, width=1, num_classes=10):
    """WideResNet depth=10 (n=1), width=1, attn_params={'nh':1,'k':0.2,'v':0.2,
    'relative':True,'input_dims':(16,16)} -> attention in layers 2 & 3."""
    keys = iter(jax.random.split(key, 32))
    p = {}
    p['conv1_w'] = _kaiming_conv(next(keys), 16, 3, 3, 3)
    p['bn1_scale'], p['bn1_bias'] = _bn_fold(16)

    # layer1 (16 -> 16, stride 1, plain conv3x3 BasicBlock)
    l1 = {'conv1_w': _kaiming_conv(next(keys), 16 * width, 16, 3, 3),
          'conv2_w': _kaiming_conv(next(keys), 16 * width, 16 * width, 3, 3)}
    l1['bn1_scale'], l1['bn1_bias'] = _bn_fold(16 * width)
    l1['bn2_scale'], l1['bn2_bias'] = _bn_fold(16 * width)
    p['layer1'] = l1

    def make_attn_block(inplanes, planes, attn_h):
        nh = NH
        dk = max(20 * nh, int(0.2 * planes // nh * nh))
        dv = int(0.2 * planes // nh * nh)
        dkh = dk // nh
        aa = {
            'conv_w': _kaiming_conv(next(keys), planes - dv, inplanes, 3, 3),
            'qkv_w': _kaiming_conv(next(keys), 2 * dk + dv, inplanes, 1, 1),
            'out_proj_w': _kaiming_conv(next(keys), dv, dv, 1, 1),
            # matches the given reference: dk**-0.5 + randn (additive shift)
            'key_rel_h': dk ** (-0.5) + jax.random.normal(
                next(keys), (dkh, 2 * attn_h - 1), jnp.float32),
            'key_rel_w': dk ** (-0.5) + jax.random.normal(
                next(keys), (dkh, 2 * attn_h - 1), jnp.float32),
        }
        blk = {'aa': aa,
               'conv2_w': _kaiming_conv(next(keys), planes, planes, 3, 3),
               'ds_w': _kaiming_conv(next(keys), planes, inplanes, 1, 1)}
        blk['bn1_scale'], blk['bn1_bias'] = _bn_fold(planes)
        blk['bn2_scale'], blk['bn2_bias'] = _bn_fold(planes)
        blk['ds_bn_scale'], blk['ds_bn_bias'] = _bn_fold(planes)
        return blk

    # attention spatial dims: input 16x16 -> layer2 attends on 8x8, layer3 on 4x4
    p['layer2'] = make_attn_block(16 * width, 32 * width, 8)
    p['layer3'] = make_attn_block(32 * width, 64 * width, 4)

    bound = 1.0 / (64 * width) ** 0.5
    p['fc_w'] = jax.random.uniform(next(keys), (num_classes, 64 * width),
                                   jnp.float32, -bound, bound)
    p['fc_b'] = jax.random.uniform(next(keys), (num_classes,),
                                   jnp.float32, -bound, bound)
    return p


# ----------------------------- main ----------------------------------------

if __name__ == "__main__":
    root = jax.random.PRNGKey(0)
    pkey, xkey = jax.random.split(root)
    params = init_params(pkey)
    x = jax.random.normal(xkey, (2, 3, 16, 16), jnp.float32)   # NCHW input
    fwd = jax.jit(wide_resnet_forward)
    out = jax.block_until_ready(fwd(params, x))
    assert out.shape == (2, 10) and out.dtype == jnp.float32
    assert bool(jnp.all(jnp.isfinite(out)))
    print("KERNEL_OK")
</pallas_src>

<mosaic_0001>
module attributes {stable_mosaic.version = 11 : i64} {
  func.func @_conv_kernel(%arg0: i32, %arg1: memref<27x256xbf16, #tpu.memory_space<vmem>>, %arg2: memref<16x27xbf16, #tpu.memory_space<vmem>>, %arg3: memref<16x1xf32, #tpu.memory_space<vmem>>, %arg4: memref<16x1xf32, #tpu.memory_space<vmem>>, %arg5: memref<16x256xf32, #tpu.memory_space<vmem>>) attributes {dimension_semantics = [#tpu.dimension_semantics<parallel>], iteration_bounds = array<i64: 2>, scalar_prefetch = 0 : i64, scratch_operands = 0 : i64, tpu.core_type = #tpu.core_type<tc>, window_params = [{transform_indices = @transform_0, window_bounds = array<i64: 27, 256>}, {pipeline_mode = #tpu.pipeline_mode<synchronous>, transform_indices = @transform_1, window_bounds = array<i64: 16, 27>}, {pipeline_mode = #tpu.pipeline_mode<synchronous>, transform_indices = @transform_2, window_bounds = array<i64: 16, 1>}, {pipeline_mode = #tpu.pipeline_mode<synchronous>, transform_indices = @transform_3, window_bounds = array<i64: 16, 1>}, {transform_indices = @transform_4, window_bounds = array<i64: 16, 256>}]} {
    %c0 = arith.constant 0 : index
    %c0_0 = arith.constant 0 : index
    %0 = vector.load %arg2[%c0, %c0_0] : memref<16x27xbf16, #tpu.memory_space<vmem>>, vector<16x27xbf16>
    %c0_1 = arith.constant 0 : index
    %c0_2 = arith.constant 0 : index
    %1 = vector.load %arg1[%c0_1, %c0_2] : memref<27x256xbf16, #tpu.memory_space<vmem>>, vector<27x256xbf16>
    %cst = arith.constant dense<0.000000e+00> : vector<16x256xf32>
    %2 = tpu.matmul %0, %1, %cst {dimension_numbers = #tpu.dot_dimension_numbers<[1], [0], [0], [1], [0, 0, 1, 1], [], []>} : vector<16x27xbf16>, vector<27x256xbf16>, vector<16x256xf32> -> vector<16x256xf32>
    %c0_3 = arith.constant 0 : index
    %c0_4 = arith.constant 0 : index
    %3 = vector.load %arg3[%c0_3, %c0_4] : memref<16x1xf32, #tpu.memory_space<vmem>>, vector<16x1xf32>
    %4 = vector.broadcast %3 : vector<16x1xf32> to vector<16x256xf32>
    %5 = arith.mulf %2, %4 : vector<16x256xf32>
    %c0_5 = arith.constant 0 : index
    %c0_6 = arith.constant 0 : index
    %6 = vector.load %arg4[%c0_5, %c0_6] : memref<16x1xf32, #tpu.memory_space<vmem>>, vector<16x1xf32>
    %7 = vector.broadcast %6 : vector<16x1xf32> to vector<16x256xf32>
    %8 = arith.addf %5, %7 : vector<16x256xf32>
    %cst_7 = arith.constant 0.000000e+00 : f32
    %9 = vector.broadcast %cst_7 : f32 to vector<16x256xf32>
    %10 = arith.maximumf %8, %9 : vector<16x256xf32>
    %c0_8 = arith.constant 0 : index
    %c0_9 = arith.constant 0 : index
    %11 = vector.load %arg5[%c0_8, %c0_9] : memref<16x256xf32, #tpu.memory_space<vmem>>, vector<16x256xf32>
    tpu.vector_store %arg5[%c0_8, %c0_9], %10 {strides = array<i32>} : memref<16x256xf32, #tpu.memory_space<vmem>>, vector<16x256xf32>,
    return
  }
  func.func @transform_0(%arg0: i32) -> (i32, i32) {
    %c0_i32 = arith.constant 0 : i32
    %c0_i32_0 = arith.constant 0 : i32
    return %c0_i32, %arg0 : i32, i32
  }
  func.func @transform_1(%arg0: i32) -> (i32, i32) {
    %c0_i32 = arith.constant 0 : i32
    %c0_i32_0 = arith.constant 0 : i32
    %c0_i32_1 = arith.constant 0 : i32
    return %c0_i32, %c0_i32_0 : i32, i32
  }
  func.func @transform_2(%arg0: i32) -> (i32, i32) {
    %c0_i32 = arith.constant 0 : i32
    %c0_i32_0 = arith.constant 0 : i32
    %c0_i32_1 = arith.constant 0 : i32
    return %c0_i32, %c0_i32_0 : i32, i32
  }
  func.func @transform_3(%arg0: i32) -> (i32, i32) {
    %c0_i32 = arith.constant 0 : i32
    %c0_i32_0 = arith.constant 0 : i32
    %c0_i32_1 = arith.constant 0 : i32
    return %c0_i32, %c0_i32_0 : i32, i32
  }
  func.func @transform_4(%arg0: i32) -> (i32, i32) {
    %c0_i32 = arith.constant 0 : i32
    %c0_i32_0 = arith.constant 0 : i32
    return %c0_i32, %arg0 : i32, i32
  }
}

module attributes {stable_mosaic.version = 11 : i64} {
  func.func @_conv_res_kernel(%arg0: i32, %arg1: memref<144x256xbf16, #tpu.memory_space<vmem>>, %arg2: memref<16x144xbf16, #tpu.memory_space<vmem>>, %arg3: memref<16x1xf32, #tpu.memory_space<vmem>>, %arg4: memref<16x1xf32, #tpu.memory_space<vmem>>, %arg5: memref<16x256xf32, #tpu.memory_space<vmem>>, %arg6: memref<16x256xf32, #tpu.memory_space<vmem>>) attributes {dimension_semantics = [#tpu.dimension_semantics<parallel>], iteration_bounds = array<i64: 2>, scalar_prefetch = 0 : i64, scratch_operands = 0 : i64, tpu.core_type = #tpu.core_type<tc>, window_params = [{transform_indices = @transform_0, window_bounds = array<i64: 144, 256>}, {pipeline_mode = #tpu.pipeline_mode<synchronous>, transform_indices = @transform_1, window_bounds = array<i64: 16, 144>}, {pipeline_mode = #tpu.pipeline_mode<synchronous>, transform_indices = @transform_2, window_bounds = array<i64: 16, 1>}, {pipeline_mode = #tpu.pipeline_mode<synchronous>, transform_indices = @transform_3, window_bounds = array<i64: 16, 1>}, {transform_indices = @transform_4, window_bounds = array<i64: 16, 256>}, {transform_indices = @transform_5, window_bounds = array<i64: 16, 256>}]} {
    %c0 = arith.constant 0 : index
    %c0_0 = arith.constant 0 : index
    %0 = vector.load %arg2[%c0, %c0_0] : memref<16x144xbf16, #tpu.memory_space<vmem>>, vector<16x144xbf16>
    %c0_1 = arith.constant 0 : index
    %c0_2 = arith.constant 0 : index
    %1 = vector.load %arg1[%c0_1, %c0_2] : memref<144x256xbf16, #tpu.memory_space<vmem>>, vector<144x256xbf16>
    %cst = arith.constant dense<0.000000e+00> : vector<16x256xf32>
    %2 = tpu.matmul %0, %1, %cst {dimension_numbers = #tpu.dot_dimension_numbers<[1], [0], [0], [1], [0, 0, 1, 1], [], []>} : vector<16x144xbf16>, vector<144x256xbf16>, vector<16x256xf32> -> vector<16x256xf32>
    %c0_3 = arith.constant 0 : index
    %c0_4 = arith.constant 0 : index
    %3 = vector.load %arg3[%c0_3, %c0_4] : memref<16x1xf32, #tpu.memory_space<vmem>>, vector<16x1xf32>
    %4 = vector.broadcast %3 : vector<16x1xf32> to vector<16x256xf32>
    %5 = arith.mulf %2, %4 : vector<16x256xf32>
    %c0_5 = arith.constant 0 : index
    %c0_6 = arith.constant 0 : index
    %6 = vector.load %arg4[%c0_5, %c0_6] : memref<16x1xf32, #tpu.memory_space<vmem>>, vector<16x1xf32>
    %7 = vector.broadcast %6 : vector<16x1xf32> to vector<16x256xf32>
    %8 = arith.addf %5, %7 : vector<16x256xf32>
    %c0_7 = arith.constant 0 : index
    %c0_8 = arith.constant 0 : index
    %9 = vector.load %arg5[%c0_7, %c0_8] : memref<16x256xf32, #tpu.memory_space<vmem>>, vector<16x256xf32>
    %10 = arith.addf %8, %9 : vector<16x256xf32>
    %cst_9 = arith.constant 0.000000e+00 : f32
    %11 = vector.broadcast %cst_9 : f32 to vector<16x256xf32>
    %12 = arith.maximumf %10, %11 : vector<16x256xf32>
    %c0_10 = arith.constant 0 : index
    %c0_11 = arith.constant 0 : index
    %13 = vector.load %arg6[%c0_10, %c0_11] : memref<16x256xf32, #tpu.memory_space<vmem>>, vector<16x256xf32>
    tpu.vector_store %arg6[%c0_10, %c0_11], %12 {strides = array<i32>} : memref<16x256xf32, #tpu.memory_space<vmem>>, vector<16x256xf32>,
    return
  }
  func.func @transform_0(%arg0: i32) -> (i32, i32) {
    %c0_i32 = arith.constant 0 : i32
    %c0_i32_0 = arith.constant 0 : i32
    return %c0_i32, %arg0 : i32, i32
  }
  func.func @transform_1(%arg0: i32) -> (i32, i32) {
    %c0_i32 = arith.constant 0 : i32
    %c0_i32_0 = arith.constant 0 : i32
    %c0_i32_1 = arith.constant 0 : i32
    return %c0_i32, %c0_i32_0 : i32, i32
  }
  func.func @transform_2(%arg0: i32) -> (i32, i32) {
    %c0_i32 = arith.constant 0 : i32
    %c0_i32_0 = arith.constant 0 : i32
    %c0_i32_1 = arith.constant 0 : i32
    return %c0_i32, %c0_i32_0 : i32, i32
  }
  func.func @transform_3(%arg0: i32) -> (i32, i32) {
    %c0_i32 = arith.constant 0 : i32
    %c0_i32_0 = arith.constant 0 : i32
    %c0_i32_1 = arith.constant 0 : i32
    return %c0_i32, %c0_i32_0 : i32, i32
  }
  func.func @transform_4(%arg0: i32) -> (i32, i32) {
    %c0_i32 = arith.constant 0 : i32
    %c0_i32_0 = arith.constant 0 : i32
    return %c0_i32, %arg0 : i32, i32
  }
  func.func @transform_5(%arg0: i32) -> (i32, i32) {
    %c0_i32 = arith.constant 0 : i32
    %c0_i32_0 = arith.constant 0 : i32
    return %c0_i32, %arg0 : i32, i32
  }
}

module attributes {stable_mosaic.version = 11 : i64} {
  func.func @_conv_kernel(%arg0: i32, %arg1: memref<144x256xbf16, #tpu.memory_space<vmem>>, %arg2: memref<16x144xbf16, #tpu.memory_space<vmem>>, %arg3: memref<16x1xf32, #tpu.memory_space<vmem>>, %arg4: memref<16x1xf32, #tpu.memory_space<vmem>>, %arg5: memref<16x256xf32, #tpu.memory_space<vmem>>) attributes {dimension_semantics = [#tpu.dimension_semantics<parallel>], iteration_bounds = array<i64: 2>, scalar_prefetch = 0 : i64, scratch_operands = 0 : i64, tpu.core_type = #tpu.core_type<tc>, window_params = [{transform_indices = @transform_0, window_bounds = array<i64: 144, 256>}, {pipeline_mode = #tpu.pipeline_mode<synchronous>, transform_indices = @transform_1, window_bounds = array<i64: 16, 144>}, {pipeline_mode = #tpu.pipeline_mode<synchronous>, transform_indices = @transform_2, window_bounds = array<i64: 16, 1>}, {pipeline_mode = #tpu.pipeline_mode<synchronous>, transform_indices = @transform_3, window_bounds = array<i64: 16, 1>}, {transform_indices = @transform_4, window_bounds = array<i64: 16, 256>}]} {
    %c0 = arith.constant 0 : index
    %c0_0 = arith.constant 0 : index
    %0 = vector.load %arg2[%c0, %c0_0] : memref<16x144xbf16, #tpu.memory_space<vmem>>, vector<16x144xbf16>
    %c0_1 = arith.constant 0 : index
    %c0_2 = arith.constant 0 : index
    %1 = vector.load %arg1[%c0_1, %c0_2] : memref<144x256xbf16, #tpu.memory_space<vmem>>, vector<144x256xbf16>
    %cst = arith.constant dense<0.000000e+00> : vector<16x256xf32>
    %2 = tpu.matmul %0, %1, %cst {dimension_numbers = #tpu.dot_dimension_numbers<[1], [0], [0], [1], [0, 0, 1, 1], [], []>} : vector<16x144xbf16>, vector<144x256xbf16>, vector<16x256xf32> -> vector<16x256xf32>
    %c0_3 = arith.constant 0 : index
    %c0_4 = arith.constant 0 : index
    %3 = vector.load %arg3[%c0_3, %c0_4] : memref<16x1xf32, #tpu.memory_space<vmem>>, vector<16x1xf32>
    %4 = vector.broadcast %3 : vector<16x1xf32> to vector<16x256xf32>
    %5 = arith.mulf %2, %4 : vector<16x256xf32>
    %c0_5 = arith.constant 0 : index
    %c0_6 = arith.constant 0 : index
    %6 = vector.load %arg4[%c0_5, %c0_6] : memref<16x1xf32, #tpu.memory_space<vmem>>, vector<16x1xf32>
    %7 = vector.broadcast %6 : vector<16x1xf32> to vector<16x256xf32>
    %8 = arith.addf %5, %7 : vector<16x256xf32>
    %cst_7 = arith.constant 0.000000e+00 : f32
    %9 = vector.broadcast %cst_7 : f32 to vector<16x256xf32>
    %10 = arith.maximumf %8, %9 : vector<16x256xf32>
    %c0_8 = arith.constant 0 : index
    %c0_9 = arith.constant 0 : index
    %11 = vector.load %arg5[%c0_8, %c0_9] : memref<16x256xf32, #tpu.memory_space<vmem>>, vector<16x256xf32>
    tpu.vector_store %arg5[%c0_8, %c0_9], %10 {strides = array<i32>} : memref<16x256xf32, #tpu.memory_space<vmem>>, vector<16x256xf32>,
    return
  }
  func.func @transform_0(%arg0: i32) -> (i32, i32) {
    %c0_i32 = arith.constant 0 : i32
    %c0_i32_0 = arith.constant 0 : i32
    return %c0_i32, %arg0 : i32, i32
  }
  func.func @transform_1(%arg0: i32) -> (i32, i32) {
    %c0_i32 = arith.constant 0 : i32
    %c0_i32_0 = arith.constant 0 : i32
    %c0_i32_1 = arith.constant 0 : i32
    return %c0_i32, %c0_i32_0 : i32, i32
  }
  func.func @transform_2(%arg0: i32) -> (i32, i32) {
    %c0_i32 = arith.constant 0 : i32
    %c0_i32_0 = arith.constant 0 : i32
    %c0_i32_1 = arith.constant 0 : i32
    return %c0_i32, %c0_i32_0 : i32, i32
  }
  func.func @transform_3(%arg0: i32) -> (i32, i32) {
    %c0_i32 = arith.constant 0 : i32
    %c0_i32_0 = arith.constant 0 : i32
    %c0_i32_1 = arith.constant 0 : i32
    return %c0_i32, %c0_i32_0 : i32, i32
  }
  func.func @transform_4(%arg0: i32) -> (i32, i32) {
    %c0_i32 = arith.constant 0 : i32
    %c0_i32_0 = arith.constant 0 : i32
    return %c0_i32, %arg0 : i32, i32
  }
}

module attributes {stable_mosaic.version = 11 : i64} {
  func.func @_aa_front_kernel(%arg0: i32, %arg1: memref<144x128xbf16, #tpu.memory_space<vmem>>, %arg2: memref<26x144xbf16, #tpu.memory_space<vmem>>, %arg3: memref<26x1xf32, #tpu.memory_space<vmem>>, %arg4: memref<26x1xf32, #tpu.memory_space<vmem>>, %arg5: memref<46x16xbf16, #tpu.memory_space<vmem>>, %arg6: memref<26x128xf32, #tpu.memory_space<vmem>>, %arg7: memref<46x128xf32, #tpu.memory_space<vmem>>) attributes {dimension_semantics = [#tpu.dimension_semantics<parallel>], iteration_bounds = array<i64: 1>, scalar_prefetch = 0 : i64, scratch_operands = 0 : i64, tpu.core_type = #tpu.core_type<tc>, window_params = [{pipeline_mode = #tpu.pipeline_mode<synchronous>, transform_indices = @transform_0, window_bounds = array<i64: 144, 128>}, {pipeline_mode = #tpu.pipeline_mode<synchronous>, transform_indices = @transform_1, window_bounds = array<i64: 26, 144>}, {pipeline_mode = #tpu.pipeline_mode<synchronous>, transform_indices = @transform_2, window_bounds = array<i64: 26, 1>}, {pipeline_mode = #tpu.pipeline_mode<synchronous>, transform_indices = @transform_3, window_bounds = array<i64: 26, 1>}, {pipeline_mode = #tpu.pipeline_mode<synchronous>, transform_indices = @transform_4, window_bounds = array<i64: 46, 16>}, {pipeline_mode = #tpu.pipeline_mode<synchronous>, transform_indices = @transform_5, window_bounds = array<i64: 26, 128>}, {pipeline_mode = #tpu.pipeline_mode<synchronous>, transform_indices = @transform_6, window_bounds = array<i64: 46, 128>}]} {
    %c0 = arith.constant 0 : index
    %c0_0 = arith.constant 0 : index
    %0 = vector.load %arg1[%c0, %c0_0] : memref<144x128xbf16, #tpu.memory_space<vmem>>, vector<144x128xbf16>
    %c0_1 = arith.constant 0 : index
    %c0_2 = arith.constant 0 : index
    %1 = vector.load %arg2[%c0_1, %c0_2] : memref<26x144xbf16, #tpu.memory_space<vmem>>, vector<26x144xbf16>
    %cst = arith.constant dense<0.000000e+00> : vector<26x128xf32>
    %2 = tpu.matmul %1, %0, %cst {dimension_numbers = #tpu.dot_dimension_numbers<[1], [0], [0], [1], [0, 0, 1, 1], [], []>} : vector<26x144xbf16>, vector<144x128xbf16>, vector<26x128xf32> -> vector<26x128xf32>
    %c0_3 = arith.constant 0 : index
    %c0_4 = arith.constant 0 : index
    %3 = vector.load %arg3[%c0_3, %c0_4] : memref<26x1xf32, #tpu.memory_space<vmem>>, vector<26x1xf32>
    %4 = vector.broadcast %3 : vector<26x1xf32> to vector<26x128xf32>
    %5 = arith.mulf %2, %4 : vector<26x128xf32>
    %c0_5 = arith.constant 0 : index
    %c0_6 = arith.constant 0 : index
    %6 = vector.load %arg4[%c0_5, %c0_6] : memref<26x1xf32, #tpu.memory_space<vmem>>, vector<26x1xf32>
    %7 = vector.broadcast %6 : vector<26x1xf32> to vector<26x128xf32>
    %8 = arith.addf %5, %7 : vector<26x128xf32>
    %cst_7 = arith.constant 0.000000e+00 : f32
    %9 = vector.broadcast %cst_7 : f32 to vector<26x128xf32>
    %10 = arith.maximumf %8, %9 : vector<26x128xf32>
    %c0_8 = arith.constant 0 : index
    %c0_9 = arith.constant 0 : index
    %11 = vector.load %arg6[%c0_8, %c0_9] : memref<26x128xf32, #tpu.memory_space<vmem>>, vector<26x128xf32>
    tpu.vector_store %arg6[%c0_8, %c0_9], %10 {strides = array<i32>} : memref<26x128xf32, #tpu.memory_space<vmem>>, vector<26x128xf32>,
    %12 = vector.extract_strided_slice %0 {offsets = [64, 0], sizes = [16, 128], strides = [1, 1]} : vector<144x128xbf16> to vector<16x128xbf16>
    %c0_10 = arith.constant 0 : index
    %c0_11 = arith.constant 0 : index
    %13 = vector.load %arg5[%c0_10, %c0_11] : memref<46x16xbf16, #tpu.memory_space<vmem>>, vector<46x16xbf16>
    %cst_12 = arith.constant dense<0.000000e+00> : vector<46x128xf32>
    %14 = tpu.matmul %13, %12, %cst_12 {dimension_numbers = #tpu.dot_dimension_numbers<[1], [0], [0], [1], [0, 0, 1, 1], [], []>} : vector<46x16xbf16>, vector<16x128xbf16>, vector<46x128xf32> -> vector<46x128xf32>
    %c0_13 = arith.constant 0 : index
    %c0_14 = arith.constant 0 : index
    %15 = vector.load %arg7[%c0_13, %c0_14] : memref<46x128xf32, #tpu.memory_space<vmem>>, vector<46x128xf32>
    tpu.vector_store %arg7[%c0_13, %c0_14], %14 {strides = array<i32>} : memref<46x128xf32, #tpu.memory_space<vmem>>, vector<46x128xf32>,
    return
  }
  func.func @transform_0(%arg0: i32) -> (i32, i32) {
    %c0_i32 = arith.constant 0 : i32
    %c0_i32_0 = arith.constant 0 : i32
    %c0_i32_1 = arith.constant 0 : i32
    return %c0_i32, %c0_i32_0 : i32, i32
  }
  func.func @transform_1(%arg0: i32) -> (i32, i32) {
    %c0_i32 = arith.constant 0 : i32
    %c0_i32_0 = arith.constant 0 : i32
    %c0_i32_1 = arith.constant 0 : i32
    return %c0_i32, %c0_i32_0 : i32, i32
  }
  func.func @transform_2(%arg0: i32) -> (i32, i32) {
    %c0_i32 = arith.constant 0 : i32
    %c0_i32_0 = arith.constant 0 : i32
    %c0_i32_1 = arith.constant 0 : i32
    return %c0_i32, %c0_i32_0 : i32, i32
  }
  func.func @transform_3(%arg0: i32) -> (i32, i32) {
    %c0_i32 = arith.constant 0 : i32
    %c0_i32_0 = arith.constant 0 : i32
    %c0_i32_1 = arith.constant 0 : i32
    return %c0_i32, %c0_i32_0 : i32, i32
  }
  func.func @transform_4(%arg0: i32) -> (i32, i32) {
    %c0_i32 = arith.constant 0 : i32
    %c0_i32_0 = arith.constant 0 : i32
    %c0_i32_1 = arith.constant 0 : i32
    return %c0_i32, %c0_i32_0 : i32, i32
  }
  func.func @transform_5(%arg0: i32) -> (i32, i32) {
    %c0_i32 = arith.constant 0 : i32
    %c0_i32_0 = arith.constant 0 : i32
    %c0_i32_1 = arith.constant 0 : i32
    return %c0_i32, %c0_i32_0 : i32, i32
  }
  func.func @transform_6(%arg0: i32) -> (i32, i32) {
    %c0_i32 = arith.constant 0 : i32
    %c0_i32_0 = arith.constant 0 : i32
    %c0_i32_1 = arith.constant 0 : i32
    return %c0_i32, %c0_i32_0 : i32, i32
  }
}

module attributes {stable_mosaic.version = 11 : i64} {
  func.func @_attn_kernel(%arg0: i32, %arg1: memref<2x64x20xbf16, #tpu.memory_space<vmem>>, %arg2: memref<2x64x20xbf16, #tpu.memory_space<vmem>>, %arg3: memref<2x64x6xbf16, #tpu.memory_space<vmem>>, %arg4: memref<2x64x64xf32, #tpu.memory_space<vmem>>, %arg5: memref<6x6xbf16, #tpu.memory_space<vmem>>, %arg6: memref<1x6xf32, #tpu.memory_space<vmem>>, %arg7: memref<1x6xf32, #tpu.memory_space<vmem>>, %arg8: memref<128x6xf32, #tpu.memory_space<vmem>>) attributes {dimension_semantics = [#tpu.dimension_semantics<parallel>], iteration_bounds = array<i64: 1>, scalar_prefetch = 0 : i64, scratch_operands = 0 : i64, tpu.core_type = #tpu.core_type<tc>, window_params = [{pipeline_mode = #tpu.pipeline_mode<synchronous>, transform_indices = @transform_0, window_bounds = array<i64: 2, 64, 20>}, {pipeline_mode = #tpu.pipeline_mode<synchronous>, transform_indices = @transform_1, window_bounds = array<i64: 2, 64, 20>}, {pipeline_mode = #tpu.pipeline_mode<synchronous>, transform_indices = @transform_2, window_bounds = array<i64: 2, 64, 6>}, {pipeline_mode = #tpu.pipeline_mode<synchronous>, transform_indices = @transform_3, window_bounds = array<i64: 2, 64, 64>}, {pipeline_mode = #tpu.pipeline_mode<synchronous>, transform_indices = @transform_4, window_bounds = array<i64: 6, 6>}, {pipeline_mode = #tpu.pipeline_mode<synchronous>, transform_indices = @transform_5, window_bounds = array<i64: 1, 6>}, {pipeline_mode = #tpu.pipeline_mode<synchronous>, transform_indices = @transform_6, window_bounds = array<i64: 1, 6>}, {pipeline_mode = #tpu.pipeline_mode<synchronous>, transform_indices = @transform_7, window_bounds = array<i64: 128, 6>}]} {
    %c0 = arith.constant 0 : index
    %c0_0 = arith.constant 0 : index
    %c0_1 = arith.constant 0 : index
    %0 = vector.load %arg1[%c0, %c0_0, %c0_1] : memref<2x64x20xbf16, #tpu.memory_space<vmem>>, vector<2x64x20xbf16>
    %c0_2 = arith.constant 0 : index
    %c0_3 = arith.constant 0 : index
    %c0_4 = arith.constant 0 : index
    %1 = vector.load %arg2[%c0_2, %c0_3, %c0_4] : memref<2x64x20xbf16, #tpu.memory_space<vmem>>, vector<2x64x20xbf16>
    "tpu.trace_start"() <{level = 10 : i32, message = "bld,bmd->blm"}> : () -> ()
    %cst = arith.constant dense<0.000000e+00> : vector<2x64x64xf32>
    %2 = tpu.matmul %0, %1, %cst {dimension_numbers = #tpu.dot_dimension_numbers<[2], [2], [1], [1], [0, 0, 0, 1, 1, 1], [0], [0]>} : vector<2x64x20xbf16>, vector<2x64x20xbf16>, vector<2x64x64xf32> -> vector<2x64x64xf32>
    "tpu.trace_stop"() : () -> ()
    %c0_5 = arith.constant 0 : index
    %c0_6 = arith.constant 0 : index
    %c0_7 = arith.constant 0 : index
    %3 = vector.load %arg4[%c0_5, %c0_6, %c0_7] : memref<2x64x64xf32, #tpu.memory_space<vmem>>, vector<2x64x64xf32>
    %4 = arith.addf %2, %3 : vector<2x64x64xf32>
    %cst_8 = arith.constant dense<0xFF800000> : vector<2x64xf32>
    %5 = vector.multi_reduction <maximumf>, %4, %cst_8 [2] : vector<2x64x64xf32> to vector<2x64xf32>
    %6 = vector.shape_cast %5 : vector<2x64xf32> to vector<2x64x1xf32>
    %7 = vector.broadcast %6 : vector<2x64x1xf32> to vector<2x64x64xf32>
    %8 = arith.subf %4, %7 : vector<2x64x64xf32>
    %9 = math.exp %8 : vector<2x64x64xf32>
    %cst_9 = arith.constant dense<0.000000e+00> : vector<2x64xf32>
    %10 = vector.multi_reduction <add>, %9, %cst_9 [2] : vector<2x64x64xf32> to vector<2x64xf32>
    %11 = vector.shape_cast %10 : vector<2x64xf32> to vector<2x64x1xf32>
    %12 = tpu.reciprocal %11 {approx = true} : vector<2x64x1xf32> -> vector<2x64x1xf32>
    %13 = vector.broadcast %12 : vector<2x64x1xf32> to vector<2x64x64xf32>
    %14 = arith.mulf %9, %13 : vector<2x64x64xf32>
    %15 = arith.truncf %14 : vector<2x64x64xf32> to vector<2x64x64xbf16>
    %c0_10 = arith.constant 0 : index
    %c0_11 = arith.constant 0 : index
    %c0_12 = arith.constant 0 : index
    %16 = vector.load %arg3[%c0_10, %c0_11, %c0_12] : memref<2x64x6xbf16, #tpu.memory_space<vmem>>, vector<2x64x6xbf16>
    "tpu.trace_start"() <{level = 10 : i32, message = "blm,bmd->bld"}> : () -> ()
    %cst_13 = arith.constant dense<0.000000e+00> : vector<2x64x6xf32>
    %17 = tpu.matmul %15, %16, %cst_13 {dimension_numbers = #tpu.dot_dimension_numbers<[2], [1], [1], [2], [0, 0, 0, 1, 1, 2], [0], [0]>} : vector<2x64x64xbf16>, vector<2x64x6xbf16>, vector<2x64x6xf32> -> vector<2x64x6xf32>
    "tpu.trace_stop"() : () -> ()
    %18 = vector.shape_cast %17 : vector<2x64x6xf32> to vector<128x6xf32>
    %19 = arith.truncf %18 : vector<128x6xf32> to vector<128x6xbf16>
    %c0_14 = arith.constant 0 : index
    %c0_15 = arith.constant 0 : index
    %20 = vector.load %arg5[%c0_14, %c0_15] : memref<6x6xbf16, #tpu.memory_space<vmem>>, vector<6x6xbf16>
    %cst_16 = arith.constant dense<0.000000e+00> : vector<128x6xf32>
    %21 = tpu.matmul %19, %20, %cst_16 {dimension_numbers = #tpu.dot_dimension_numbers<[1], [0], [0], [1], [0, 0, 1, 1], [], []>} : vector<128x6xbf16>, vector<6x6xbf16>, vector<128x6xf32> -> vector<128x6xf32>
    %c0_17 = arith.constant 0 : index
    %c0_18 = arith.constant 0 : index
    %22 = vector.load %arg6[%c0_17, %c0_18] : memref<1x6xf32, #tpu.memory_space<vmem>>, vector<1x6xf32>
    %23 = vector.broadcast %22 : vector<1x6xf32> to vector<128x6xf32>
    %24 = arith.mulf %21, %23 : vector<128x6xf32>
    %c0_19 = arith.constant 0 : index
    %c0_20 = arith.constant 0 : index
    %25 = vector.load %arg7[%c0_19, %c0_20] : memref<1x6xf32, #tpu.memory_space<vmem>>, vector<1x6xf32>
    %26 = vector.broadcast %25 : vector<1x6xf32> to vector<128x6xf32>
    %27 = arith.addf %24, %26 : vector<128x6xf32>
    %cst_21 = arith.constant 0.000000e+00 : f32
    %28 = vector.broadcast %cst_21 : f32 to vector<128x6xf32>
    %29 = arith.maximumf %27, %28 : vector<128x6xf32>
    %c0_22 = arith.constant 0 : index
    %c0_23 = arith.constant 0 : index
    %30 = vector.load %arg8[%c0_22, %c0_23] : memref<128x6xf32, #tpu.memory_space<vmem>>, vector<128x6xf32>
    tpu.vector_store %arg8[%c0_22, %c0_23], %29 {strides = array<i32>} : memref<128x6xf32, #tpu.memory_space<vmem>>, vector<128x6xf32>,
    return
  }
  func.func @transform_0(%arg0: i32) -> (i32, i32, i32) {
    %c0_i32 = arith.constant 0 : i32
    %c0_i32_0 = arith.constant 0 : i32
    %c0_i32_1 = arith.constant 0 : i32
    %c0_i32_2 = arith.constant 0 : i32
    return %c0_i32, %c0_i32_0, %c0_i32_1 : i32, i32, i32
  }
  func.func @transform_1(%arg0: i32) -> (i32, i32, i32) {
    %c0_i32 = arith.constant 0 : i32
    %c0_i32_0 = arith.constant 0 : i32
    %c0_i32_1 = arith.constant 0 : i32
    %c0_i32_2 = arith.constant 0 : i32
    return %c0_i32, %c0_i32_0, %c0_i32_1 : i32, i32, i32
  }
  func.func @transform_2(%arg0: i32) -> (i32, i32, i32) {
    %c0_i32 = arith.constant 0 : i32
    %c0_i32_0 = arith.constant 0 : i32
    %c0_i32_1 = arith.constant 0 : i32
    %c0_i32_2 = arith.constant 0 : i32
    return %c0_i32, %c0_i32_0, %c0_i32_1 : i32, i32, i32
  }
  func.func @transform_3(%arg0: i32) -> (i32, i32, i32) {
    %c0_i32 = arith.constant 0 : i32
    %c0_i32_0 = arith.constant 0 : i32
    %c0_i32_1 = arith.constant 0 : i32
    %c0_i32_2 = arith.constant 0 : i32
    return %c0_i32, %c0_i32_0, %c0_i32_1 : i32, i32, i32
  }
  func.func @transform_4(%arg0: i32) -> (i32, i32) {
    %c0_i32 = arith.constant 0 : i32
    %c0_i32_0 = arith.constant 0 : i32
    %c0_i32_1 = arith.constant 0 : i32
    return %c0_i32, %c0_i32_0 : i32, i32
  }
  func.func @transform_5(%arg0: i32) -> (i32, i32) {
    %c0_i32 = arith.constant 0 : i32
    %c0_i32_0 = arith.constant 0 : i32
    %c0_i32_1 = arith.constant 0 : i32
    return %c0_i32, %c0_i32_0 : i32, i32
  }
  func.func @transform_6(%arg0: i32) -> (i32, i32) {
    %c0_i32 = arith.constant 0 : i32
    %c0_i32_0 = arith.constant 0 : i32
    %c0_i32_1 = arith.constant 0 : i32
    return %c0_i32, %c0_i32_0 : i32, i32
  }
  func.func @transform_7(%arg0: i32) -> (i32, i32) {
    %c0_i32 = arith.constant 0 : i32
    %c0_i32_0 = arith.constant 0 : i32
    %c0_i32_1 = arith.constant 0 : i32
    return %c0_i32, %c0_i32_0 : i32, i32
  }
}

module attributes {stable_mosaic.version = 11 : i64} {
  func.func @_aa_back_kernel(%arg0: i32, %arg1: memref<288x128xbf16, #tpu.memory_space<vmem>>, %arg2: memref<32x288xbf16, #tpu.memory_space<vmem>>, %arg3: memref<32x1xf32, #tpu.memory_space<vmem>>, %arg4: memref<32x1xf32, #tpu.memory_space<vmem>>, %arg5: memref<16x128xbf16, #tpu.memory_space<vmem>>, %arg6: memref<32x16xbf16, #tpu.memory_space<vmem>>, %arg7: memref<32x1xf32, #tpu.memory_space<vmem>>, %arg8: memref<32x1xf32, #tpu.memory_space<vmem>>, %arg9: memref<32x128xf32, #tpu.memory_space<vmem>>) attributes {dimension_semantics = [#tpu.dimension_semantics<parallel>], iteration_bounds = array<i64: 1>, scalar_prefetch = 0 : i64, scratch_operands = 0 : i64, tpu.core_type = #tpu.core_type<tc>, window_params = [{pipeline_mode = #tpu.pipeline_mode<synchronous>, transform_indices = @transform_0, window_bounds = array<i64: 288, 128>}, {pipeline_mode = #tpu.pipeline_mode<synchronous>, transform_indices = @transform_1, window_bounds = array<i64: 32, 288>}, {pipeline_mode = #tpu.pipeline_mode<synchronous>, transform_indices = @transform_2, window_bounds = array<i64: 32, 1>}, {pipeline_mode = #tpu.pipeline_mode<synchronous>, transform_indices = @transform_3, window_bounds = array<i64: 32, 1>}, {pipeline_mode = #tpu.pipeline_mode<synchronous>, transform_indices = @transform_4, window_bounds = array<i64: 16, 128>}, {pipeline_mode = #tpu.pipeline_mode<synchronous>, transform_indices = @transform_5, window_bounds = array<i64: 32, 16>}, {pipeline_mode = #tpu.pipeline_mode<synchronous>, transform_indices = @transform_6, window_bounds = array<i64: 32, 1>}, {pipeline_mode = #tpu.pipeline_mode<synchronous>, transform_indices = @transform_7, window_bounds = array<i64: 32, 1>}, {pipeline_mode = #tpu.pipeline_mode<synchronous>, transform_indices = @transform_8, window_bounds = array<i64: 32, 128>}]} {
    %c0 = arith.constant 0 : index
    %c0_0 = arith.constant 0 : index
    %0 = vector.load %arg2[%c0, %c0_0] : memref<32x288xbf16, #tpu.memory_space<vmem>>, vector<32x288xbf16>
    %c0_1 = arith.constant 0 : index
    %c0_2 = arith.constant 0 : index
    %1 = vector.load %arg1[%c0_1, %c0_2] : memref<288x128xbf16, #tpu.memory_space<vmem>>, vector<288x128xbf16>
    %cst = arith.constant dense<0.000000e+00> : vector<32x128xf32>
    %2 = tpu.matmul %0, %1, %cst {dimension_numbers = #tpu.dot_dimension_numbers<[1], [0], [0], [1], [0, 0, 1, 1], [], []>} : vector<32x288xbf16>, vector<288x128xbf16>, vector<32x128xf32> -> vector<32x128xf32>
    %c0_3 = arith.constant 0 : index
    %c0_4 = arith.constant 0 : index
    %3 = vector.load %arg3[%c0_3, %c0_4] : memref<32x1xf32, #tpu.memory_space<vmem>>, vector<32x1xf32>
    %4 = vector.broadcast %3 : vector<32x1xf32> to vector<32x128xf32>
    %5 = arith.mulf %2, %4 : vector<32x128xf32>
    %c0_5 = arith.constant 0 : index
    %c0_6 = arith.constant 0 : index
    %6 = vector.load %arg4[%c0_5, %c0_6] : memref<32x1xf32, #tpu.memory_space<vmem>>, vector<32x1xf32>
    %7 = vector.broadcast %6 : vector<32x1xf32> to vector<32x128xf32>
    %8 = arith.addf %5, %7 : vector<32x128xf32>
    %c0_7 = arith.constant 0 : index
    %c0_8 = arith.constant 0 : index
    %9 = vector.load %arg6[%c0_7, %c0_8] : memref<32x16xbf16, #tpu.memory_space<vmem>>, vector<32x16xbf16>
    %c0_9 = arith.constant 0 : index
    %c0_10 = arith.constant 0 : index
    %10 = vector.load %arg5[%c0_9, %c0_10] : memref<16x128xbf16, #tpu.memory_space<vmem>>, vector<16x128xbf16>
    %cst_11 = arith.constant dense<0.000000e+00> : vector<32x128xf32>
    %11 = tpu.matmul %9, %10, %cst_11 {dimension_numbers = #tpu.dot_dimension_numbers<[1], [0], [0], [1], [0, 0, 1, 1], [], []>} : vector<32x16xbf16>, vector<16x128xbf16>, vector<32x128xf32> -> vector<32x128xf32>
    %c0_12 = arith.constant 0 : index
    %c0_13 = arith.constant 0 : index
    %12 = vector.load %arg7[%c0_12, %c0_13] : memref<32x1xf32, #tpu.memory_space<vmem>>, vector<32x1xf32>
    %13 = vector.broadcast %12 : vector<32x1xf32> to vector<32x128xf32>
    %14 = arith.mulf %11, %13 : vector<32x128xf32>
    %c0_14 = arith.constant 0 : index
    %c0_15 = arith.constant 0 : index
    %15 = vector.load %arg8[%c0_14, %c0_15] : memref<32x1xf32, #tpu.memory_space<vmem>>, vector<32x1xf32>
    %16 = vector.broadcast %15 : vector<32x1xf32> to vector<32x128xf32>
    %17 = arith.addf %14, %16 : vector<32x128xf32>
    %18 = arith.addf %8, %17 : vector<32x128xf32>
    %cst_16 = arith.constant 0.000000e+00 : f32
    %19 = vector.broadcast %cst_16 : f32 to vector<32x128xf32>
    %20 = arith.maximumf %18, %19 : vector<32x128xf32>
    %c0_17 = arith.constant 0 : index
    %c0_18 = arith.constant 0 : index
    %21 = vector.load %arg9[%c0_17, %c0_18] : memref<32x128xf32, #tpu.memory_space<vmem>>, vector<32x128xf32>
    tpu.vector_store %arg9[%c0_17, %c0_18], %20 {strides = array<i32>} : memref<32x128xf32, #tpu.memory_space<vmem>>, vector<32x128xf32>,
    return
  }
  func.func @transform_0(%arg0: i32) -> (i32, i32) {
    %c0_i32 = arith.constant 0 : i32
    %c0_i32_0 = arith.constant 0 : i32
    %c0_i32_1 = arith.constant 0 : i32
    return %c0_i32, %c0_i32_0 : i32, i32
  }
  func.func @transform_1(%arg0: i32) -> (i32, i32) {
    %c0_i32 = arith.constant 0 : i32
    %c0_i32_0 = arith.constant 0 : i32
    %c0_i32_1 = arith.constant 0 : i32
    return %c0_i32, %c0_i32_0 : i32, i32
  }
  func.func @transform_2(%arg0: i32) -> (i32, i32) {
    %c0_i32 = arith.constant 0 : i32
    %c0_i32_0 = arith.constant 0 : i32
    %c0_i32_1 = arith.constant 0 : i32
    return %c0_i32, %c0_i32_0 : i32, i32
  }
  func.func @transform_3(%arg0: i32) -> (i32, i32) {
    %c0_i32 = arith.constant 0 : i32
    %c0_i32_0 = arith.constant 0 : i32
    %c0_i32_1 = arith.constant 0 : i32
    return %c0_i32, %c0_i32_0 : i32, i32
  }
  func.func @transform_4(%arg0: i32) -> (i32, i32) {
    %c0_i32 = arith.constant 0 : i32
    %c0_i32_0 = arith.constant 0 : i32
    %c0_i32_1 = arith.constant 0 : i32
    return %c0_i32, %c0_i32_0 : i32, i32
  }
  func.func @transform_5(%arg0: i32) -> (i32, i32) {
    %c0_i32 = arith.constant 0 : i32
    %c0_i32_0 = arith.constant 0 : i32
    %c0_i32_1 = arith.constant 0 : i32
    return %c0_i32, %c0_i32_0 : i32, i32
  }
  func.func @transform_6(%arg0: i32) -> (i32, i32) {
    %c0_i32 = arith.constant 0 : i32
    %c0_i32_0 = arith.constant 0 : i32
    %c0_i32_1 = arith.constant 0 : i32
    return %c0_i32, %c0_i32_0 : i32, i32
  }
  func.func @transform_7(%arg0: i32) -> (i32, i32) {
    %c0_i32 = arith.constant 0 : i32
    %c0_i32_0 = arith.constant 0 : i32
    %c0_i32_1 = arith.constant 0 : i32
    return %c0_i32, %c0_i32_0 : i32, i32
  }
  func.func @transform_8(%arg0: i32) -> (i32, i32) {
    %c0_i32 = arith.constant 0 : i32
    %c0_i32_0 = arith.constant 0 : i32
    %c0_i32_1 = arith.constant 0 : i32
    return %c0_i32, %c0_i32_0 : i32, i32
  }
}

module attributes {stable_mosaic.version = 11 : i64} {
  func.func @_aa_front_kernel(%arg0: i32, %arg1: memref<288x32xbf16, #tpu.memory_space<vmem>>, %arg2: memref<52x288xbf16, #tpu.memory_space<vmem>>, %arg3: memref<52x1xf32, #tpu.memory_space<vmem>>, %arg4: memref<52x1xf32, #tpu.memory_space<vmem>>, %arg5: memref<52x32xbf16, #tpu.memory_space<vmem>>, %arg6: memref<52x32xf32, #tpu.memory_space<vmem>>, %arg7: memref<52x32xf32, #tpu.memory_space<vmem>>) attributes {dimension_semantics = [#tpu.dimension_semantics<parallel>], iteration_bounds = array<i64: 1>, scalar_prefetch = 0 : i64, scratch_operands = 0 : i64, tpu.core_type = #tpu.core_type<tc>, window_params = [{pipeline_mode = #tpu.pipeline_mode<synchronous>, transform_indices = @transform_0, window_bounds = array<i64: 288, 32>}, {pipeline_mode = #tpu.pipeline_mode<synchronous>, transform_indices = @transform_1, window_bounds = array<i64: 52, 288>}, {pipeline_mode = #tpu.pipeline_mode<synchronous>, transform_indices = @transform_2, window_bounds = array<i64: 52, 1>}, {pipeline_mode = #tpu.pipeline_mode<synchronous>, transform_indices = @transform_3, window_bounds = array<i64: 52, 1>}, {pipeline_mode = #tpu.pipeline_mode<synchronous>, transform_indices = @transform_4, window_bounds = array<i64: 52, 32>}, {pipeline_mode = #tpu.pipeline_mode<synchronous>, transform_indices = @transform_5, window_bounds = array<i64: 52, 32>}, {pipeline_mode = #tpu.pipeline_mode<synchronous>, transform_indices = @transform_6, window_bounds = array<i64: 52, 32>}]} {
    %c0 = arith.constant 0 : index
    %c0_0 = arith.constant 0 : index
    %0 = vector.load %arg1[%c0, %c0_0] : memref<288x32xbf16, #tpu.memory_space<vmem>>, vector<288x32xbf16>
    %c0_1 = arith.constant 0 : index
    %c0_2 = arith.constant 0 : index
    %1 = vector.load %arg2[%c0_1, %c0_2] : memref<52x288xbf16, #tpu.memory_space<vmem>>, vector<52x288xbf16>
    %cst = arith.constant dense<0.000000e+00> : vector<52x32xf32>
    %2 = tpu.matmul %1, %0, %cst {dimension_numbers = #tpu.dot_dimension_numbers<[1], [0], [0], [1], [0, 0, 1, 1], [], []>} : vector<52x288xbf16>, vector<288x32xbf16>, vector<52x32xf32> -> vector<52x32xf32>
    %c0_3 = arith.constant 0 : index
    %c0_4 = arith.constant 0 : index
    %3 = vector.load %arg3[%c0_3, %c0_4] : memref<52x1xf32, #tpu.memory_space<vmem>>, vector<52x1xf32>
    %4 = vector.broadcast %3 : vector<52x1xf32> to vector<52x32xf32>
    %5 = arith.mulf %2, %4 : vector<52x32xf32>
    %c0_5 = arith.constant 0 : index
    %c0_6 = arith.constant 0 : index
    %6 = vector.load %arg4[%c0_5, %c0_6] : memref<52x1xf32, #tpu.memory_space<vmem>>, vector<52x1xf32>
    %7 = vector.broadcast %6 : vector<52x1xf32> to vector<52x32xf32>
    %8 = arith.addf %5, %7 : vector<52x32xf32>
    %cst_7 = arith.constant 0.000000e+00 : f32
    %9 = vector.broadcast %cst_7 : f32 to vector<52x32xf32>
    %10 = arith.maximumf %8, %9 : vector<52x32xf32>
    %c0_8 = arith.constant 0 : index
    %c0_9 = arith.constant 0 : index
    %11 = vector.load %arg6[%c0_8, %c0_9] : memref<52x32xf32, #tpu.memory_space<vmem>>, vector<52x32xf32>
    tpu.vector_store %arg6[%c0_8, %c0_9], %10 {strides = array<i32>} : memref<52x32xf32, #tpu.memory_space<vmem>>, vector<52x32xf32>,
    %12 = vector.extract_strided_slice %0 {offsets = [128, 0], sizes = [32, 32], strides = [1, 1]} : vector<288x32xbf16> to vector<32x32xbf16>
    %c0_10 = arith.constant 0 : index
    %c0_11 = arith.constant 0 : index
    %13 = vector.load %arg5[%c0_10, %c0_11] : memref<52x32xbf16, #tpu.memory_space<vmem>>, vector<52x32xbf16>
    %cst_12 = arith.constant dense<0.000000e+00> : vector<52x32xf32>
    %14 = tpu.matmul %13, %12, %cst_12 {dimension_numbers = #tpu.dot_dimension_numbers<[1], [0], [0], [1], [0, 0, 1, 1], [], []>} : vector<52x32xbf16>, vector<32x32xbf16>, vector<52x32xf32> -> vector<52x32xf32>
    %c0_13 = arith.constant 0 : index
    %c0_14 = arith.constant 0 : index
    %15 = vector.load %arg7[%c0_13, %c0_14] : memref<52x32xf32, #tpu.memory_space<vmem>>, vector<52x32xf32>
    tpu.vector_store %arg7[%c0_13, %c0_14], %14 {strides = array<i32>} : memref<52x32xf32, #tpu.memory_space<vmem>>, vector<52x32xf32>,
    return
  }
  func.func @transform_0(%arg0: i32) -> (i32, i32) {
    %c0_i32 = arith.constant 0 : i32
    %c0_i32_0 = arith.constant 0 : i32
    %c0_i32_1 = arith.constant 0 : i32
    return %c0_i32, %c0_i32_0 : i32, i32
  }
  func.func @transform_1(%arg0: i32) -> (i32, i32) {
    %c0_i32 = arith.constant 0 : i32
    %c0_i32_0 = arith.constant 0 : i32
    %c0_i32_1 = arith.constant 0 : i32
    return %c0_i32, %c0_i32_0 : i32, i32
  }
  func.func @transform_2(%arg0: i32) -> (i32, i32) {
    %c0_i32 = arith.constant 0 : i32
    %c0_i32_0 = arith.constant 0 : i32
    %c0_i32_1 = arith.constant 0 : i32
    return %c0_i32, %c0_i32_0 : i32, i32
  }
  func.func @transform_3(%arg0: i32) -> (i32, i32) {
    %c0_i32 = arith.constant 0 : i32
    %c0_i32_0 = arith.constant 0 : i32
    %c0_i32_1 = arith.constant 0 : i32
    return %c0_i32, %c0_i32_0 : i32, i32
  }
  func.func @transform_4(%arg0: i32) -> (i32, i32) {
    %c0_i32 = arith.constant 0 : i32
    %c0_i32_0 = arith.constant 0 : i32
    %c0_i32_1 = arith.constant 0 : i32
    return %c0_i32, %c0_i32_0 : i32, i32
  }
  func.func @transform_5(%arg0: i32) -> (i32, i32) {
    %c0_i32 = arith.constant 0 : i32
    %c0_i32_0 = arith.constant 0 : i32
    %c0_i32_1 = arith.constant 0 : i32
    return %c0_i32, %c0_i32_0 : i32, i32
  }
  func.func @transform_6(%arg0: i32) -> (i32, i32) {
    %c0_i32 = arith.constant 0 : i32
    %c0_i32_0 = arith.constant 0 : i32
    %c0_i32_1 = arith.constant 0 : i32
    return %c0_i32, %c0_i32_0 : i32, i32
  }
}

module attributes {stable_mosaic.version = 11 : i64} {
  func.func @_attn_kernel(%arg0: i32, %arg1: memref<2x16x20xbf16, #tpu.memory_space<vmem>>, %arg2: memref<2x16x20xbf16, #tpu.memory_space<vmem>>, %arg3: memref<2x16x12xbf16, #tpu.memory_space<vmem>>, %arg4: memref<2x16x16xf32, #tpu.memory_space<vmem>>, %arg5: memref<12x12xbf16, #tpu.memory_space<vmem>>, %arg6: memref<1x12xf32, #tpu.memory_space<vmem>>, %arg7: memref<1x12xf32, #tpu.memory_space<vmem>>, %arg8: memref<32x12xf32, #tpu.memory_space<vmem>>) attributes {dimension_semantics = [#tpu.dimension_semantics<parallel>], iteration_bounds = array<i64: 1>, scalar_prefetch = 0 : i64, scratch_operands = 0 : i64, tpu.core_type = #tpu.core_type<tc>, window_params = [{pipeline_mode = #tpu.pipeline_mode<synchronous>, transform_indices = @transform_0, window_bounds = array<i64: 2, 16, 20>}, {pipeline_mode = #tpu.pipeline_mode<synchronous>, transform_indices = @transform_1, window_bounds = array<i64: 2, 16, 20>}, {pipeline_mode = #tpu.pipeline_mode<synchronous>, transform_indices = @transform_2, window_bounds = array<i64: 2, 16, 12>}, {pipeline_mode = #tpu.pipeline_mode<synchronous>, transform_indices = @transform_3, window_bounds = array<i64: 2, 16, 16>}, {pipeline_mode = #tpu.pipeline_mode<synchronous>, transform_indices = @transform_4, window_bounds = array<i64: 12, 12>}, {pipeline_mode = #tpu.pipeline_mode<synchronous>, transform_indices = @transform_5, window_bounds = array<i64: 1, 12>}, {pipeline_mode = #tpu.pipeline_mode<synchronous>, transform_indices = @transform_6, window_bounds = array<i64: 1, 12>}, {pipeline_mode = #tpu.pipeline_mode<synchronous>, transform_indices = @transform_7, window_bounds = array<i64: 32, 12>}]} {
    %c0 = arith.constant 0 : index
    %c0_0 = arith.constant 0 : index
    %c0_1 = arith.constant 0 : index
    %0 = vector.load %arg1[%c0, %c0_0, %c0_1] : memref<2x16x20xbf16, #tpu.memory_space<vmem>>, vector<2x16x20xbf16>
    %c0_2 = arith.constant 0 : index
    %c0_3 = arith.constant 0 : index
    %c0_4 = arith.constant 0 : index
    %1 = vector.load %arg2[%c0_2, %c0_3, %c0_4] : memref<2x16x20xbf16, #tpu.memory_space<vmem>>, vector<2x16x20xbf16>
    "tpu.trace_start"() <{level = 10 : i32, message = "bld,bmd->blm"}> : () -> ()
    %cst = arith.constant dense<0.000000e+00> : vector<2x16x16xf32>
    %2 = tpu.matmul %0, %1, %cst {dimension_numbers = #tpu.dot_dimension_numbers<[2], [2], [1], [1], [0, 0, 0, 1, 1, 1], [0], [0]>} : vector<2x16x20xbf16>, vector<2x16x20xbf16>, vector<2x16x16xf32> -> vector<2x16x16xf32>
    "tpu.trace_stop"() : () -> ()
    %c0_5 = arith.constant 0 : index
    %c0_6 = arith.constant 0 : index
    %c0_7 = arith.constant 0 : index
    %3 = vector.load %arg4[%c0_5, %c0_6, %c0_7] : memref<2x16x16xf32, #tpu.memory_space<vmem>>, vector<2x16x16xf32>
    %4 = arith.addf %2, %3 : vector<2x16x16xf32>
    %cst_8 = arith.constant dense<0xFF800000> : vector<2x16xf32>
    %5 = vector.multi_reduction <maximumf>, %4, %cst_8 [2] : vector<2x16x16xf32> to vector<2x16xf32>
    %6 = vector.shape_cast %5 : vector<2x16xf32> to vector<2x16x1xf32>
    %7 = vector.broadcast %6 : vector<2x16x1xf32> to vector<2x16x16xf32>
    %8 = arith.subf %4, %7 : vector<2x16x16xf32>
    %9 = math.exp %8 : vector<2x16x16xf32>
    %cst_9 = arith.constant dense<0.000000e+00> : vector<2x16xf32>
    %10 = vector.multi_reduction <add>, %9, %cst_9 [2] : vector<2x16x16xf32> to vector<2x16xf32>
    %11 = vector.shape_cast %10 : vector<2x16xf32> to vector<2x16x1xf32>
    %12 = tpu.reciprocal %11 {approx = true} : vector<2x16x1xf32> -> vector<2x16x1xf32>
    %13 = vector.broadcast %12 : vector<2x16x1xf32> to vector<2x16x16xf32>
    %14 = arith.mulf %9, %13 : vector<2x16x16xf32>
    %15 = arith.truncf %14 : vector<2x16x16xf32> to vector<2x16x16xbf16>
    %c0_10 = arith.constant 0 : index
    %c0_11 = arith.constant 0 : index
    %c0_12 = arith.constant 0 : index
    %16 = vector.load %arg3[%c0_10, %c0_11, %c0_12] : memref<2x16x12xbf16, #tpu.memory_space<vmem>>, vector<2x16x12xbf16>
    "tpu.trace_start"() <{level = 10 : i32, message = "blm,bmd->bld"}> : () -> ()
    %cst_13 = arith.constant dense<0.000000e+00> : vector<2x16x12xf32>
    %17 = tpu.matmul %15, %16, %cst_13 {dimension_numbers = #tpu.dot_dimension_numbers<[2], [1], [1], [2], [0, 0, 0, 1, 1, 2], [0], [0]>} : vector<2x16x16xbf16>, vector<2x16x12xbf16>, vector<2x16x12xf32> -> vector<2x16x12xf32>
    "tpu.trace_stop"() : () -> ()
    %18 = vector.shape_cast %17 : vector<2x16x12xf32> to vector<32x12xf32>
    %19 = arith.truncf %18 : vector<32x12xf32> to vector<32x12xbf16>
    %c0_14 = arith.constant 0 : index
    %c0_15 = arith.constant 0 : index
    %20 = vector.load %arg5[%c0_14, %c0_15] : memref<12x12xbf16, #tpu.memory_space<vmem>>, vector<12x12xbf16>
    %cst_16 = arith.constant dense<0.000000e+00> : vector<32x12xf32>
    %21 = tpu.matmul %19, %20, %cst_16 {dimension_numbers = #tpu.dot_dimension_numbers<[1], [0], [0], [1], [0, 0, 1, 1], [], []>} : vector<32x12xbf16>, vector<12x12xbf16>, vector<32x12xf32> -> vector<32x12xf32>
    %c0_17 = arith.constant 0 : index
    %c0_18 = arith.constant 0 : index
    %22 = vector.load %arg6[%c0_17, %c0_18] : memref<1x12xf32, #tpu.memory_space<vmem>>, vector<1x12xf32>
    %23 = vector.broadcast %22 : vector<1x12xf32> to vector<32x12xf32>
    %24 = arith.mulf %21, %23 : vector<32x12xf32>
    %c0_19 = arith.constant 0 : index
    %c0_20 = arith.constant 0 : index
    %25 = vector.load %arg7[%c0_19, %c0_20] : memref<1x12xf32, #tpu.memory_space<vmem>>, vector<1x12xf32>
    %26 = vector.broadcast %25 : vector<1x12xf32> to vector<32x12xf32>
    %27 = arith.addf %24, %26 : vector<32x12xf32>
    %cst_21 = arith.constant 0.000000e+00 : f32
    %28 = vector.broadcast %cst_21 : f32 to vector<32x12xf32>
    %29 = arith.maximumf %27, %28 : vector<32x12xf32>
    %c0_22 = arith.constant 0 : index
    %c0_23 = arith.constant 0 : index
    %30 = vector.load %arg8[%c0_22, %c0_23] : memref<32x12xf32, #tpu.memory_space<vmem>>, vector<32x12xf32>
    tpu.vector_store %arg8[%c0_22, %c0_23], %29 {strides = array<i32>} : memref<32x12xf32, #tpu.memory_space<vmem>>, vector<32x12xf32>,
    return
  }
  func.func @transform_0(%arg0: i32) -> (i32, i32, i32) {
    %c0_i32 = arith.constant 0 : i32
    %c0_i32_0 = arith.constant 0 : i32
    %c0_i32_1 = arith.constant 0 : i32
    %c0_i32_2 = arith.constant 0 : i32
    return %c0_i32, %c0_i32_0, %c0_i32_1 : i32, i32, i32
  }
  func.func @transform_1(%arg0: i32) -> (i32, i32, i32) {
    %c0_i32 = arith.constant 0 : i32
    %c0_i32_0 = arith.constant 0 : i32
    %c0_i32_1 = arith.constant 0 : i32
    %c0_i32_2 = arith.constant 0 : i32
    return %c0_i32, %c0_i32_0, %c0_i32_1 : i32, i32, i32
  }
  func.func @transform_2(%arg0: i32) -> (i32, i32, i32) {
    %c0_i32 = arith.constant 0 : i32
    %c0_i32_0 = arith.constant 0 : i32
    %c0_i32_1 = arith.constant 0 : i32
    %c0_i32_2 = arith.constant 0 : i32
    return %c0_i32, %c0_i32_0, %c0_i32_1 : i32, i32, i32
  }
  func.func @transform_3(%arg0: i32) -> (i32, i32, i32) {
    %c0_i32 = arith.constant 0 : i32
    %c0_i32_0 = arith.constant 0 : i32
    %c0_i32_1 = arith.constant 0 : i32
    %c0_i32_2 = arith.constant 0 : i32
    return %c0_i32, %c0_i32_0, %c0_i32_1 : i32, i32, i32
  }
  func.func @transform_4(%arg0: i32) -> (i32, i32) {
    %c0_i32 = arith.constant 0 : i32
    %c0_i32_0 = arith.constant 0 : i32
    %c0_i32_1 = arith.constant 0 : i32
    return %c0_i32, %c0_i32_0 : i32, i32
  }
  func.func @transform_5(%arg0: i32) -> (i32, i32) {
    %c0_i32 = arith.constant 0 : i32
    %c0_i32_0 = arith.constant 0 : i32
    %c0_i32_1 = arith.constant 0 : i32
    return %c0_i32, %c0_i32_0 : i32, i32
  }
  func.func @transform_6(%arg0: i32) -> (i32, i32) {
    %c0_i32 = arith.constant 0 : i32
    %c0_i32_0 = arith.constant 0 : i32
    %c0_i32_1 = arith.constant 0 : i32
    return %c0_i32, %c0_i32_0 : i32, i32
  }
  func.func @transform_7(%arg0: i32) -> (i32, i32) {
    %c0_i32 = arith.constant 0 : i32
    %c0_i32_0 = arith.constant 0 : i32
    %c0_i32_1 = arith.constant 0 : i32
    return %c0_i32, %c0_i32_0 : i32, i32
  }
}

module attributes {stable_mosaic.version = 11 : i64} {
  func.func @_aa_back_head_kernel(%arg0: i32, %arg1: memref<576x32xbf16, #tpu.memory_space<vmem>>, %arg2: memref<64x576xbf16, #tpu.memory_space<vmem>>, %arg3: memref<64x1xf32, #tpu.memory_space<vmem>>, %arg4: memref<64x1xf32, #tpu.memory_space<vmem>>, %arg5: memref<32x32xbf16, #tpu.memory_space<vmem>>, %arg6: memref<64x32xbf16, #tpu.memory_space<vmem>>, %arg7: memref<64x1xf32, #tpu.memory_space<vmem>>, %arg8: memref<64x1xf32, #tpu.memory_space<vmem>>, %arg9: memref<32x2xf32, #tpu.memory_space<vmem>>, %arg10: memref<10x64xf32, #tpu.memory_space<vmem>>, %arg11: memref<10x1xf32, #tpu.memory_space<vmem>>, %arg12: memref<10x2xf32, #tpu.memory_space<vmem>>) attributes {dimension_semantics = [#tpu.dimension_semantics<parallel>], iteration_bounds = array<i64: 1>, scalar_prefetch = 0 : i64, scratch_operands = 0 : i64, tpu.core_type = #tpu.core_type<tc>, window_params = [{pipeline_mode = #tpu.pipeline_mode<synchronous>, transform_indices = @transform_0, window_bounds = array<i64: 576, 32>}, {pipeline_mode = #tpu.pipeline_mode<synchronous>, transform_indices = @transform_1, window_bounds = array<i64: 64, 576>}, {pipeline_mode = #tpu.pipeline_mode<synchronous>, transform_indices = @transform_2, window_bounds = array<i64: 64, 1>}, {pipeline_mode = #tpu.pipeline_mode<synchronous>, transform_indices = @transform_3, window_bounds = array<i64: 64, 1>}, {pipeline_mode = #tpu.pipeline_mode<synchronous>, transform_indices = @transform_4, window_bounds = array<i64: 32, 32>}, {pipeline_mode = #tpu.pipeline_mode<synchronous>, transform_indices = @transform_5, window_bounds = array<i64: 64, 32>}, {pipeline_mode = #tpu.pipeline_mode<synchronous>, transform_indices = @transform_6, window_bounds = array<i64: 64, 1>}, {pipeline_mode = #tpu.pipeline_mode<synchronous>, transform_indices = @transform_7, window_bounds = array<i64: 64, 1>}, {pipeline_mode = #tpu.pipeline_mode<synchronous>, transform_indices = @transform_8, window_bounds = array<i64: 32, 2>}, {pipeline_mode = #tpu.pipeline_mode<synchronous>, transform_indices = @transform_9, window_bounds = array<i64: 10, 64>}, {pipeline_mode = #tpu.pipeline_mode<synchronous>, transform_indices = @transform_10, window_bounds = array<i64: 10, 1>}, {pipeline_mode = #tpu.pipeline_mode<synchronous>, transform_indices = @transform_11, window_bounds = array<i64: 10, 2>}]} {
    %c0 = arith.constant 0 : index
    %c0_0 = arith.constant 0 : index
    %0 = vector.load %arg2[%c0, %c0_0] : memref<64x576xbf16, #tpu.memory_space<vmem>>, vector<64x576xbf16>
    %c0_1 = arith.constant 0 : index
    %c0_2 = arith.constant 0 : index
    %1 = vector.load %arg1[%c0_1, %c0_2] : memref<576x32xbf16, #tpu.memory_space<vmem>>, vector<576x32xbf16>
    %cst = arith.constant dense<0.000000e+00> : vector<64x32xf32>
    %2 = tpu.matmul %0, %1, %cst {dimension_numbers = #tpu.dot_dimension_numbers<[1], [0], [0], [1], [0, 0, 1, 1], [], []>} : vector<64x576xbf16>, vector<576x32xbf16>, vector<64x32xf32> -> vector<64x32xf32>
    %c0_3 = arith.constant 0 : index
    %c0_4 = arith.constant 0 : index
    %3 = vector.load %arg3[%c0_3, %c0_4] : memref<64x1xf32, #tpu.memory_space<vmem>>, vector<64x1xf32>
    %4 = vector.broadcast %3 : vector<64x1xf32> to vector<64x32xf32>
    %5 = arith.mulf %2, %4 : vector<64x32xf32>
    %c0_5 = arith.constant 0 : index
    %c0_6 = arith.constant 0 : index
    %6 = vector.load %arg4[%c0_5, %c0_6] : memref<64x1xf32, #tpu.memory_space<vmem>>, vector<64x1xf32>
    %7 = vector.broadcast %6 : vector<64x1xf32> to vector<64x32xf32>
    %8 = arith.addf %5, %7 : vector<64x32xf32>
    %c0_7 = arith.constant 0 : index
    %c0_8 = arith.constant 0 : index
    %9 = vector.load %arg6[%c0_7, %c0_8] : memref<64x32xbf16, #tpu.memory_space<vmem>>, vector<64x32xbf16>
    %c0_9 = arith.constant 0 : index
    %c0_10 = arith.constant 0 : index
    %10 = vector.load %arg5[%c0_9, %c0_10] : memref<32x32xbf16, #tpu.memory_space<vmem>>, vector<32x32xbf16>
    %cst_11 = arith.constant dense<0.000000e+00> : vector<64x32xf32>
    %11 = tpu.matmul %9, %10, %cst_11 {dimension_numbers = #tpu.dot_dimension_numbers<[1], [0], [0], [1], [0, 0, 1, 1], [], []>} : vector<64x32xbf16>, vector<32x32xbf16>, vector<64x32xf32> -> vector<64x32xf32>
    %c0_12 = arith.constant 0 : index
    %c0_13 = arith.constant 0 : index
    %12 = vector.load %arg7[%c0_12, %c0_13] : memref<64x1xf32, #tpu.memory_space<vmem>>, vector<64x1xf32>
    %13 = vector.broadcast %12 : vector<64x1xf32> to vector<64x32xf32>
    %14 = arith.mulf %11, %13 : vector<64x32xf32>
    %c0_14 = arith.constant 0 : index
    %c0_15 = arith.constant 0 : index
    %15 = vector.load %arg8[%c0_14, %c0_15] : memref<64x1xf32, #tpu.memory_space<vmem>>, vector<64x1xf32>
    %16 = vector.broadcast %15 : vector<64x1xf32> to vector<64x32xf32>
    %17 = arith.addf %14, %16 : vector<64x32xf32>
    %18 = arith.addf %8, %17 : vector<64x32xf32>
    %cst_16 = arith.constant 0.000000e+00 : f32
    %19 = vector.broadcast %cst_16 : f32 to vector<64x32xf32>
    %20 = arith.maximumf %18, %19 : vector<64x32xf32>
    %c0_17 = arith.constant 0 : index
    %c0_18 = arith.constant 0 : index
    %21 = vector.load %arg9[%c0_17, %c0_18] : memref<32x2xf32, #tpu.memory_space<vmem>>, vector<32x2xf32>
    %cst_19 = arith.constant dense<0.000000e+00> : vector<64x2xf32>
    %22 = tpu.matmul %20, %21, %cst_19 {dimension_numbers = #tpu.dot_dimension_numbers<[1], [0], [0], [1], [0, 0, 1, 1], [], []>} : vector<64x32xf32>, vector<32x2xf32>, vector<64x2xf32> -> vector<64x2xf32>
    %c0_20 = arith.constant 0 : index
    %c0_21 = arith.constant 0 : index
    %23 = vector.load %arg10[%c0_20, %c0_21] : memref<10x64xf32, #tpu.memory_space<vmem>>, vector<10x64xf32>
    %cst_22 = arith.constant dense<0.000000e+00> : vector<10x2xf32>
    %24 = tpu.matmul %23, %22, %cst_22 {dimension_numbers = #tpu.dot_dimension_numbers<[1], [0], [0], [1], [0, 0, 1, 1], [], []>} : vector<10x64xf32>, vector<64x2xf32>, vector<10x2xf32> -> vector<10x2xf32>
    %c0_23 = arith.constant 0 : index
    %c0_24 = arith.constant 0 : index
    %25 = vector.load %arg11[%c0_23, %c0_24] : memref<10x1xf32, #tpu.memory_space<vmem>>, vector<10x1xf32>
    %26 = vector.broadcast %25 : vector<10x1xf32> to vector<10x2xf32>
    %27 = arith.addf %24, %26 : vector<10x2xf32>
    %c0_25 = arith.constant 0 : index
    %c0_26 = arith.constant 0 : index
    %28 = vector.load %arg12[%c0_25, %c0_26] : memref<10x2xf32, #tpu.memory_space<vmem>>, vector<10x2xf32>
    tpu.vector_store %arg12[%c0_25, %c0_26], %27 {strides = array<i32>} : memref<10x2xf32, #tpu.memory_space<vmem>>, vector<10x2xf32>,
    return
  }
  func.func @transform_0(%arg0: i32) -> (i32, i32) {
    %c0_i32 = arith.constant 0 : i32
    %c0_i32_0 = arith.constant 0 : i32
    %c0_i32_1 = arith.constant 0 : i32
    return %c0_i32, %c0_i32_0 : i32, i32
  }
  func.func @transform_1(%arg0: i32) -> (i32, i32) {
    %c0_i32 = arith.constant 0 : i32
    %c0_i32_0 = arith.constant 0 : i32
    %c0_i32_1 = arith.constant 0 : i32
    return %c0_i32, %c0_i32_0 : i32, i32
  }
  func.func @transform_2(%arg0: i32) -> (i32, i32) {
    %c0_i32 = arith.constant 0 : i32
    %c0_i32_0 = arith.constant 0 : i32
    %c0_i32_1 = arith.constant 0 : i32
    return %c0_i32, %c0_i32_0 : i32, i32
  }
  func.func @transform_3(%arg0: i32) -> (i32, i32) {
    %c0_i32 = arith.constant 0 : i32
    %c0_i32_0 = arith.constant 0 : i32
    %c0_i32_1 = arith.constant 0 : i32
    return %c0_i32, %c0_i32_0 : i32, i32
  }
  func.func @transform_4(%arg0: i32) -> (i32, i32) {
    %c0_i32 = arith.constant 0 : i32
    %c0_i32_0 = arith.constant 0 : i32
    %c0_i32_1 = arith.constant 0 : i32
    return %c0_i32, %c0_i32_0 : i32, i32
  }
  func.func @transform_5(%arg0: i32) -> (i32, i32) {
    %c0_i32 = arith.constant 0 : i32
    %c0_i32_0 = arith.constant 0 : i32
    %c0_i32_1 = arith.constant 0 : i32
    return %c0_i32, %c0_i32_0 : i32, i32
  }
  func.func @transform_6(%arg0: i32) -> (i32, i32) {
    %c0_i32 = arith.constant 0 : i32
    %c0_i32_0 = arith.constant 0 : i32
    %c0_i32_1 = arith.constant 0 : i32
    return %c0_i32, %c0_i32_0 : i32, i32
  }
  func.func @transform_7(%arg0: i32) -> (i32, i32) {
    %c0_i32 = arith.constant 0 : i32
    %c0_i32_0 = arith.constant 0 : i32
    %c0_i32_1 = arith.constant 0 : i32
    return %c0_i32, %c0_i32_0 : i32, i32
  }
  func.func @transform_8(%arg0: i32) -> (i32, i32) {
    %c0_i32 = arith.constant 0 : i32
    %c0_i32_0 = arith.constant 0 : i32
    %c0_i32_1 = arith.constant 0 : i32
    return %c0_i32, %c0_i32_0 : i32, i32
  }
  func.func @transform_9(%arg0: i32) -> (i32, i32) {
    %c0_i32 = arith.constant 0 : i32
    %c0_i32_0 = arith.constant 0 : i32
    %c0_i32_1 = arith.constant 0 : i32
    return %c0_i32, %c0_i32_0 : i32, i32
  }
  func.func @transform_10(%arg0: i32) -> (i32, i32) {
    %c0_i32 = arith.constant 0 : i32
    %c0_i32_0 = arith.constant 0 : i32
    %c0_i32_1 = arith.constant 0 : i32
    return %c0_i32, %c0_i32_0 : i32, i32
  }
  func.func @transform_11(%arg0: i32) -> (i32, i32) {
    %c0_i32 = arith.constant 0 : i32
    %c0_i32_0 = arith.constant 0 : i32
    %c0_i32_1 = arith.constant 0 : i32
    return %c0_i32, %c0_i32_0 : i32, i32
  }
}

</mosaic_0001>

<llo_original>
// kernel: wide_resnet_forward.9
$region0: #{wide_resnet_forward.9}
  #allocation0 [shape = 'u32[]', space=smem, size = 0x4, offset = 0x4, fixed_abs, tag = 'smem constant byte address 0x4 - core index']
  #allocation1 [shape = 'u32[72,128]{1,0:T(1,128)}', space=vmem, size = 0x9000, scoped, tag = 'internal scratch']
  %s0 = inlined_call_operand.vmem [shape: bf16[27,512], index: 0, kind: input, shape index: {}]
  %s1 = inlined_call_operand.vmem [shape: bf16[16,27], index: 1, kind: input, shape index: {}]
  %s2 = inlined_call_operand.vmem [shape: f32[16,1], index: 2, kind: input, shape index: {}]
  %s3 = inlined_call_operand.vmem [shape: f32[16,1], index: 3, kind: input, shape index: {}]
  %s4 = inlined_call_operand.vmem [shape: f32[16,512], index: 4, kind: output, shape index: {}]
  %s5 = sld [smem:[#allocation0]]
  $region106: #{wide_resnet_forward.9} parent=0
    _
  %s7 = ssub.s32 1, %s5
  %s8 = scalar_select 0, %s7, %s5
  $region1: #{wide_resnet_forward.9} parent=0
    #allocation2 [shape = 'u8[32768]{0}', space=vmem, size = 0x8000, scoped, tag = 'input window, operand 0']
    #allocation3 [shape = 'u8[32768]{0}', space=vmem, size = 0x8000, scoped, tag = 'output window, operand 0']
    loop: start=0, step=1, limit=4
    $region2: #{wide_resnet_forward.9} parent=1 // loop_pre_header
      _
    $region3: #{wide_resnet_forward.9} parent=1 // loop_header
      %s10 = sphi 0, %s14
      %p11 = scmp.ge.s32.totalorder %s10, 4
      %s20 = sphi 0, %s22
      %s23 = sphi 0, %s20
      %s24 = sphi 0, %s23
      %s40 = sphi 0, %s24
      %s44 = sphi 0, %s44
      %s46 = sphi 0, %s44
      %s47 = sphi 0, %s46
      %s61 = sphi 0, %s47
      %s65 = sphi 0, %s65
      %s67 = sphi 0, %s65
      %s68 = sphi 0, %s67
      %s82 = sphi 0, %s68
      %s86 = sphi 0, %s86
      %s88 = sphi 0, %s86
      %s89 = sphi 0, %s88
      %s103 = sphi 0, %s89
      %s109 = sphi 0, %s111
      %s112 = sphi 0, %s109
      %s113 = sphi 0, %s112
      %s129 = sphi 0, %s113
    $region4: #{wide_resnet_forward.9} parent=1 // loop_header_branch
      %13 = sbr.rel (%p11) target = $region8
    $region5: #{wide_resnet_forward.9} parent=1 // loop_body
      %s15 = ssub.s32 %s10, 1
      %s16 = ssub.s32 %s10, 2
      %s17 = sadd.s32 %s10, 1
      %s18 = ssub.s32 %s10, %s17
      %p19 = scmp.eq.s32.totalorder %s18, 0
      %s21 = sadd.s32 %s20, 1
      %s22 = scalar_select %p19, %s20, %s21
      %p25 = pneg %p19
      %p26 = scmp.eq.s32.totalorder %s10, 1
      %p27 = por %p25, %p26
      %p28 = scmp.ne.s32.totalorder %s20, %s23
      %p29 = scmp.eq.s32.totalorder %s10, 0
      %p30 = por %p28, %p29
      %p31 = scmp.ne.s32.totalorder %s20, %s23
      %p32 = scmp.eq.s32.totalorder %s15, 1
      %p33 = por %p31, %p32
      %p34 = scmp.ne.s32.totalorder %s23, %s24
      %p35 = scmp.eq.s32.totalorder %s15, 0
      %p36 = por %p34, %p35
      %p37 = scmp.ne.s32.totalorder %s23, %s24
      %p38 = scmp.eq.s32.totalorder %s16, 1
      %p39 = por %p37, %p38
      %p41 = scmp.ne.s32.totalorder %s24, %s40
      %p42 = scmp.eq.s32.totalorder %s16, 0
      %p43 = por %p41, %p42
      %s45 = sadd.s32 %s44, 1
      %p48 = scmp.eq.s32.totalorder %s10, 1
      %p49 = scmp.ne.s32.totalorder %s44, %s46
      %p50 = scmp.eq.s32.totalorder %s10, 0
      %p51 = por %p49, %p50
      %p52 = scmp.ne.s32.totalorder %s44, %s46
      %p53 = scmp.eq.s32.totalorder %s15, 1
      %p54 = por %p52, %p53
      %p55 = scmp.ne.s32.totalorder %s46, %s47
      %p56 = scmp.eq.s32.totalorder %s15, 0
      %p57 = por %p55, %p56
      %p58 = scmp.ne.s32.totalorder %s46, %s47
      %p59 = scmp.eq.s32.totalorder %s16, 1
      %p60 = por %p58, %p59
      %p62 = scmp.ne.s32.totalorder %s47, %s61
      %p63 = scmp.eq.s32.totalorder %s16, 0
      %p64 = por %p62, %p63
      %s66 = sadd.s32 %s65, 1
      %p69 = scmp.eq.s32.totalorder %s10, 1
      %p70 = scmp.ne.s32.totalorder %s65, %s67
      %p71 = scmp.eq.s32.totalorder %s10, 0
      %p72 = por %p70, %p71
      %p73 = scmp.ne.s32.totalorder %s65, %s67
      %p74 = scmp.eq.s32.totalorder %s15, 1
      %p75 = por %p73, %p74
      %p76 = scmp.ne.s32.totalorder %s67, %s68
      %p77 = scmp.eq.s32.totalorder %s15, 0
      %p78 = por %p76, %p77
      %p79 = scmp.ne.s32.totalorder %s67, %s68
      %p80 = scmp.eq.s32.totalorder %s16, 1
      %p81 = por %p79, %p80
      %p83 = scmp.ne.s32.totalorder %s68, %s82
      %p84 = scmp.eq.s32.totalorder %s16, 0
      %p85 = por %p83, %p84
      %s87 = sadd.s32 %s86, 1
      %p90 = scmp.eq.s32.totalorder %s10, 1
      %p91 = scmp.ne.s32.totalorder %s86, %s88
      %p92 = scmp.eq.s32.totalorder %s10, 0
      %p93 = por %p91, %p92
      %p94 = scmp.ne.s32.totalorder %s86, %s88
      %p95 = scmp.eq.s32.totalorder %s15, 1
      %p96 = por %p94, %p95
      %p97 = scmp.ne.s32.totalorder %s88, %s89
      %p98 = scmp.eq.s32.totalorder %s15, 0
      %p99 = por %p97, %p98
      %p100 = scmp.ne.s32.totalorder %s88, %s89
      %p101 = scmp.eq.s32.totalorder %s16, 1
      %p102 = por %p100, %p101
      %p104 = scmp.ne.s32.totalorder %s89, %s103
      %p105 = scmp.eq.s32.totalorder %s16, 0
      %p106 = por %p104, %p105
      %s107 = ssub.s32 %s10, %s17
      %p108 = scmp.eq.s32.totalorder %s107, 0
      %s110 = sadd.s32 %s109, 1
      %s111 = scalar_select %p108, %s109, %s110
      %p114 = pneg %p108
      %p115 = scmp.eq.s32.totalorder %s10, 1
      %p116 = por %p114, %p115
      %p117 = scmp.ne.s32.totalorder %s109, %s112
      %p118 = scmp.eq.s32.totalorder %s10, 0
      %p119 = por %p117, %p118
      %p120 = scmp.ne.s32.totalorder %s109, %s112
      %p121 = scmp.eq.s32.totalorder %s15, 1
      %p122 = por %p120, %p121
      %p123 = scmp.ne.s32.totalorder %s112, %s113
      %p124 = scmp.eq.s32.totalorder %s15, 0
      %p125 = por %p123, %p124
      %p126 = scmp.ne.s32.totalorder %s112, %s113
      %p127 = scmp.eq.s32.totalorder %s16, 1
      %p128 = por %p126, %p127
      %p130 = scmp.ne.s32.totalorder %s113, %s129
      %p131 = scmp.eq.s32.totalorder %s16, 0
      %p132 = por %p130, %p131
      %p133 = scmp.le.s32.totalorder 1, %s10
      %p134 = scmp.lt.s32.totalorder %s10, 3
      %p135 = pnand %p133, %p134
      %p136 = pneg %p135
      // Predicated region
      $region9: #{wide_resnet_forward.9} parent=5 // pred_check
        _
      $region10: #{wide_resnet_forward.9} parent=5 // pred_check_branch
        %138 = sbr.rel (%p135) target = $region12
      $region11: #{wide_resnet_forward.9} parent=5 // pred_region
        %s139 = ssub.s32 %s10, 1
        // Predicated region
        $region13: #{wide_resnet_forward.9} parent=11 // pred_check
          %p140 = pneg %p57
        $region14: #{wide_resnet_forward.9} parent=11 // pred_check_branch
          %142 = sbr.rel (%p140) target = $region16
        $region15: #{wide_resnet_forward.9} parent=11 // pred_region
          _
        $region16: #{wide_resnet_forward.9} parent=11 // pred_fallthru
          _
        // Predicated region
        $region17: #{wide_resnet_forward.9} parent=11 // pred_check
          %p143 = pneg %p78
        $region18: #{wide_resnet_forward.9} parent=11 // pred_check_branch
          %145 = sbr.rel (%p143) target = $region20
        $region19: #{wide_resnet_forward.9} parent=11 // pred_region
          _
        $region20: #{wide_resnet_forward.9} parent=11 // pred_fallthru
          _
        // Predicated region
        $region21: #{wide_resnet_forward.9} parent=11 // pred_check
          %p146 = pneg %p99
        $region22: #{wide_resnet_forward.9} parent=11 // pred_check_branch
          %148 = sbr.rel (%p146) target = $region24
        $region23: #{wide_resnet_forward.9} parent=11 // pred_region
          _
        $region24: #{wide_resnet_forward.9} parent=11 // pred_fallthru
          _
      $region12: #{wide_resnet_forward.9} parent=5 // pred_fallthru
        _
      %p149 = scmp.lt.s32.totalorder %s10, 2
      // Predicated region
      $region25: #{wide_resnet_forward.9} parent=5 // pred_check
        %p150 = pneg %p149
      $region26: #{wide_resnet_forward.9} parent=5 // pred_check_branch
        %152 = sbr.rel (%p150) target = $region28
      $region27: #{wide_resnet_forward.9} parent=5 // pred_region
        // Predicated region
        $region29: #{wide_resnet_forward.9} parent=27 // pred_check
          %p153 = pneg %p30
        $region30: #{wide_resnet_forward.9} parent=27 // pred_check_branch
          %155 = sbr.rel (%p153) target = $region32
        $region31: #{wide_resnet_forward.9} parent=27 // pred_region
          %s156 = sand.u32 %s20, 1
          %s157 = sand.u32 %s20, 1
          %s158 = smul.addr %s157, 32
          %s159 = scalar_lea.vmem [#allocation2], %s158
          %s160 = smul.u32 2, %s10
          %s161 = smul.addr %s160, 4
          %s162 = scalar_lea.vmem %s0, %s161
          // Predicated region
          $region33: #{wide_resnet_forward.9} parent=31 // pred_check
            _
          $region34: #{wide_resnet_forward.9} parent=31 // pred_check_branch
            %164 = sbr.rel (0) target = $region36
          $region35: #{wide_resnet_forward.9} parent=31 // pred_region
            // Predicated region
            $region37: #{wide_resnet_forward.9} parent=35 // pred_check
              _
            $region38: #{wide_resnet_forward.9} parent=35 // pred_check_branch
              %166 = sbr.rel (0) target = $region40
            $region39: #{wide_resnet_forward.9} parent=35 // pred_region
              // Predicated region
              $region52: #{wide_resnet_forward.9} parent=39 // pred_check
                _
              $region53: #{wide_resnet_forward.9} parent=39 // pred_check_branch
                %188 = sbr.rel (0) target = $region55
              $region54: #{wide_resnet_forward.9} parent=39 // pred_region
                loop: start=0, step=1, limit=1
                $region56: #{wide_resnet_forward.9} parent=54 // loop_pre_header
                  _
                $region57: #{wide_resnet_forward.9} parent=54 // loop_header
                  %s190 = sphi 0, %s194
                  %p191 = scmp.ge.s32.totalorder %s190, 1
                  %s195 = sphi %s162, %s162
                  %s196 = sphi %s159, %s159
                $region58: #{wide_resnet_forward.9} parent=54 // loop_header_branch
                  %193 = sbr.rel (%p191) target = $region62
                $region59: #{wide_resnet_forward.9} parent=54 // loop_body
                  %v197 = vld [vmem:[%s195] sm:$0xff]
                  %198 = vst [vmem:[%s196] sm:$0xff] %v197
                  %v199 = vld [vmem:[%s195 + $0x10] sm:$0xff]
                  %200 = vst [vmem:[%s196 + $0x8] sm:$0xff] %v199
                  %v201 = vld [vmem:[%s195 + $0x20] sm:$0xff]
                  %202 = vst [vmem:[%s196 + $0x10] sm:$0xff] %v201
                  %v203 = vld [vmem:[%s195 + $0x30] sm:$0xff]
                  %204 = vst [vmem:[%s196 + $0x18] sm:$0xff] %v203
                $region60: #{wide_resnet_forward.9} parent=54 // loop_footer
                  %s194 = sadd.s32 1, %s190
                $region61: #{wide_resnet_forward.9} parent=54 // loop_footer_branch
                  %189 = sbr.rel target = $region57
                $region62: #{wide_resnet_forward.9} parent=54 // loop_exit
                  _
              $region55: #{wide_resnet_forward.9} parent=39 // pred_fallthru
                _
              // Predicated region
              $region63: #{wide_resnet_forward.9} parent=39 // pred_check
                _
              $region64: #{wide_resnet_forward.9} parent=39 // pred_check_branch
                %206 = sbr.rel target = $region66
              $region65: #{wide_resnet_forward.9} parent=39 // pred_region
                _
              $region66: #{wide_resnet_forward.9} parent=39 // pred_fallthru
                _
            $region40: #{wide_resnet_forward.9} parent=35 // pred_fallthru
              _
            // Predicated region
            $region41: #{wide_resnet_forward.9} parent=35 // pred_check
              _
            $region42: #{wide_resnet_forward.9} parent=35 // pred_check_branch
              %168 = sbr.rel target = $region44
            $region43: #{wide_resnet_forward.9} parent=35 // pred_region
              %s170 = ssub.s32 256, 1
              loop: start=0, step=1, limit=1
              $region45: #{wide_resnet_forward.9} parent=43 // loop_pre_header
                _
              $region46: #{wide_resnet_forward.9} parent=43 // loop_header
                %s172 = sphi 0, %s176
                %p173 = scmp.ge.s32.totalorder %s172, 1
                %s177 = sphi %s162, %s162
                %s178 = sphi %s159, %s159
              $region47: #{wide_resnet_forward.9} parent=43 // loop_header_branch
                %175 = sbr.rel (%p173) target = $region51
              $region48: #{wide_resnet_forward.9} parent=43 // loop_body
                %v179 = vld [vmem:[%s177] sm:%s170]
                %180 = vst [vmem:[%s178] sm:%s170] %v179
                %v181 = vld [vmem:[%s177 + $0x10] sm:%s170]
                %182 = vst [vmem:[%s178 + $0x8] sm:%s170] %v181
                %v183 = vld [vmem:[%s177 + $0x20] sm:%s170]
                %184 = vst [vmem:[%s178 + $0x10] sm:%s170] %v183
                %v185 = vld [vmem:[%s177 + $0x30] sm:%s170]
                %186 = vst [vmem:[%s178 + $0x18] sm:%s170] %v185
              $region49: #{wide_resnet_forward.9} parent=43 // loop_footer
                %s176 = sadd.s32 1, %s172
              $region50: #{wide_resnet_forward.9} parent=43 // loop_footer_branch
                %171 = sbr.rel target = $region46
              $region51: #{wide_resnet_forward.9} parent=43 // loop_exit
                _
            $region44: #{wide_resnet_forward.9} parent=35 // pred_fallthru
              _
          $region36: #{wide_resnet_forward.9} parent=31 // pred_fallthru
            _
          %207 = vnop
        $region32: #{wide_resnet_forward.9} parent=27 // pred_fallthru
          _
      $region28: #{wide_resnet_forward.9} parent=5 // pred_fallthru
        _
      %p208 = scmp.le.s32.totalorder 1, %s10
      %p209 = scmp.lt.s32.totalorder %s10, 3
      %p210 = pnand %p208, %p209
      %p211 = pneg %p210
      // Predicated region
      $region67: #{wide_resnet_forward.9} parent=5 // pred_check
        _
      $region68: #{wide_resnet_forward.9} parent=5 // pred_check_branch
        %213 = sbr.rel (%p210) target = $region70
      $region69: #{wide_resnet_forward.9} parent=5 // pred_region
        %s214 = ssub.s32 %s10, 1
        %s215 = sand.u32 %s23, 1
        %s216 = sand.u32 %s23, 1
        %s217 = smul.addr %s216, 32
        %s218 = scalar_lea.vmem [#allocation2], %s217
        // Predicated region
        $region71: #{wide_resnet_forward.9} parent=69 // pred_check
          %p219 = pneg %p36
        $region72: #{wide_resnet_forward.9} parent=69 // pred_check_branch
          %221 = sbr.rel (%p219) target = $region74
        $region73: #{wide_resnet_forward.9} parent=69 // pred_region
          _
        $region74: #{wide_resnet_forward.9} parent=69 // pred_fallthru
          _
        %s222 = sand.u32 %s23, 1
        %s223 = sand.u32 %s23, 1
        %s224 = smul.addr %s223, 32
        %s225 = scalar_lea.vmem [#allocation2], %s224
        %p226 = pneg %p36
        %p227 = pneg %p33
        %p228 = pneg %p57
        %p229 = pneg %p54
        %p230 = pneg %p78
        %p231 = pneg %p75
        %p232 = pneg %p99
        %p233 = pneg %p96
        %p234 = pneg %p125
        %p235 = pneg %p122
        %s236 = sand.u32 %s112, 1
        %s237 = sand.u32 %s112, 1
        %s238 = smul.addr %s237, 32
        %s239 = scalar_lea.vmem [#allocation3], %s238
        %s240 = smul.u32 2, %s15
        %s241 = smul.u32 2, %s15
        %v243 = vld [vmem:[%s1] sm:$0xf]
        %v244 = vld [vmem:[%s1 + $0x4] sm:$0xf]
        %v245 = vld [vmem:[%s218] sm:$0xff]
        %v246 = vld [vmem:[%s218 + $0x8] sm:$0xff]
        %v247 = vld [vmem:[%s218 + $0x10] sm:$0xff]
        %v248 = vld [vmem:[%s218 + $0x18] sm:$0x33]
        %v251 = vunpack.c.l.b16 %v243
        %v252 = vunpack.c.l.b16 %v244
        %v253 = vpack.c.b16 %v252, %v251
        %v258 = vunpack.c.l.b16 %v245
        %v259 = vunpack.c.h.b16 %v245
        %v260 = vunpack.c.l.b16 %v246
        %v261 = vunpack.c.h.b16 %v246
        %v262 = vunpack.c.l.b16 %v247
        %v263 = vunpack.c.h.b16 %v247
        %v264 = vunpack.c.l.b16 %v248
        %v265 = vunpack.c.h.b16 %v248
        %v266 = vpack.c.b16 %v260, %v258
        %v267 = vpack.c.b16 %v261, %v259
        %v268 = vpack.c.b16 %v264, %v262
        %v269 = vpack.c.b16 %v265, %v263
        %vm272 = vcmask 220160
        %v274 = vsel %vm272, %v253, 0
        %vm276 = vcmask 1044480
        %vm277 = vcmask 1045504
        %v278 = vsel %vm276, 4294967295, 65535
        %v279 = vsel %vm277, %v278, 0
        %v281 = vand.u32 %v268, %v279
        %v284 = vand.u32 %v269, %v279
        %286 = vmatpush.bf16.msra.mxu0 0
        %287 = vmatpush.bf16.msra.mxu0 0
        %288 = vmatpush.bf16.msra.mxu0 0
        %289 = vmatpush.bf16.msra.mxu0 0
        %290 = vmatpush.bf16.msra.mxu0 0
        %291 = vmatpush.bf16.msra.mxu0 0
        %292 = vmatpush.bf16.msra.mxu0 %v281
        %293 = vmatpush.bf16.msra.mxu0 %v266
        %294 = vmatmul.bf16.gmra.mxu0 %v274
        %v295 = vpop.f32.mrf.mxu0
        %v296 = vadd.f32 0.0, %v295
        %v297 = vpop.f32.mrf.mxu0
        %v298 = vadd.f32 0.0, %v297
        %299 = vdwg.mxu0
        %300 = vmatpush.bf16.msra.mxu0 0
        %301 = vmatpush.bf16.msra.mxu0 0
        %302 = vmatpush.bf16.msra.mxu0 0
        %303 = vmatpush.bf16.msra.mxu0 0
        %304 = vmatpush.bf16.msra.mxu0 0
        %305 = vmatpush.bf16.msra.mxu0 0
        %306 = vmatpush.bf16.msra.mxu0 %v284
        %307 = vmatpush.bf16.msra.mxu0 %v267
        %308 = vmatmul.bf16.gmra.mxu0 %v274
        %v309 = vpop.f32.mrf.mxu0
        %v310 = vadd.f32 0.0, %v309
        %v311 = vpop.f32.mrf.mxu0
        %v312 = vadd.f32 0.0, %v311
        %313 = vdwg.mxu0
        %v314 = vld [vmem:[%s2] sm:$0xff]
        %v315 = vld [vmem:[%s2 + $0x8] sm:$0xff]
        %317 = vset.pattern.permute.xlu0 0
        %318 = vperm.xlu0 %317, %v314
        %v319 = vpop.permute.xlu0 %318
        %322 = vset.pattern.permute.xlu0 0
        %323 = vperm.xlu0 %322, %v315
        %v324 = vpop.permute.xlu0 %323
        %v326 = vmul.f32 %v296, %v319
        %v327 = vmul.f32 %v310, %v319
        %v328 = vmul.f32 %v298, %v324
        %v329 = vmul.f32 %v312, %v324
        %v330 = vld [vmem:[%s3] sm:$0xff]
        %v331 = vld [vmem:[%s3 + $0x8] sm:$0xff]
        %333 = vset.pattern.permute.xlu0 0
        %334 = vperm.xlu0 %333, %v330
        %v335 = vpop.permute.xlu0 %334
        %338 = vset.pattern.permute.xlu0 0
        %339 = vperm.xlu0 %338, %v331
        %v340 = vpop.permute.xlu0 %339
        %v342 = vadd.f32 %v326, %v335
        %v343 = vadd.f32 %v327, %v335
        %v344 = vadd.f32 %v328, %v340
        %v345 = vadd.f32 %v329, %v340
        %v346 = vmax.f32 %v342, 0.0
        %v347 = vmax.f32 %v343, 0.0
        %v348 = vmax.f32 %v344, 0.0
        %v349 = vmax.f32 %v345, 0.0
        %350 = vst [vmem:[%s239] sm:$0xff] %v346
        %351 = vst [vmem:[%s239 + $0x8] sm:$0xff] %v347
        %352 = vst [vmem:[%s239 + $0x10] sm:$0xff] %v348
        %353 = vst [vmem:[%s239 + $0x18] sm:$0xff] %v349
        %s354 = sand.u32 %s112, 1
        %s355 = sand.u32 %s112, 1
        %s356 = smul.addr %s355, 32
        %s357 = scalar_lea.vmem [#allocation3], %s356
        // Predicated region
        $region75: #{wide_resnet_forward.9} parent=69 // pred_check
          %p358 = pneg %p122
        $region76: #{wide_resnet_forward.9} parent=69 // pred_check_branch
          %360 = sbr.rel (%p358) target = $region78
        $region77: #{wide_resnet_forward.9} parent=69 // pred_region
          %s361 = smul.u32 2, %s15
          %s362 = smul.addr %s361, 8
          %s363 = scalar_lea.vmem %s4, %s362
          // Predicated region
          $region79: #{wide_resnet_forward.9} parent=77 // pred_check
            _
          $region80: #{wide_resnet_forward.9} parent=77 // pred_check_branch
            %365 = sbr.rel (0) target = $region82
          $region81: #{wide_resnet_forward.9} parent=77 // pred_region
            // Predicated region
            $region83: #{wide_resnet_forward.9} parent=81 // pred_check
              _
            $region84: #{wide_resnet_forward.9} parent=81 // pred_check_branch
              %367 = sbr.rel (0) target = $region86
            $region85: #{wide_resnet_forward.9} parent=81 // pred_region
              loop: start=0, step=1, limit=1
              $region87: #{wide_resnet_forward.9} parent=85 // loop_pre_header
                _
              $region88: #{wide_resnet_forward.9} parent=85 // loop_header
                %s369 = sphi 0, %s373
                %p370 = scmp.ge.s32.totalorder %s369, 1
                %s374 = sphi %s357, %s357
                %s375 = sphi %s363, %s363
              $region89: #{wide_resnet_forward.9} parent=85 // loop_header_branch
                %372 = sbr.rel (%p370) target = $region93
              $region90: #{wide_resnet_forward.9} parent=85 // loop_body
                %v376 = vld [vmem:[%s374] sm:$0xff]
                %377 = vst [vmem:[%s375] sm:$0xff] %v376
                %v378 = vld [vmem:[%s374 + $0x8] sm:$0xff]
                %379 = vst [vmem:[%s375 + $0x8] sm:$0xff] %v378
                %v380 = vld [vmem:[%s374 + $0x10] sm:$0xff]
                %381 = vst [vmem:[%s375 + $0x20] sm:$0xff] %v380
                %v382 = vld [vmem:[%s374 + $0x18] sm:$0xff]
                %383 = vst [vmem:[%s375 + $0x28] sm:$0xff] %v382
              $region91: #{wide_resnet_forward.9} parent=85 // loop_footer
                %s373 = sadd.s32 1, %s369
              $region92: #{wide_resnet_forward.9} parent=85 // loop_footer_branch
                %368 = sbr.rel target = $region88
              $region93: #{wide_resnet_forward.9} parent=85 // loop_exit
                _
            $region86: #{wide_resnet_forward.9} parent=81 // pred_fallthru
              _
            // Predicated region
            $region94: #{wide_resnet_forward.9} parent=81 // pred_check
              _
            $region95: #{wide_resnet_forward.9} parent=81 // pred_check_branch
              %385 = sbr.rel target = $region97
            $region96: #{wide_resnet_forward.9} parent=81 // pred_region
              _
            $region97: #{wide_resnet_forward.9} parent=81 // pred_fallthru
              _
          $region82: #{wide_resnet_forward.9} parent=77 // pred_fallthru
            _
          %386 = vnop
        $region78: #{wide_resnet_forward.9} parent=69 // pred_fallthru
          _
      $region70: #{wide_resnet_forward.9} parent=5 // pred_fallthru
        _
      %p387 = scmp.le.s32.totalorder 2, %s10
      // Predicated region
      $region98: #{wide_resnet_forward.9} parent=5 // pred_check
        %p388 = pneg %p387
      $region99: #{wide_resnet_forward.9} parent=5 // pred_check_branch
        %390 = sbr.rel (%p388) target = $region101
      $region100: #{wide_resnet_forward.9} parent=5 // pred_region
        %s391 = ssub.s32 %s10, 2
        // Predicated region
        $region102: #{wide_resnet_forward.9} parent=100 // pred_check
          %p392 = pneg %p128
        $region103: #{wide_resnet_forward.9} parent=100 // pred_check_branch
          %394 = sbr.rel (%p392) target = $region105
        $region104: #{wide_resnet_forward.9} parent=100 // pred_region
          %s395 = sand.u32 %s113, 1
          %s396 = sand.u32 %s113, 1
          %s397 = smul.addr %s396, 32
          %s398 = scalar_lea.vmem [#allocation3], %s397
        $region105: #{wide_resnet_forward.9} parent=100 // pred_fallthru
          _
      $region101: #{wide_resnet_forward.9} parent=5 // pred_fallthru
        _
    $region6: #{wide_resnet_forward.9} parent=1 // loop_footer
      %s14 = sadd.s32 1, %s10
    $region7: #{wide_resnet_forward.9} parent=1 // loop_footer_branch
      %9 = sbr.rel target = $region3
    $region8: #{wide_resnet_forward.9} parent=1 // loop_exit
      _

// kernel: wide_resnet_forward.11
$region0: #{wide_resnet_forward.11}
  #allocation0 [shape = 'u32[]', space=smem, size = 0x4, offset = 0x4, fixed_abs, tag = 'smem constant byte address 0x4 - core index']
  #allocation1 [shape = 'u32[72,128]{1,0:T(1,128)}', space=vmem, size = 0x9000, scoped, tag = 'internal scratch']
  %s0 = inlined_call_operand.vmem [shape: bf16[144,512], index: 0, kind: input, shape index: {}]
  %s1 = inlined_call_operand.vmem [shape: bf16[16,144], index: 1, kind: input, shape index: {}]
  %s2 = inlined_call_operand.vmem [shape: f32[16,1], index: 2, kind: input, shape index: {}]
  %s3 = inlined_call_operand.vmem [shape: f32[16,1], index: 3, kind: input, shape index: {}]
  %s4 = inlined_call_operand.vmem [shape: f32[16,512], index: 4, kind: input, shape index: {}]
  %s5 = inlined_call_operand.vmem [shape: f32[16,512], index: 5, kind: output, shape index: {}]
  %s6 = sld [smem:[#allocation0]]
  $region133: #{wide_resnet_forward.11} parent=0
    _
  %s8 = ssub.s32 1, %s6
  %s9 = scalar_select 0, %s8, %s6
  $region1: #{wide_resnet_forward.11} parent=0
    #allocation2 [shape = 'u8[147456]{0}', space=vmem, size = 0x24000, scoped, tag = 'input window, operand 0']
    #allocation3 [shape = 'u8[32768]{0}', space=vmem, size = 0x8000, scoped, tag = 'input window, operand 4']
    #allocation4 [shape = 'u8[32768]{0}', space=vmem, size = 0x8000, scoped, tag = 'output window, operand 0']
    loop: start=0, step=1, limit=4
    $region2: #{wide_resnet_forward.11} parent=1 // loop_pre_header
      _
    $region3: #{wide_resnet_forward.11} parent=1 // loop_header
      %s11 = sphi 0, %s15
      %p12 = scmp.ge.s32.totalorder %s11, 4
      %s21 = sphi 0, %s23
      %s24 = sphi 0, %s21
      %s25 = sphi 0, %s24
      %s41 = sphi 0, %s25
      %s45 = sphi 0, %s45
      %s47 = sphi 0, %s45
      %s48 = sphi 0, %s47
      %s62 = sphi 0, %s48
      %s66 = sphi 0, %s66
      %s68 = sphi 0, %s66
      %s69 = sphi 0, %s68
      %s83 = sphi 0, %s69
      %s87 = sphi 0, %s87
      %s89 = sphi 0, %s87
      %s90 = sphi 0, %s89
      %s104 = sphi 0, %s90
      %s110 = sphi 0, %s112
      %s113 = sphi 0, %s110
      %s114 = sphi 0, %s113
      %s130 = sphi 0, %s114
      %s136 = sphi 0, %s138
      %s139 = sphi 0, %s136
      %s140 = sphi 0, %s139
      %s156 = sphi 0, %s140
    $region4: #{wide_resnet_forward.11} parent=1 // loop_header_branch
      %14 = sbr.rel (%p12) target = $region8
    $region5: #{wide_resnet_forward.11} parent=1 // loop_body
      %s16 = ssub.s32 %s11, 1
      %s17 = ssub.s32 %s11, 2
      %s18 = sadd.s32 %s11, 1
      %s19 = ssub.s32 %s11, %s18
      %p20 = scmp.eq.s32.totalorder %s19, 0
      %s22 = sadd.s32 %s21, 1
      %s23 = scalar_select %p20, %s21, %s22
      %p26 = pneg %p20
      %p27 = scmp.eq.s32.totalorder %s11, 1
      %p28 = por %p26, %p27
      %p29 = scmp.ne.s32.totalorder %s21, %s24
      %p30 = scmp.eq.s32.totalorder %s11, 0
      %p31 = por %p29, %p30
      %p32 = scmp.ne.s32.totalorder %s21, %s24
      %p33 = scmp.eq.s32.totalorder %s16, 1
      %p34 = por %p32, %p33
      %p35 = scmp.ne.s32.totalorder %s24, %s25
      %p36 = scmp.eq.s32.totalorder %s16, 0
      %p37 = por %p35, %p36
      %p38 = scmp.ne.s32.totalorder %s24, %s25
      %p39 = scmp.eq.s32.totalorder %s17, 1
      %p40 = por %p38, %p39
      %p42 = scmp.ne.s32.totalorder %s25, %s41
      %p43 = scmp.eq.s32.totalorder %s17, 0
      %p44 = por %p42, %p43
      %s46 = sadd.s32 %s45, 1
      %p49 = scmp.eq.s32.totalorder %s11, 1
      %p50 = scmp.ne.s32.totalorder %s45, %s47
      %p51 = scmp.eq.s32.totalorder %s11, 0
      %p52 = por %p50, %p51
      %p53 = scmp.ne.s32.totalorder %s45, %s47
      %p54 = scmp.eq.s32.totalorder %s16, 1
      %p55 = por %p53, %p54
      %p56 = scmp.ne.s32.totalorder %s47, %s48
      %p57 = scmp.eq.s32.totalorder %s16, 0
      %p58 = por %p56, %p57
      %p59 = scmp.ne.s32.totalorder %s47, %s48
      %p60 = scmp.eq.s32.totalorder %s17, 1
      %p61 = por %p59, %p60
      %p63 = scmp.ne.s32.totalorder %s48, %s62
      %p64 = scmp.eq.s32.totalorder %s17, 0
      %p65 = por %p63, %p64
      %s67 = sadd.s32 %s66, 1
      %p70 = scmp.eq.s32.totalorder %s11, 1
      %p71 = scmp.ne.s32.totalorder %s66, %s68
      %p72 = scmp.eq.s32.totalorder %s11, 0
      %p73 = por %p71, %p72
      %p74 = scmp.ne.s32.totalorder %s66, %s68
      %p75 = scmp.eq.s32.totalorder %s16, 1
      %p76 = por %p74, %p75
      %p77 = scmp.ne.s32.totalorder %s68, %s69
      %p78 = scmp.eq.s32.totalorder %s16, 0
      %p79 = por %p77, %p78
      %p80 = scmp.ne.s32.totalorder %s68, %s69
      %p81 = scmp.eq.s32.totalorder %s17, 1
      %p82 = por %p80, %p81
      %p84 = scmp.ne.s32.totalorder %s69, %s83
      %p85 = scmp.eq.s32.totalorder %s17, 0
      %p86 = por %p84, %p85
      %s88 = sadd.s32 %s87, 1
      %p91 = scmp.eq.s32.totalorder %s11, 1
      %p92 = scmp.ne.s32.totalorder %s87, %s89
      %p93 = scmp.eq.s32.totalorder %s11, 0
      %p94 = por %p92, %p93
      %p95 = scmp.ne.s32.totalorder %s87, %s89
      %p96 = scmp.eq.s32.totalorder %s16, 1
      %p97 = por %p95, %p96
      %p98 = scmp.ne.s32.totalorder %s89, %s90
      %p99 = scmp.eq.s32.totalorder %s16, 0
      %p100 = por %p98, %p99
      %p101 = scmp.ne.s32.totalorder %s89, %s90
      %p102 = scmp.eq.s32.totalorder %s17, 1
      %p103 = por %p101, %p102
      %p105 = scmp.ne.s32.totalorder %s90, %s104
      %p106 = scmp.eq.s32.totalorder %s17, 0
      %p107 = por %p105, %p106
      %s108 = ssub.s32 %s11, %s18
      %p109 = scmp.eq.s32.totalorder %s108, 0
      %s111 = sadd.s32 %s110, 1
      %s112 = scalar_select %p109, %s110, %s111
      %p115 = pneg %p109
      %p116 = scmp.eq.s32.totalorder %s11, 1
      %p117 = por %p115, %p116
      %p118 = scmp.ne.s32.totalorder %s110, %s113
      %p119 = scmp.eq.s32.totalorder %s11, 0
      %p120 = por %p118, %p119
      %p121 = scmp.ne.s32.totalorder %s110, %s113
      %p122 = scmp.eq.s32.totalorder %s16, 1
      %p123 = por %p121, %p122
      %p124 = scmp.ne.s32.totalorder %s113, %s114
      %p125 = scmp.eq.s32.totalorder %s16, 0
      %p126 = por %p124, %p125
      %p127 = scmp.ne.s32.totalorder %s113, %s114
      %p128 = scmp.eq.s32.totalorder %s17, 1
      %p129 = por %p127, %p128
      %p131 = scmp.ne.s32.totalorder %s114, %s130
      %p132 = scmp.eq.s32.totalorder %s17, 0
      %p133 = por %p131, %p132
      %s134 = ssub.s32 %s11, %s18
      %p135 = scmp.eq.s32.totalorder %s134, 0
      %s137 = sadd.s32 %s136, 1
      %s138 = scalar_select %p135, %s136, %s137
      %p141 = pneg %p135
      %p142 = scmp.eq.s32.totalorder %s11, 1
      %p143 = por %p141, %p142
      %p144 = scmp.ne.s32.totalorder %s136, %s139
      %p145 = scmp.eq.s32.totalorder %s11, 0
      %p146 = por %p144, %p145
      %p147 = scmp.ne.s32.totalorder %s136, %s139
      %p148 = scmp.eq.s32.totalorder %s16, 1
      %p149 = por %p147, %p148
      %p150 = scmp.ne.s32.totalorder %s139, %s140
      %p151 = scmp.eq.s32.totalorder %s16, 0
      %p152 = por %p150, %p151
      %p153 = scmp.ne.s32.totalorder %s139, %s140
      %p154 = scmp.eq.s32.totalorder %s17, 1
      %p155 = por %p153, %p154
      %p157 = scmp.ne.s32.totalorder %s140, %s156
      %p158 = scmp.eq.s32.totalorder %s17, 0
      %p159 = por %p157, %p158
      %p160 = scmp.le.s32.totalorder 1, %s11
      %p161 = scmp.lt.s32.totalorder %s11, 3
      %p162 = pnand %p160, %p161
      %p163 = pneg %p162
      // Predicated region
      $region9: #{wide_resnet_forward.11} parent=5 // pred_check
        _
      $region10: #{wide_resnet_forward.11} parent=5 // pred_check_branch
        %165 = sbr.rel (%p162) target = $region12
      $region11: #{wide_resnet_forward.11} parent=5 // pred_region
        %s166 = ssub.s32 %s11, 1
        // Predicated region
        $region13: #{wide_resnet_forward.11} parent=11 // pred_check
          %p167 = pneg %p58
        $region14: #{wide_resnet_forward.11} parent=11 // pred_check_branch
          %169 = sbr.rel (%p167) target = $region16
        $region15: #{wide_resnet_forward.11} parent=11 // pred_region
          _
        $region16: #{wide_resnet_forward.11} parent=11 // pred_fallthru
          _
        // Predicated region
        $region17: #{wide_resnet_forward.11} parent=11 // pred_check
          %p170 = pneg %p79
        $region18: #{wide_resnet_forward.11} parent=11 // pred_check_branch
          %172 = sbr.rel (%p170) target = $region20
        $region19: #{wide_resnet_forward.11} parent=11 // pred_region
          _
        $region20: #{wide_resnet_forward.11} parent=11 // pred_fallthru
          _
        // Predicated region
        $region21: #{wide_resnet_forward.11} parent=11 // pred_check
          %p173 = pneg %p100
        $region22: #{wide_resnet_forward.11} parent=11 // pred_check_branch
          %175 = sbr.rel (%p173) target = $region24
        $region23: #{wide_resnet_forward.11} parent=11 // pred_region
          _
        $region24: #{wide_resnet_forward.11} parent=11 // pred_fallthru
          _
      $region12: #{wide_resnet_forward.11} parent=5 // pred_fallthru
        _
      %p176 = scmp.lt.s32.totalorder %s11, 2
      // Predicated region
      $region25: #{wide_resnet_forward.11} parent=5 // pred_check
        %p177 = pneg %p176
      $region26: #{wide_resnet_forward.11} parent=5 // pred_check_branch
        %179 = sbr.rel (%p177) target = $region28
      $region27: #{wide_resnet_forward.11} parent=5 // pred_region
        // Predicated region
        $region29: #{wide_resnet_forward.11} parent=27 // pred_check
          %p180 = pneg %p31
        $region30: #{wide_resnet_forward.11} parent=27 // pred_check_branch
          %182 = sbr.rel (%p180) target = $region32
        $region31: #{wide_resnet_forward.11} parent=27 // pred_region
          %s183 = sand.u32 %s21, 1
          %s184 = sand.u32 %s21, 1
          %s185 = smul.addr %s184, 144
          %s186 = scalar_lea.vmem [#allocation2], %s185
          %s187 = smul.u32 2, %s11
          %s188 = smul.addr %s187, 4
          %s189 = scalar_lea.vmem %s0, %s188
          // Predicated region
          $region33: #{wide_resnet_forward.11} parent=31 // pred_check
            _
          $region34: #{wide_resnet_forward.11} parent=31 // pred_check_branch
            %191 = sbr.rel (0) target = $region36
          $region35: #{wide_resnet_forward.11} parent=31 // pred_region
            // Predicated region
            $region37: #{wide_resnet_forward.11} parent=35 // pred_check
              _
            $region38: #{wide_resnet_forward.11} parent=35 // pred_check_branch
              %193 = sbr.rel (0) target = $region40
            $region39: #{wide_resnet_forward.11} parent=35 // pred_region
              // Predicated region
              $region52: #{wide_resnet_forward.11} parent=39 // pred_check
                _
              $region53: #{wide_resnet_forward.11} parent=39 // pred_check_branch
                %243 = sbr.rel (0) target = $region55
              $region54: #{wide_resnet_forward.11} parent=39 // pred_region
                loop: start=0, step=1, limit=1
                $region56: #{wide_resnet_forward.11} parent=54 // loop_pre_header
                  _
                $region57: #{wide_resnet_forward.11} parent=54 // loop_header
                  %s245 = sphi 0, %s249
                  %p246 = scmp.ge.s32.totalorder %s245, 1
                  %s250 = sphi %s189, %s189
                  %s251 = sphi %s186, %s186
                $region58: #{wide_resnet_forward.11} parent=54 // loop_header_branch
                  %248 = sbr.rel (%p246) target = $region62
                $region59: #{wide_resnet_forward.11} parent=54 // loop_body
                  %v252 = vld [vmem:[%s250] sm:$0xff]
                  %253 = vst [vmem:[%s251] sm:$0xff] %v252
                  %v254 = vld [vmem:[%s250 + $0x10] sm:$0xff]
                  %255 = vst [vmem:[%s251 + $0x8] sm:$0xff] %v254
                  %v256 = vld [vmem:[%s250 + $0x20] sm:$0xff]
                  %257 = vst [vmem:[%s251 + $0x10] sm:$0xff] %v256
                  %v258 = vld [vmem:[%s250 + $0x30] sm:$0xff]
                  %259 = vst [vmem:[%s251 + $0x18] sm:$0xff] %v258
                  %v260 = vld [vmem:[%s250 + $0x40] sm:$0xff]
                  %261 = vst [vmem:[%s251 + $0x20] sm:$0xff] %v260
                  %v262 = vld [vmem:[%s250 + $0x50] sm:$0xff]
                  %263 = vst [vmem:[%s251 + $0x28] sm:$0xff] %v262
                  %v264 = vld [vmem:[%s250 + $0x60] sm:$0xff]
                  %265 = vst [vmem:[%s251 + $0x30] sm:$0xff] %v264
                  %v266 = vld [vmem:[%s250 + $0x70] sm:$0xff]
                  %267 = vst [vmem:[%s251 + $0x38] sm:$0xff] %v266
                  %v268 = vld [vmem:[%s250 + $0x80] sm:$0xff]
                  %269 = vst [vmem:[%s251 + $0x40] sm:$0xff] %v268
                  %v270 = vld [vmem:[%s250 + $0x90] sm:$0xff]
                  %271 = vst [vmem:[%s251 + $0x48] sm:$0xff] %v270
                  %v272 = vld [vmem:[%s250 + $0xa0] sm:$0xff]
                  %273 = vst [vmem:[%s251 + $0x50] sm:$0xff] %v272
                  %v274 = vld [vmem:[%s250 + $0xb0] sm:$0xff]
                  %275 = vst [vmem:[%s251 + $0x58] sm:$0xff] %v274
                  %v276 = vld [vmem:[%s250 + $0xc0] sm:$0xff]
                  %277 = vst [vmem:[%s251 + $0x60] sm:$0xff] %v276
                  %v278 = vld [vmem:[%s250 + $0xd0] sm:$0xff]
                  %279 = vst [vmem:[%s251 + $0x68] sm:$0xff] %v278
                  %v280 = vld [vmem:[%s250 + $0xe0] sm:$0xff]
                  %281 = vst [vmem:[%s251 + $0x70] sm:$0xff] %v280
                  %v282 = vld [vmem:[%s250 + $0xf0] sm:$0xff]
                  %283 = vst [vmem:[%s251 + $0x78] sm:$0xff] %v282
                  %v284 = vld [vmem:[%s250 + $0x100] sm:$0xff]
                  %285 = vst [vmem:[%s251 + $0x80] sm:$0xff] %v284
                  %v286 = vld [vmem:[%s250 + $0x110] sm:$0xff]
                  %287 = vst [vmem:[%s251 + $0x88] sm:$0xff] %v286
                $region60: #{wide_resnet_forward.11} parent=54 // loop_footer
                  %s249 = sadd.s32 1, %s245
                $region61: #{wide_resnet_forward.11} parent=54 // loop_footer_branch
                  %244 = sbr.rel target = $region57
                $region62: #{wide_resnet_forward.11} parent=54 // loop_exit
                  _
              $region55: #{wide_resnet_forward.11} parent=39 // pred_fallthru
                _
              // Predicated region
              $region63: #{wide_resnet_forward.11} parent=39 // pred_check
                _
              $region64: #{wide_resnet_forward.11} parent=39 // pred_check_branch
                %289 = sbr.rel target = $region66
              $region65: #{wide_resnet_forward.11} parent=39 // pred_region
                _
              $region66: #{wide_resnet_forward.11} parent=39 // pred_fallthru
                _
            $region40: #{wide_resnet_forward.11} parent=35 // pred_fallthru
              _
            // Predicated region
            $region41: #{wide_resnet_forward.11} parent=35 // pred_check
              _
            $region42: #{wide_resnet_forward.11} parent=35 // pred_check_branch
              %195 = sbr.rel target = $region44
            $region43: #{wide_resnet_forward.11} parent=35 // pred_region
              %s197 = ssub.s32 256, 1
              loop: start=0, step=1, limit=1
              $region45: #{wide_resnet_forward.11} parent=43 // loop_pre_header
                _
              $region46: #{wide_resnet_forward.11} parent=43 // loop_header
                %s199 = sphi 0, %s203
                %p200 = scmp.ge.s32.totalorder %s199, 1
                %s204 = sphi %s189, %s189
                %s205 = sphi %s186, %s186
              $region47: #{wide_resnet_forward.11} parent=43 // loop_header_branch
                %202 = sbr.rel (%p200) target = $region51
              $region48: #{wide_resnet_forward.11} parent=43 // loop_body
                %v206 = vld [vmem:[%s204] sm:%s197]
                %207 = vst [vmem:[%s205] sm:%s197] %v206
                %v208 = vld [vmem:[%s204 + $0x10] sm:%s197]
                %209 = vst [vmem:[%s205 + $0x8] sm:%s197] %v208
                %v210 = vld [vmem:[%s204 + $0x20] sm:%s197]
                %211 = vst [vmem:[%s205 + $0x10] sm:%s197] %v210
                %v212 = vld [vmem:[%s204 + $0x30] sm:%s197]
                %213 = vst [vmem:[%s205 + $0x18] sm:%s197] %v212
                %v214 = vld [vmem:[%s204 + $0x40] sm:%s197]
                %215 = vst [vmem:[%s205 + $0x20] sm:%s197] %v214
                %v216 = vld [vmem:[%s204 + $0x50] sm:%s197]
                %217 = vst [vmem:[%s205 + $0x28] sm:%s197] %v216
                %v218 = vld [vmem:[%s204 + $0x60] sm:%s197]
                %219 = vst [vmem:[%s205 + $0x30] sm:%s197] %v218
                %v220 = vld [vmem:[%s204 + $0x70] sm:%s197]
                %221 = vst [vmem:[%s205 + $0x38] sm:%s197] %v220
                %v222 = vld [vmem:[%s204 + $0x80] sm:%s197]
                %223 = vst [vmem:[%s205 + $0x40] sm:%s197] %v222
                %v224 = vld [vmem:[%s204 + $0x90] sm:%s197]
                %225 = vst [vmem:[%s205 + $0x48] sm:%s197] %v224
                %v226 = vld [vmem:[%s204 + $0xa0] sm:%s197]
                %227 = vst [vmem:[%s205 + $0x50] sm:%s197] %v226
                %v228 = vld [vmem:[%s204 + $0xb0] sm:%s197]
                %229 = vst [vmem:[%s205 + $0x58] sm:%s197] %v228
                %v230 = vld [vmem:[%s204 + $0xc0] sm:%s197]
                %231 = vst [vmem:[%s205 + $0x60] sm:%s197] %v230
                %v232 = vld [vmem:[%s204 + $0xd0] sm:%s197]
                %233 = vst [vmem:[%s205 + $0x68] sm:%s197] %v232
                %v234 = vld [vmem:[%s204 + $0xe0] sm:%s197]
                %235 = vst [vmem:[%s205 + $0x70] sm:%s197] %v234
                %v236 = vld [vmem:[%s204 + $0xf0] sm:%s197]
                %237 = vst [vmem:[%s205 + $0x78] sm:%s197] %v236
                %v238 = vld [vmem:[%s204 + $0x100] sm:%s197]
                %239 = vst [vmem:[%s205 + $0x80] sm:%s197] %v238
                %v240 = vld [vmem:[%s204 + $0x110] sm:%s197]
                %241 = vst [vmem:[%s205 + $0x88] sm:%s197] %v240
              $region49: #{wide_resnet_forward.11} parent=43 // loop_footer
                %s203 = sadd.s32 1, %s199
              $region50: #{wide_resnet_forward.11} parent=43 // loop_footer_branch
                %198 = sbr.rel target = $region46
              $region51: #{wide_resnet_forward.11} parent=43 // loop_exit
                _
            $region44: #{wide_resnet_forward.11} parent=35 // pred_fallthru
              _
          $region36: #{wide_resnet_forward.11} parent=31 // pred_fallthru
            _
          %290 = vnop
        $region32: #{wide_resnet_forward.11} parent=27 // pred_fallthru
          _
        // Predicated region
        $region67: #{wide_resnet_forward.11} parent=27 // pred_check
          %p291 = pneg %p120
        $region68: #{wide_resnet_forward.11} parent=27 // pred_check_branch
          %293 = sbr.rel (%p291) target = $region70
        $region69: #{wide_resnet_forward.11} parent=27 // pred_region
          %s294 = sand.u32 %s110, 1
          %s295 = sand.u32 %s110, 1
          %s296 = smul.addr %s295, 32
          %s297 = scalar_lea.vmem [#allocation3], %s296
          %s298 = smul.u32 2, %s11
          %s299 = smul.addr %s298, 8
          %s300 = scalar_lea.vmem %s4, %s299
          // Predicated region
          $region71: #{wide_resnet_forward.11} parent=69 // pred_check
            _
          $region72: #{wide_resnet_forward.11} parent=69 // pred_check_branch
            %302 = sbr.rel (0) target = $region74
          $region73: #{wide_resnet_forward.11} parent=69 // pred_region
            // Predicated region
            $region75: #{wide_resnet_forward.11} parent=73 // pred_check
              _
            $region76: #{wide_resnet_forward.11} parent=73 // pred_check_branch
              %304 = sbr.rel (0) target = $region78
            $region77: #{wide_resnet_forward.11} parent=73 // pred_region
              loop: start=0, step=1, limit=1
              $region79: #{wide_resnet_forward.11} parent=77 // loop_pre_header
                _
              $region80: #{wide_resnet_forward.11} parent=77 // loop_header
                %s306 = sphi 0, %s310
                %p307 = scmp.ge.s32.totalorder %s306, 1
                %s311 = sphi %s300, %s300
                %s312 = sphi %s297, %s297
              $region81: #{wide_resnet_forward.11} parent=77 // loop_header_branch
                %309 = sbr.rel (%p307) target = $region85
              $region82: #{wide_resnet_forward.11} parent=77 // loop_body
                %v313 = vld [vmem:[%s311] sm:$0xff]
                %314 = vst [vmem:[%s312] sm:$0xff] %v313
                %v315 = vld [vmem:[%s311 + $0x8] sm:$0xff]
                %316 = vst [vmem:[%s312 + $0x8] sm:$0xff] %v315
                %v317 = vld [vmem:[%s311 + $0x20] sm:$0xff]
                %318 = vst [vmem:[%s312 + $0x10] sm:$0xff] %v317
                %v319 = vld [vmem:[%s311 + $0x28] sm:$0xff]
                %320 = vst [vmem:[%s312 + $0x18] sm:$0xff] %v319
              $region83: #{wide_resnet_forward.11} parent=77 // loop_footer
                %s310 = sadd.s32 1, %s306
              $region84: #{wide_resnet_forward.11} parent=77 // loop_footer_branch
                %305 = sbr.rel target = $region80
              $region85: #{wide_resnet_forward.11} parent=77 // loop_exit
                _
            $region78: #{wide_resnet_forward.11} parent=73 // pred_fallthru
              _
            // Predicated region
            $region86: #{wide_resnet_forward.11} parent=73 // pred_check
              _
            $region87: #{wide_resnet_forward.11} parent=73 // pred_check_branch
              %322 = sbr.rel target = $region89
            $region88: #{wide_resnet_forward.11} parent=73 // pred_region
              _
            $region89: #{wide_resnet_forward.11} parent=73 // pred_fallthru
              _
          $region74: #{wide_resnet_forward.11} parent=69 // pred_fallthru
            _
          %323 = vnop
        $region70: #{wide_resnet_forward.11} parent=27 // pred_fallthru
          _
      $region28: #{wide_resnet_forward.11} parent=5 // pred_fallthru
        _
      %p324 = scmp.le.s32.totalorder 1, %s11
      %p325 = scmp.lt.s32.totalorder %s11, 3
      %p326 = pnand %p324, %p325
      %p327 = pneg %p326
      // Predicated region
      $region90: #{wide_resnet_forward.11} parent=5 // pred_check
        _
      $region91: #{wide_resnet_forward.11} parent=5 // pred_check_branch
        %329 = sbr.rel (%p326) target = $region93
      $region92: #{wide_resnet_forward.11} parent=5 // pred_region
        %s330 = ssub.s32 %s11, 1
        %s331 = sand.u32 %s24, 1
        %s332 = sand.u32 %s24, 1
        %s333 = smul.addr %s332, 144
        %s334 = scalar_lea.vmem [#allocation2], %s333
        // Predicated region
        $region94: #{wide_resnet_forward.11} parent=92 // pred_check
          %p335 = pneg %p37
        $region95: #{wide_resnet_forward.11} parent=92 // pred_check_branch
          %337 = sbr.rel (%p335) target = $region97
        $region96: #{wide_resnet_forward.11} parent=92 // pred_region
          _
        $region97: #{wide_resnet_forward.11} parent=92 // pred_fallthru
          _
        %s338 = sand.u32 %s113, 1
        %s339 = sand.u32 %s113, 1
        %s340 = smul.addr %s339, 32
        %s341 = scalar_lea.vmem [#allocation3], %s340
        // Predicated region
        $region98: #{wide_resnet_forward.11} parent=92 // pred_check
          %p342 = pneg %p126
        $region99: #{wide_resnet_forward.11} parent=92 // pred_check_branch
          %344 = sbr.rel (%p342) target = $region101
        $region100: #{wide_resnet_forward.11} parent=92 // pred_region
          _
        $region101: #{wide_resnet_forward.11} parent=92 // pred_fallthru
          _
        %s345 = sand.u32 %s24, 1
        %s346 = sand.u32 %s24, 1
        %s347 = smul.addr %s346, 144
        %s348 = scalar_lea.vmem [#allocation2], %s347
        %p349 = pneg %p37
        %p350 = pneg %p34
        %p351 = pneg %p58
        %p352 = pneg %p55
        %p353 = pneg %p79
        %p354 = pneg %p76
        %p355 = pneg %p100
        %p356 = pneg %p97
        %s357 = sand.u32 %s113, 1
        %s358 = sand.u32 %s113, 1
        %s359 = smul.addr %s358, 32
        %s360 = scalar_lea.vmem [#allocation3], %s359
        %p361 = pneg %p126
        %p362 = pneg %p123
        %p363 = pneg %p152
        %p364 = pneg %p149
        %s365 = sand.u32 %s139, 1
        %s366 = sand.u32 %s139, 1
        %s367 = smul.addr %s366, 32
        %s368 = scalar_lea.vmem [#allocation4], %s367
        %s369 = smul.u32 2, %s16
        %s370 = smul.u32 2, %s16
        %s371 = smul.u32 2, %s16
        %v373 = vld [vmem:[%s1] sm:$0xff]
        %v374 = vld [vmem:[%s1 + $0x8] sm:$0xff]
        %v375 = vld [vmem:[%s334] sm:$0xff]
        %v376 = vld [vmem:[%s334 + $0x8] sm:$0xff]
        %v377 = vld [vmem:[%s334 + $0x10] sm:$0xff]
        %v378 = vld [vmem:[%s334 + $0x18] sm:$0xff]
        %v379 = vld [vmem:[%s334 + $0x20] sm:$0xff]
        %v380 = vld [vmem:[%s334 + $0x28] sm:$0xff]
        %v381 = vld [vmem:[%s334 + $0x30] sm:$0xff]
        %v382 = vld [vmem:[%s334 + $0x38] sm:$0xff]
        %v383 = vld [vmem:[%s334 + $0x40] sm:$0xff]
        %v384 = vld [vmem:[%s334 + $0x48] sm:$0xff]
        %v385 = vld [vmem:[%s334 + $0x50] sm:$0xff]
        %v386 = vld [vmem:[%s334 + $0x58] sm:$0xff]
        %v387 = vld [vmem:[%s334 + $0x60] sm:$0xff]
        %v388 = vld [vmem:[%s334 + $0x68] sm:$0xff]
        %v389 = vld [vmem:[%s334 + $0x70] sm:$0xff]
        %v390 = vld [vmem:[%s334 + $0x78] sm:$0xff]
        %v391 = vld [vmem:[%s334 + $0x80] sm:$0xff]
        %v392 = vld [vmem:[%s334 + $0x88] sm:$0xff]
        %v395 = vunpack.c.l.b16 %v373
        %v396 = vunpack.c.h.b16 %v373
        %v397 = vunpack.c.l.b16 %v374
        %v398 = vunpack.c.h.b16 %v374
        %v399 = vpack.c.b16 %v397, %v395
        %v400 = vpack.c.b16 %v398, %v396
        %v420 = vunpack.c.l.b16 %v375
        %v421 = vunpack.c.h.b16 %v375
        %v422 = vunpack.c.l.b16 %v376
        %v423 = vunpack.c.h.b16 %v376
        %v424 = vunpack.c.l.b16 %v377
        %v425 = vunpack.c.h.b16 %v377
        %v426 = vunpack.c.l.b16 %v378
        %v427 = vunpack.c.h.b16 %v378
        %v428 = vunpack.c.l.b16 %v379
        %v429 = vunpack.c.h.b16 %v379
        %v430 = vunpack.c.l.b16 %v380
        %v431 = vunpack.c.h.b16 %v380
        %v432 = vunpack.c.l.b16 %v381
        %v433 = vunpack.c.h.b16 %v381
        %v434 = vunpack.c.l.b16 %v382
        %v435 = vunpack.c.h.b16 %v382
        %v436 = vunpack.c.l.b16 %v383
        %v437 = vunpack.c.h.b16 %v383
        %v438 = vunpack.c.l.b16 %v384
        %v439 = vunpack.c.h.b16 %v384
        %v440 = vunpack.c.l.b16 %v385
        %v441 = vunpack.c.h.b16 %v385
        %v442 = vunpack.c.l.b16 %v386
        %v443 = vunpack.c.h.b16 %v386
        %v444 = vunpack.c.l.b16 %v387
        %v445 = vunpack.c.h.b16 %v387
        %v446 = vunpack.c.l.b16 %v388
        %v447 = vunpack.c.h.b16 %v388
        %v448 = vunpack.c.l.b16 %v389
        %v449 = vunpack.c.h.b16 %v389
        %v450 = vunpack.c.l.b16 %v390
        %v451 = vunpack.c.h.b16 %v390
        %v452 = vunpack.c.l.b16 %v391
        %v453 = vunpack.c.h.b16 %v391
        %v454 = vunpack.c.l.b16 %v392
        %v455 = vunpack.c.h.b16 %v392
        %v456 = vpack.c.b16 %v422, %v420
        %v457 = vpack.c.b16 %v423, %v421
        %v458 = vpack.c.b16 %v426, %v424
        %v459 = vpack.c.b16 %v427, %v425
        %v460 = vpack.c.b16 %v430, %v428
        %v461 = vpack.c.b16 %v431, %v429
        %v462 = vpack.c.b16 %v434, %v432
        %v463 = vpack.c.b16 %v435, %v433
        %v464 = vpack.c.b16 %v438, %v436
        %v465 = vpack.c.b16 %v439, %v437
        %v466 = vpack.c.b16 %v442, %v440
        %v467 = vpack.c.b16 %v443, %v441
        %v468 = vpack.c.b16 %v446, %v444
        %v469 = vpack.c.b16 %v447, %v445
        %v470 = vpack.c.b16 %v450, %v448
        %v471 = vpack.c.b16 %v451, %v449
        %v472 = vpack.c.b16 %v454, %v452
        %v473 = vpack.c.b16 %v455, %v453
        %vm492 = vcmask 130048
        %v494 = vsel %vm492, %v400, 0
        %496 = vmatpush.bf16.msra.mxu0 %v470
        %497 = vmatpush.bf16.msra.mxu0 %v468
        %498 = vmatpush.bf16.msra.mxu0 %v466
        %499 = vmatpush.bf16.msra.mxu0 %v464
        %500 = vmatpush.bf16.msra.mxu0 %v462
        %501 = vmatpush.bf16.msra.mxu0 %v460
        %502 = vmatpush.bf16.msra.mxu0 %v458
        %503 = vmatpush.bf16.msra.mxu0 %v456
        %504 = vmatmul.bf16.gmra.mxu0 %v399
        %v505 = vpop.f32.mrf.mxu0
        %v506 = vadd.f32 0.0, %v505
        %v507 = vpop.f32.mrf.mxu0
        %v508 = vadd.f32 0.0, %v507
        %509 = vdwg.mxu0
        %510 = vmatpush.bf16.msra.mxu0 0
        %511 = vmatpush.bf16.msra.mxu0 0
        %512 = vmatpush.bf16.msra.mxu0 0
        %513 = vmatpush.bf16.msra.mxu0 0
        %514 = vmatpush.bf16.msra.mxu0 0
        %515 = vmatpush.bf16.msra.mxu0 0
        %516 = vmatpush.bf16.msra.mxu0 0
        %517 = vmatpush.bf16.msra.mxu0 %v472
        %518 = vmatmul.bf16.gmra.mxu0 %v494
        %v519 = vpop.f32.mrf.mxu0
        %v520 = vadd.f32 %v506, %v519
        %v521 = vpop.f32.mrf.mxu0
        %v522 = vadd.f32 %v508, %v521
        %523 = vdwg.mxu0
        %524 = vmatpush.bf16.msra.mxu0 %v471
        %525 = vmatpush.bf16.msra.mxu0 %v469
        %526 = vmatpush.bf16.msra.mxu0 %v467
        %527 = vmatpush.bf16.msra.mxu0 %v465
        %528 = vmatpush.bf16.msra.mxu0 %v463
        %529 = vmatpush.bf16.msra.mxu0 %v461
        %530 = vmatpush.bf16.msra.mxu0 %v459
        %531 = vmatpush.bf16.msra.mxu0 %v457
        %532 = vmatmul.bf16.gmra.mxu0 %v399
        %v533 = vpop.f32.mrf.mxu0
        %v534 = vadd.f32 0.0, %v533
        %v535 = vpop.f32.mrf.mxu0
        %v536 = vadd.f32 0.0, %v535
        %537 = vdwg.mxu0
        %538 = vmatpush.bf16.msra.mxu0 0
        %539 = vmatpush.bf16.msra.mxu0 0
        %540 = vmatpush.bf16.msra.mxu0 0
        %541 = vmatpush.bf16.msra.mxu0 0
        %542 = vmatpush.bf16.msra.mxu0 0
        %543 = vmatpush.bf16.msra.mxu0 0
        %544 = vmatpush.bf16.msra.mxu0 0
        %545 = vmatpush.bf16.msra.mxu0 %v473
        %546 = vmatmul.bf16.gmra.mxu0 %v494
        %v547 = vpop.f32.mrf.mxu0
        %v548 = vadd.f32 %v534, %v547
        %v549 = vpop.f32.mrf.mxu0
        %v550 = vadd.f32 %v536, %v549
        %551 = vdwg.mxu0
        %v552 = vld [vmem:[%s2] sm:$0xff]
        %v553 = vld [vmem:[%s2 + $0x8] sm:$0xff]
        %555 = vset.pattern.permute.xlu0 0
        %556 = vperm.xlu0 %555, %v552
        %v557 = vpop.permute.xlu0 %556
        %560 = vset.pattern.permute.xlu0 0
        %561 = vperm.xlu0 %560, %v553
        %v562 = vpop.permute.xlu0 %561
        %v564 = vmul.f32 %v520, %v557
        %v565 = vmul.f32 %v548, %v557
        %v566 = vmul.f32 %v522, %v562
        %v567 = vmul.f32 %v550, %v562
        %v568 = vld [vmem:[%s3] sm:$0xff]
        %v569 = vld [vmem:[%s3 + $0x8] sm:$0xff]
        %571 = vset.pattern.permute.xlu0 0
        %572 = vperm.xlu0 %571, %v568
        %v573 = vpop.permute.xlu0 %572
        %576 = vset.pattern.permute.xlu0 0
        %577 = vperm.xlu0 %576, %v569
        %v578 = vpop.permute.xlu0 %577
        %v580 = vadd.f32 %v564, %v573
        %v581 = vadd.f32 %v565, %v573
        %v582 = vadd.f32 %v566, %v578
        %v583 = vadd.f32 %v567, %v578
        %v584 = vld [vmem:[%s341] sm:$0xff]
        %v585 = vld [vmem:[%s341 + $0x8] sm:$0xff]
        %v586 = vld [vmem:[%s341 + $0x10] sm:$0xff]
        %v587 = vld [vmem:[%s341 + $0x18] sm:$0xff]
        %v588 = vadd.f32 %v580, %v584
        %v589 = vadd.f32 %v581, %v585
        %v590 = vadd.f32 %v582, %v586
        %v591 = vadd.f32 %v583, %v587
        %v592 = vmax.f32 %v588, 0.0
        %v593 = vmax.f32 %v589, 0.0
        %v594 = vmax.f32 %v590, 0.0
        %v595 = vmax.f32 %v591, 0.0
        %596 = vst [vmem:[%s368] sm:$0xff] %v592
        %597 = vst [vmem:[%s368 + $0x8] sm:$0xff] %v593
        %598 = vst [vmem:[%s368 + $0x10] sm:$0xff] %v594
        %599 = vst [vmem:[%s368 + $0x18] sm:$0xff] %v595
        %s600 = sand.u32 %s139, 1
        %s601 = sand.u32 %s139, 1
        %s602 = smul.addr %s601, 32
        %s603 = scalar_lea.vmem [#allocation4], %s602
        // Predicated region
        $region102: #{wide_resnet_forward.11} parent=92 // pred_check
          %p604 = pneg %p149
        $region103: #{wide_resnet_forward.11} parent=92 // pred_check_branch
          %606 = sbr.rel (%p604) target = $region105
        $region104: #{wide_resnet_forward.11} parent=92 // pred_region
          %s607 = smul.u32 2, %s16
          %s608 = smul.addr %s607, 8
          %s609 = scalar_lea.vmem %s5, %s608
          // Predicated region
          $region106: #{wide_resnet_forward.11} parent=104 // pred_check
            _
          $region107: #{wide_resnet_forward.11} parent=104 // pred_check_branch
            %611 = sbr.rel (0) target = $region109
          $region108: #{wide_resnet_forward.11} parent=104 // pred_region
            // Predicated region
            $region110: #{wide_resnet_forward.11} parent=108 // pred_check
              _
            $region111: #{wide_resnet_forward.11} parent=108 // pred_check_branch
              %613 = sbr.rel (0) target = $region113
            $region112: #{wide_resnet_forward.11} parent=108 // pred_region
              loop: start=0, step=1, limit=1
              $region114: #{wide_resnet_forward.11} parent=112 // loop_pre_header
                _
              $region115: #{wide_resnet_forward.11} parent=112 // loop_header
                %s615 = sphi 0, %s619
                %p616 = scmp.ge.s32.totalorder %s615, 1
                %s620 = sphi %s603, %s603
                %s621 = sphi %s609, %s609
              $region116: #{wide_resnet_forward.11} parent=112 // loop_header_branch
                %618 = sbr.rel (%p616) target = $region120
              $region117: #{wide_resnet_forward.11} parent=112 // loop_body
                %v622 = vld [vmem:[%s620] sm:$0xff]
                %623 = vst [vmem:[%s621] sm:$0xff] %v622
                %v624 = vld [vmem:[%s620 + $0x8] sm:$0xff]
                %625 = vst [vmem:[%s621 + $0x8] sm:$0xff] %v624
                %v626 = vld [vmem:[%s620 + $0x10] sm:$0xff]
                %627 = vst [vmem:[%s621 + $0x20] sm:$0xff] %v626
                %v628 = vld [vmem:[%s620 + $0x18] sm:$0xff]
                %629 = vst [vmem:[%s621 + $0x28] sm:$0xff] %v628
              $region118: #{wide_resnet_forward.11} parent=112 // loop_footer
                %s619 = sadd.s32 1, %s615
              $region119: #{wide_resnet_forward.11} parent=112 // loop_footer_branch
                %614 = sbr.rel target = $region115
              $region120: #{wide_resnet_forward.11} parent=112 // loop_exit
                _
            $region113: #{wide_resnet_forward.11} parent=108 // pred_fallthru
              _
            // Predicated region
            $region121: #{wide_resnet_forward.11} parent=108 // pred_check
              _
            $region122: #{wide_resnet_forward.11} parent=108 // pred_check_branch
              %631 = sbr.rel target = $region124
            $region123: #{wide_resnet_forward.11} parent=108 // pred_region
              _
            $region124: #{wide_resnet_forward.11} parent=108 // pred_fallthru
              _
          $region109: #{wide_resnet_forward.11} parent=104 // pred_fallthru
            _
          %632 = vnop
        $region105: #{wide_resnet_forward.11} parent=92 // pred_fallthru
          _
      $region93: #{wide_resnet_forward.11} parent=5 // pred_fallthru
        _
      %p633 = scmp.le.s32.totalorder 2, %s11
      // Predicated region
      $region125: #{wide_resnet_forward.11} parent=5 // pred_check
        %p634 = pneg %p633
      $region126: #{wide_resnet_forward.11} parent=5 // pred_check_branch
        %636 = sbr.rel (%p634) target = $region128
      $region127: #{wide_resnet_forward.11} parent=5 // pred_region
        %s637 = ssub.s32 %s11, 2
        // Predicated region
        $region129: #{wide_resnet_forward.11} parent=127 // pred_check
          %p638 = pneg %p155
        $region130: #{wide_resnet_forward.11} parent=127 // pred_check_branch
          %640 = sbr.rel (%p638) target = $region132
        $region131: #{wide_resnet_forward.11} parent=127 // pred_region
          %s641 = sand.u32 %s140, 1
          %s642 = sand.u32 %s140, 1
          %s643 = smul.addr %s642, 32
          %s644 = scalar_lea.vmem [#allocation4], %s643
        $region132: #{wide_resnet_forward.11} parent=127 // pred_fallthru
          _
      $region128: #{wide_resnet_forward.11} parent=5 // pred_fallthru
        _
    $region6: #{wide_resnet_forward.11} parent=1 // loop_footer
      %s15 = sadd.s32 1, %s11
    $region7: #{wide_resnet_forward.11} parent=1 // loop_footer_branch
      %10 = sbr.rel target = $region3
    $region8: #{wide_resnet_forward.11} parent=1 // loop_exit
      _

// kernel: wide_resnet_forward.10
$region0: #{wide_resnet_forward.10}
  #allocation0 [shape = 'u32[]', space=smem, size = 0x4, offset = 0x4, fixed_abs, tag = 'smem constant byte address 0x4 - core index']
  #allocation1 [shape = 'u32[72,128]{1,0:T(1,128)}', space=vmem, size = 0x9000, scoped, tag = 'internal scratch']
  %s0 = inlined_call_operand.vmem [shape: bf16[144,512], index: 0, kind: input, shape index: {}]
  %s1 = inlined_call_operand.vmem [shape: bf16[16,144], index: 1, kind: input, shape index: {}]
  %s2 = inlined_call_operand.vmem [shape: f32[16,1], index: 2, kind: input, shape index: {}]
  %s3 = inlined_call_operand.vmem [shape: f32[16,1], index: 3, kind: input, shape index: {}]
  %s4 = inlined_call_operand.vmem [shape: f32[16,512], index: 4, kind: output, shape index: {}]
  %s5 = sld [smem:[#allocation0]]
  $region106: #{wide_resnet_forward.10} parent=0
    _
  %s7 = ssub.s32 1, %s5
  %s8 = scalar_select 0, %s7, %s5
  $region1: #{wide_resnet_forward.10} parent=0
    #allocation2 [shape = 'u8[147456]{0}', space=vmem, size = 0x24000, scoped, tag = 'input window, operand 0']
    #allocation3 [shape = 'u8[32768]{0}', space=vmem, size = 0x8000, scoped, tag = 'output window, operand 0']
    loop: start=0, step=1, limit=4
    $region2: #{wide_resnet_forward.10} parent=1 // loop_pre_header
      _
    $region3: #{wide_resnet_forward.10} parent=1 // loop_header
      %s10 = sphi 0, %s14
      %p11 = scmp.ge.s32.totalorder %s10, 4
      %s20 = sphi 0, %s22
      %s23 = sphi 0, %s20
      %s24 = sphi 0, %s23
      %s40 = sphi 0, %s24
      %s44 = sphi 0, %s44
      %s46 = sphi 0, %s44
      %s47 = sphi 0, %s46
      %s61 = sphi 0, %s47
      %s65 = sphi 0, %s65
      %s67 = sphi 0, %s65
      %s68 = sphi 0, %s67
      %s82 = sphi 0, %s68
      %s86 = sphi 0, %s86
      %s88 = sphi 0, %s86
      %s89 = sphi 0, %s88
      %s103 = sphi 0, %s89
      %s109 = sphi 0, %s111
      %s112 = sphi 0, %s109
      %s113 = sphi 0, %s112
      %s129 = sphi 0, %s113
    $region4: #{wide_resnet_forward.10} parent=1 // loop_header_branch
      %13 = sbr.rel (%p11) target = $region8
    $region5: #{wide_resnet_forward.10} parent=1 // loop_body
      %s15 = ssub.s32 %s10, 1
      %s16 = ssub.s32 %s10, 2
      %s17 = sadd.s32 %s10, 1
      %s18 = ssub.s32 %s10, %s17
      %p19 = scmp.eq.s32.totalorder %s18, 0
      %s21 = sadd.s32 %s20, 1
      %s22 = scalar_select %p19, %s20, %s21
      %p25 = pneg %p19
      %p26 = scmp.eq.s32.totalorder %s10, 1
      %p27 = por %p25, %p26
      %p28 = scmp.ne.s32.totalorder %s20, %s23
      %p29 = scmp.eq.s32.totalorder %s10, 0
      %p30 = por %p28, %p29
      %p31 = scmp.ne.s32.totalorder %s20, %s23
      %p32 = scmp.eq.s32.totalorder %s15, 1
      %p33 = por %p31, %p32
      %p34 = scmp.ne.s32.totalorder %s23, %s24
      %p35 = scmp.eq.s32.totalorder %s15, 0
      %p36 = por %p34, %p35
      %p37 = scmp.ne.s32.totalorder %s23, %s24
      %p38 = scmp.eq.s32.totalorder %s16, 1
      %p39 = por %p37, %p38
      %p41 = scmp.ne.s32.totalorder %s24, %s40
      %p42 = scmp.eq.s32.totalorder %s16, 0
      %p43 = por %p41, %p42
      %s45 = sadd.s32 %s44, 1
      %p48 = scmp.eq.s32.totalorder %s10, 1
      %p49 = scmp.ne.s32.totalorder %s44, %s46
      %p50 = scmp.eq.s32.totalorder %s10, 0
      %p51 = por %p49, %p50
      %p52 = scmp.ne.s32.totalorder %s44, %s46
      %p53 = scmp.eq.s32.totalorder %s15, 1
      %p54 = por %p52, %p53
      %p55 = scmp.ne.s32.totalorder %s46, %s47
      %p56 = scmp.eq.s32.totalorder %s15, 0
      %p57 = por %p55, %p56
      %p58 = scmp.ne.s32.totalorder %s46, %s47
      %p59 = scmp.eq.s32.totalorder %s16, 1
      %p60 = por %p58, %p59
      %p62 = scmp.ne.s32.totalorder %s47, %s61
      %p63 = scmp.eq.s32.totalorder %s16, 0
      %p64 = por %p62, %p63
      %s66 = sadd.s32 %s65, 1
      %p69 = scmp.eq.s32.totalorder %s10, 1
      %p70 = scmp.ne.s32.totalorder %s65, %s67
      %p71 = scmp.eq.s32.totalorder %s10, 0
      %p72 = por %p70, %p71
      %p73 = scmp.ne.s32.totalorder %s65, %s67
      %p74 = scmp.eq.s32.totalorder %s15, 1
      %p75 = por %p73, %p74
      %p76 = scmp.ne.s32.totalorder %s67, %s68
      %p77 = scmp.eq.s32.totalorder %s15, 0
      %p78 = por %p76, %p77
      %p79 = scmp.ne.s32.totalorder %s67, %s68
      %p80 = scmp.eq.s32.totalorder %s16, 1
      %p81 = por %p79, %p80
      %p83 = scmp.ne.s32.totalorder %s68, %s82
      %p84 = scmp.eq.s32.totalorder %s16, 0
      %p85 = por %p83, %p84
      %s87 = sadd.s32 %s86, 1
      %p90 = scmp.eq.s32.totalorder %s10, 1
      %p91 = scmp.ne.s32.totalorder %s86, %s88
      %p92 = scmp.eq.s32.totalorder %s10, 0
      %p93 = por %p91, %p92
      %p94 = scmp.ne.s32.totalorder %s86, %s88
      %p95 = scmp.eq.s32.totalorder %s15, 1
      %p96 = por %p94, %p95
      %p97 = scmp.ne.s32.totalorder %s88, %s89
      %p98 = scmp.eq.s32.totalorder %s15, 0
      %p99 = por %p97, %p98
      %p100 = scmp.ne.s32.totalorder %s88, %s89
      %p101 = scmp.eq.s32.totalorder %s16, 1
      %p102 = por %p100, %p101
      %p104 = scmp.ne.s32.totalorder %s89, %s103
      %p105 = scmp.eq.s32.totalorder %s16, 0
      %p106 = por %p104, %p105
      %s107 = ssub.s32 %s10, %s17
      %p108 = scmp.eq.s32.totalorder %s107, 0
      %s110 = sadd.s32 %s109, 1
      %s111 = scalar_select %p108, %s109, %s110
      %p114 = pneg %p108
      %p115 = scmp.eq.s32.totalorder %s10, 1
      %p116 = por %p114, %p115
      %p117 = scmp.ne.s32.totalorder %s109, %s112
      %p118 = scmp.eq.s32.totalorder %s10, 0
      %p119 = por %p117, %p118
      %p120 = scmp.ne.s32.totalorder %s109, %s112
      %p121 = scmp.eq.s32.totalorder %s15, 1
      %p122 = por %p120, %p121
      %p123 = scmp.ne.s32.totalorder %s112, %s113
      %p124 = scmp.eq.s32.totalorder %s15, 0
      %p125 = por %p123, %p124
      %p126 = scmp.ne.s32.totalorder %s112, %s113
      %p127 = scmp.eq.s32.totalorder %s16, 1
      %p128 = por %p126, %p127
      %p130 = scmp.ne.s32.totalorder %s113, %s129
      %p131 = scmp.eq.s32.totalorder %s16, 0
      %p132 = por %p130, %p131
      %p133 = scmp.le.s32.totalorder 1, %s10
      %p134 = scmp.lt.s32.totalorder %s10, 3
      %p135 = pnand %p133, %p134
      %p136 = pneg %p135
      // Predicated region
      $region9: #{wide_resnet_forward.10} parent=5 // pred_check
        _
      $region10: #{wide_resnet_forward.10} parent=5 // pred_check_branch
        %138 = sbr.rel (%p135) target = $region12
      $region11: #{wide_resnet_forward.10} parent=5 // pred_region
        %s139 = ssub.s32 %s10, 1
        // Predicated region
        $region13: #{wide_resnet_forward.10} parent=11 // pred_check
          %p140 = pneg %p57
        $region14: #{wide_resnet_forward.10} parent=11 // pred_check_branch
          %142 = sbr.rel (%p140) target = $region16
        $region15: #{wide_resnet_forward.10} parent=11 // pred_region
          _
        $region16: #{wide_resnet_forward.10} parent=11 // pred_fallthru
          _
        // Predicated region
        $region17: #{wide_resnet_forward.10} parent=11 // pred_check
          %p143 = pneg %p78
        $region18: #{wide_resnet_forward.10} parent=11 // pred_check_branch
          %145 = sbr.rel (%p143) target = $region20
        $region19: #{wide_resnet_forward.10} parent=11 // pred_region
          _
        $region20: #{wide_resnet_forward.10} parent=11 // pred_fallthru
          _
        // Predicated region
        $region21: #{wide_resnet_forward.10} parent=11 // pred_check
          %p146 = pneg %p99
        $region22: #{wide_resnet_forward.10} parent=11 // pred_check_branch
          %148 = sbr.rel (%p146) target = $region24
        $region23: #{wide_resnet_forward.10} parent=11 // pred_region
          _
        $region24: #{wide_resnet_forward.10} parent=11 // pred_fallthru
          _
      $region12: #{wide_resnet_forward.10} parent=5 // pred_fallthru
        _
      %p149 = scmp.lt.s32.totalorder %s10, 2
      // Predicated region
      $region25: #{wide_resnet_forward.10} parent=5 // pred_check
        %p150 = pneg %p149
      $region26: #{wide_resnet_forward.10} parent=5 // pred_check_branch
        %152 = sbr.rel (%p150) target = $region28
      $region27: #{wide_resnet_forward.10} parent=5 // pred_region
        // Predicated region
        $region29: #{wide_resnet_forward.10} parent=27 // pred_check
          %p153 = pneg %p30
        $region30: #{wide_resnet_forward.10} parent=27 // pred_check_branch
          %155 = sbr.rel (%p153) target = $region32
        $region31: #{wide_resnet_forward.10} parent=27 // pred_region
          %s156 = sand.u32 %s20, 1
          %s157 = sand.u32 %s20, 1
          %s158 = smul.addr %s157, 144
          %s159 = scalar_lea.vmem [#allocation2], %s158
          %s160 = smul.u32 2, %s10
          %s161 = smul.addr %s160, 4
          %s162 = scalar_lea.vmem %s0, %s161
          // Predicated region
          $region33: #{wide_resnet_forward.10} parent=31 // pred_check
            _
          $region34: #{wide_resnet_forward.10} parent=31 // pred_check_branch
            %164 = sbr.rel (0) target = $region36
          $region35: #{wide_resnet_forward.10} parent=31 // pred_region
            // Predicated region
            $region37: #{wide_resnet_forward.10} parent=35 // pred_check
              _
            $region38: #{wide_resnet_forward.10} parent=35 // pred_check_branch
              %166 = sbr.rel (0) target = $region40
            $region39: #{wide_resnet_forward.10} parent=35 // pred_region
              // Predicated region
              $region52: #{wide_resnet_forward.10} parent=39 // pred_check
                _
              $region53: #{wide_resnet_forward.10} parent=39 // pred_check_branch
                %216 = sbr.rel (0) target = $region55
              $region54: #{wide_resnet_forward.10} parent=39 // pred_region
                loop: start=0, step=1, limit=1
                $region56: #{wide_resnet_forward.10} parent=54 // loop_pre_header
                  _
                $region57: #{wide_resnet_forward.10} parent=54 // loop_header
                  %s218 = sphi 0, %s222
                  %p219 = scmp.ge.s32.totalorder %s218, 1
                  %s223 = sphi %s162, %s162
                  %s224 = sphi %s159, %s159
                $region58: #{wide_resnet_forward.10} parent=54 // loop_header_branch
                  %221 = sbr.rel (%p219) target = $region62
                $region59: #{wide_resnet_forward.10} parent=54 // loop_body
                  %v225 = vld [vmem:[%s223] sm:$0xff]
                  %226 = vst [vmem:[%s224] sm:$0xff] %v225
                  %v227 = vld [vmem:[%s223 + $0x10] sm:$0xff]
                  %228 = vst [vmem:[%s224 + $0x8] sm:$0xff] %v227
                  %v229 = vld [vmem:[%s223 + $0x20] sm:$0xff]
                  %230 = vst [vmem:[%s224 + $0x10] sm:$0xff] %v229
                  %v231 = vld [vmem:[%s223 + $0x30] sm:$0xff]
                  %232 = vst [vmem:[%s224 + $0x18] sm:$0xff] %v231
                  %v233 = vld [vmem:[%s223 + $0x40] sm:$0xff]
                  %234 = vst [vmem:[%s224 + $0x20] sm:$0xff] %v233
                  %v235 = vld [vmem:[%s223 + $0x50] sm:$0xff]
                  %236 = vst [vmem:[%s224 + $0x28] sm:$0xff] %v235
                  %v237 = vld [vmem:[%s223 + $0x60] sm:$0xff]
                  %238 = vst [vmem:[%s224 + $0x30] sm:$0xff] %v237
                  %v239 = vld [vmem:[%s223 + $0x70] sm:$0xff]
                  %240 = vst [vmem:[%s224 + $0x38] sm:$0xff] %v239
                  %v241 = vld [vmem:[%s223 + $0x80] sm:$0xff]
                  %242 = vst [vmem:[%s224 + $0x40] sm:$0xff] %v241
                  %v243 = vld [vmem:[%s223 + $0x90] sm:$0xff]
                  %244 = vst [vmem:[%s224 + $0x48] sm:$0xff] %v243
                  %v245 = vld [vmem:[%s223 + $0xa0] sm:$0xff]
                  %246 = vst [vmem:[%s224 + $0x50] sm:$0xff] %v245
                  %v247 = vld [vmem:[%s223 + $0xb0] sm:$0xff]
                  %248 = vst [vmem:[%s224 + $0x58] sm:$0xff] %v247
                  %v249 = vld [vmem:[%s223 + $0xc0] sm:$0xff]
                  %250 = vst [vmem:[%s224 + $0x60] sm:$0xff] %v249
                  %v251 = vld [vmem:[%s223 + $0xd0] sm:$0xff]
                  %252 = vst [vmem:[%s224 + $0x68] sm:$0xff] %v251
                  %v253 = vld [vmem:[%s223 + $0xe0] sm:$0xff]
                  %254 = vst [vmem:[%s224 + $0x70] sm:$0xff] %v253
                  %v255 = vld [vmem:[%s223 + $0xf0] sm:$0xff]
                  %256 = vst [vmem:[%s224 + $0x78] sm:$0xff] %v255
                  %v257 = vld [vmem:[%s223 + $0x100] sm:$0xff]
                  %258 = vst [vmem:[%s224 + $0x80] sm:$0xff] %v257
                  %v259 = vld [vmem:[%s223 + $0x110] sm:$0xff]
                  %260 = vst [vmem:[%s224 + $0x88] sm:$0xff] %v259
                $region60: #{wide_resnet_forward.10} parent=54 // loop_footer
                  %s222 = sadd.s32 1, %s218
                $region61: #{wide_resnet_forward.10} parent=54 // loop_footer_branch
                  %217 = sbr.rel target = $region57
                $region62: #{wide_resnet_forward.10} parent=54 // loop_exit
                  _
              $region55: #{wide_resnet_forward.10} parent=39 // pred_fallthru
                _
              // Predicated region
              $region63: #{wide_resnet_forward.10} parent=39 // pred_check
                _
              $region64: #{wide_resnet_forward.10} parent=39 // pred_check_branch
                %262 = sbr.rel target = $region66
              $region65: #{wide_resnet_forward.10} parent=39 // pred_region
                _
              $region66: #{wide_resnet_forward.10} parent=39 // pred_fallthru
                _
            $region40: #{wide_resnet_forward.10} parent=35 // pred_fallthru
              _
            // Predicated region
            $region41: #{wide_resnet_forward.10} parent=35 // pred_check
              _
            $region42: #{wide_resnet_forward.10} parent=35 // pred_check_branch
              %168 = sbr.rel target = $region44
            $region43: #{wide_resnet_forward.10} parent=35 // pred_region
              %s170 = ssub.s32 256, 1
              loop: start=0, step=1, limit=1
              $region45: #{wide_resnet_forward.10} parent=43 // loop_pre_header
                _
              $region46: #{wide_resnet_forward.10} parent=43 // loop_header
                %s172 = sphi 0, %s176
                %p173 = scmp.ge.s32.totalorder %s172, 1
                %s177 = sphi %s162, %s162
                %s178 = sphi %s159, %s159
              $region47: #{wide_resnet_forward.10} parent=43 // loop_header_branch
                %175 = sbr.rel (%p173) target = $region51
              $region48: #{wide_resnet_forward.10} parent=43 // loop_body
                %v179 = vld [vmem:[%s177] sm:%s170]
                %180 = vst [vmem:[%s178] sm:%s170] %v179
                %v181 = vld [vmem:[%s177 + $0x10] sm:%s170]
                %182 = vst [vmem:[%s178 + $0x8] sm:%s170] %v181
                %v183 = vld [vmem:[%s177 + $0x20] sm:%s170]
                %184 = vst [vmem:[%s178 + $0x10] sm:%s170] %v183
                %v185 = vld [vmem:[%s177 + $0x30] sm:%s170]
                %186 = vst [vmem:[%s178 + $0x18] sm:%s170] %v185
                %v187 = vld [vmem:[%s177 + $0x40] sm:%s170]
                %188 = vst [vmem:[%s178 + $0x20] sm:%s170] %v187
                %v189 = vld [vmem:[%s177 + $0x50] sm:%s170]
                %190 = vst [vmem:[%s178 + $0x28] sm:%s170] %v189
                %v191 = vld [vmem:[%s177 + $0x60] sm:%s170]
                %192 = vst [vmem:[%s178 + $0x30] sm:%s170] %v191
                %v193 = vld [vmem:[%s177 + $0x70] sm:%s170]
                %194 = vst [vmem:[%s178 + $0x38] sm:%s170] %v193
                %v195 = vld [vmem:[%s177 + $0x80] sm:%s170]
                %196 = vst [vmem:[%s178 + $0x40] sm:%s170] %v195
                %v197 = vld [vmem:[%s177 + $0x90] sm:%s170]
                %198 = vst [vmem:[%s178 + $0x48] sm:%s170] %v197
                %v199 = vld [vmem:[%s177 + $0xa0] sm:%s170]
                %200 = vst [vmem:[%s178 + $0x50] sm:%s170] %v199
                %v201 = vld [vmem:[%s177 + $0xb0] sm:%s170]
                %202 = vst [vmem:[%s178 + $0x58] sm:%s170] %v201
                %v203 = vld [vmem:[%s177 + $0xc0] sm:%s170]
                %204 = vst [vmem:[%s178 + $0x60] sm:%s170] %v203
                %v205 = vld [vmem:[%s177 + $0xd0] sm:%s170]
                %206 = vst [vmem:[%s178 + $0x68] sm:%s170] %v205
                %v207 = vld [vmem:[%s177 + $0xe0] sm:%s170]
                %208 = vst [vmem:[%s178 + $0x70] sm:%s170] %v207
                %v209 = vld [vmem:[%s177 + $0xf0] sm:%s170]
                %210 = vst [vmem:[%s178 + $0x78] sm:%s170] %v209
                %v211 = vld [vmem:[%s177 + $0x100] sm:%s170]
                %212 = vst [vmem:[%s178 + $0x80] sm:%s170] %v211
                %v213 = vld [vmem:[%s177 + $0x110] sm:%s170]
                %214 = vst [vmem:[%s178 + $0x88] sm:%s170] %v213
              $region49: #{wide_resnet_forward.10} parent=43 // loop_footer
                %s176 = sadd.s32 1, %s172
              $region50: #{wide_resnet_forward.10} parent=43 // loop_footer_branch
                %171 = sbr.rel target = $region46
              $region51: #{wide_resnet_forward.10} parent=43 // loop_exit
                _
            $region44: #{wide_resnet_forward.10} parent=35 // pred_fallthru
              _
          $region36: #{wide_resnet_forward.10} parent=31 // pred_fallthru
            _
          %263 = vnop
        $region32: #{wide_resnet_forward.10} parent=27 // pred_fallthru
          _
      $region28: #{wide_resnet_forward.10} parent=5 // pred_fallthru
        _
      %p264 = scmp.le.s32.totalorder 1, %s10
      %p265 = scmp.lt.s32.totalorder %s10, 3
      %p266 = pnand %p264, %p265
      %p267 = pneg %p266
      // Predicated region
      $region67: #{wide_resnet_forward.10} parent=5 // pred_check
        _
      $region68: #{wide_resnet_forward.10} parent=5 // pred_check_branch
        %269 = sbr.rel (%p266) target = $region70
      $region69: #{wide_resnet_forward.10} parent=5 // pred_region
        %s270 = ssub.s32 %s10, 1
        %s271 = sand.u32 %s23, 1
        %s272 = sand.u32 %s23, 1
        %s273 = smul.addr %s272, 144
        %s274 = scalar_lea.vmem [#allocation2], %s273
        // Predicated region
        $region71: #{wide_resnet_forward.10} parent=69 // pred_check
          %p275 = pneg %p36
        $region72: #{wide_resnet_forward.10} parent=69 // pred_check_branch
          %277 = sbr.rel (%p275) target = $region74
        $region73: #{wide_resnet_forward.10} parent=69 // pred_region
          _
        $region74: #{wide_resnet_forward.10} parent=69 // pred_fallthru
          _
        %s278 = sand.u32 %s23, 1
        %s279 = sand.u32 %s23, 1
        %s280 = smul.addr %s279, 144
        %s281 = scalar_lea.vmem [#allocation2], %s280
        %p282 = pneg %p36
        %p283 = pneg %p33
        %p284 = pneg %p57
        %p285 = pneg %p54
        %p286 = pneg %p78
        %p287 = pneg %p75
        %p288 = pneg %p99
        %p289 = pneg %p96
        %p290 = pneg %p125
        %p291 = pneg %p122
        %s292 = sand.u32 %s112, 1
        %s293 = sand.u32 %s112, 1
        %s294 = smul.addr %s293, 32
        %s295 = scalar_lea.vmem [#allocation3], %s294
        %s296 = smul.u32 2, %s15
        %s297 = smul.u32 2, %s15
        %v299 = vld [vmem:[%s1] sm:$0xff]
        %v300 = vld [vmem:[%s1 + $0x8] sm:$0xff]
        %v301 = vld [vmem:[%s274] sm:$0xff]
        %v302 = vld [vmem:[%s274 + $0x8] sm:$0xff]
        %v303 = vld [vmem:[%s274 + $0x10] sm:$0xff]
        %v304 = vld [vmem:[%s274 + $0x18] sm:$0xff]
        %v305 = vld [vmem:[%s274 + $0x20] sm:$0xff]
        %v306 = vld [vmem:[%s274 + $0x28] sm:$0xff]
        %v307 = vld [vmem:[%s274 + $0x30] sm:$0xff]
        %v308 = vld [vmem:[%s274 + $0x38] sm:$0xff]
        %v309 = vld [vmem:[%s274 + $0x40] sm:$0xff]
        %v310 = vld [vmem:[%s274 + $0x48] sm:$0xff]
        %v311 = vld [vmem:[%s274 + $0x50] sm:$0xff]
        %v312 = vld [vmem:[%s274 + $0x58] sm:$0xff]
        %v313 = vld [vmem:[%s274 + $0x60] sm:$0xff]
        %v314 = vld [vmem:[%s274 + $0x68] sm:$0xff]
        %v315 = vld [vmem:[%s274 + $0x70] sm:$0xff]
        %v316 = vld [vmem:[%s274 + $0x78] sm:$0xff]
        %v317 = vld [vmem:[%s274 + $0x80] sm:$0xff]
        %v318 = vld [vmem:[%s274 + $0x88] sm:$0xff]
        %v321 = vunpack.c.l.b16 %v299
        %v322 = vunpack.c.h.b16 %v299
        %v323 = vunpack.c.l.b16 %v300
        %v324 = vunpack.c.h.b16 %v300
        %v325 = vpack.c.b16 %v323, %v321
        %v326 = vpack.c.b16 %v324, %v322
        %v346 = vunpack.c.l.b16 %v301
        %v347 = vunpack.c.h.b16 %v301
        %v348 = vunpack.c.l.b16 %v302
        %v349 = vunpack.c.h.b16 %v302
        %v350 = vunpack.c.l.b16 %v303
        %v351 = vunpack.c.h.b16 %v303
        %v352 = vunpack.c.l.b16 %v304
        %v353 = vunpack.c.h.b16 %v304
        %v354 = vunpack.c.l.b16 %v305
        %v355 = vunpack.c.h.b16 %v305
        %v356 = vunpack.c.l.b16 %v306
        %v357 = vunpack.c.h.b16 %v306
        %v358 = vunpack.c.l.b16 %v307
        %v359 = vunpack.c.h.b16 %v307
        %v360 = vunpack.c.l.b16 %v308
        %v361 = vunpack.c.h.b16 %v308
        %v362 = vunpack.c.l.b16 %v309
        %v363 = vunpack.c.h.b16 %v309
        %v364 = vunpack.c.l.b16 %v310
        %v365 = vunpack.c.h.b16 %v310
        %v366 = vunpack.c.l.b16 %v311
        %v367 = vunpack.c.h.b16 %v311
        %v368 = vunpack.c.l.b16 %v312
        %v369 = vunpack.c.h.b16 %v312
        %v370 = vunpack.c.l.b16 %v313
        %v371 = vunpack.c.h.b16 %v313
        %v372 = vunpack.c.l.b16 %v314
        %v373 = vunpack.c.h.b16 %v314
        %v374 = vunpack.c.l.b16 %v315
        %v375 = vunpack.c.h.b16 %v315
        %v376 = vunpack.c.l.b16 %v316
        %v377 = vunpack.c.h.b16 %v316
        %v378 = vunpack.c.l.b16 %v317
        %v379 = vunpack.c.h.b16 %v317
        %v380 = vunpack.c.l.b16 %v318
        %v381 = vunpack.c.h.b16 %v318
        %v382 = vpack.c.b16 %v348, %v346
        %v383 = vpack.c.b16 %v349, %v347
        %v384 = vpack.c.b16 %v352, %v350
        %v385 = vpack.c.b16 %v353, %v351
        %v386 = vpack.c.b16 %v356, %v354
        %v387 = vpack.c.b16 %v357, %v355
        %v388 = vpack.c.b16 %v360, %v358
        %v389 = vpack.c.b16 %v361, %v359
        %v390 = vpack.c.b16 %v364, %v362
        %v391 = vpack.c.b16 %v365, %v363
        %v392 = vpack.c.b16 %v368, %v366
        %v393 = vpack.c.b16 %v369, %v367
        %v394 = vpack.c.b16 %v372, %v370
        %v395 = vpack.c.b16 %v373, %v371
        %v396 = vpack.c.b16 %v376, %v374
        %v397 = vpack.c.b16 %v377, %v375
        %v398 = vpack.c.b16 %v380, %v378
        %v399 = vpack.c.b16 %v381, %v379
        %vm418 = vcmask 130048
        %v420 = vsel %vm418, %v326, 0
        %422 = vmatpush.bf16.msra.mxu0 %v396
        %423 = vmatpush.bf16.msra.mxu0 %v394
        %424 = vmatpush.bf16.msra.mxu0 %v392
        %425 = vmatpush.bf16.msra.mxu0 %v390
        %426 = vmatpush.bf16.msra.mxu0 %v388
        %427 = vmatpush.bf16.msra.mxu0 %v386
        %428 = vmatpush.bf16.msra.mxu0 %v384
        %429 = vmatpush.bf16.msra.mxu0 %v382
        %430 = vmatmul.bf16.gmra.mxu0 %v325
        %v431 = vpop.f32.mrf.mxu0
        %v432 = vadd.f32 0.0, %v431
        %v433 = vpop.f32.mrf.mxu0
        %v434 = vadd.f32 0.0, %v433
        %435 = vdwg.mxu0
        %436 = vmatpush.bf16.msra.mxu0 0
        %437 = vmatpush.bf16.msra.mxu0 0
        %438 = vmatpush.bf16.msra.mxu0 0
        %439 = vmatpush.bf16.msra.mxu0 0
        %440 = vmatpush.bf16.msra.mxu0 0
        %441 = vmatpush.bf16.msra.mxu0 0
        %442 = vmatpush.bf16.msra.mxu0 0
        %443 = vmatpush.bf16.msra.mxu0 %v398
        %444 = vmatmul.bf16.gmra.mxu0 %v420
        %v445 = vpop.f32.mrf.mxu0
        %v446 = vadd.f32 %v432, %v445
        %v447 = vpop.f32.mrf.mxu0
        %v448 = vadd.f32 %v434, %v447
        %449 = vdwg.mxu0
        %450 = vmatpush.bf16.msra.mxu0 %v397
        %451 = vmatpush.bf16.msra.mxu0 %v395
        %452 = vmatpush.bf16.msra.mxu0 %v393
        %453 = vmatpush.bf16.msra.mxu0 %v391
        %454 = vmatpush.bf16.msra.mxu0 %v389
        %455 = vmatpush.bf16.msra.mxu0 %v387
        %456 = vmatpush.bf16.msra.mxu0 %v385
        %457 = vmatpush.bf16.msra.mxu0 %v383
        %458 = vmatmul.bf16.gmra.mxu0 %v325
        %v459 = vpop.f32.mrf.mxu0
        %v460 = vadd.f32 0.0, %v459
        %v461 = vpop.f32.mrf.mxu0
        %v462 = vadd.f32 0.0, %v461
        %463 = vdwg.mxu0
        %464 = vmatpush.bf16.msra.mxu0 0
        %465 = vmatpush.bf16.msra.mxu0 0
        %466 = vmatpush.bf16.msra.mxu0 0
        %467 = vmatpush.bf16.msra.mxu0 0
        %468 = vmatpush.bf16.msra.mxu0 0
        %469 = vmatpush.bf16.msra.mxu0 0
        %470 = vmatpush.bf16.msra.mxu0 0
        %471 = vmatpush.bf16.msra.mxu0 %v399
        %472 = vmatmul.bf16.gmra.mxu0 %v420
        %v473 = vpop.f32.mrf.mxu0
        %v474 = vadd.f32 %v460, %v473
        %v475 = vpop.f32.mrf.mxu0
        %v476 = vadd.f32 %v462, %v475
        %477 = vdwg.mxu0
        %v478 = vld [vmem:[%s2] sm:$0xff]
        %v479 = vld [vmem:[%s2 + $0x8] sm:$0xff]
        %481 = vset.pattern.permute.xlu0 0
        %482 = vperm.xlu0 %481, %v478
        %v483 = vpop.permute.xlu0 %482
        %486 = vset.pattern.permute.xlu0 0
        %487 = vperm.xlu0 %486, %v479
        %v488 = vpop.permute.xlu0 %487
        %v490 = vmul.f32 %v446, %v483
        %v491 = vmul.f32 %v474, %v483
        %v492 = vmul.f32 %v448, %v488
        %v493 = vmul.f32 %v476, %v488
        %v494 = vld [vmem:[%s3] sm:$0xff]
        %v495 = vld [vmem:[%s3 + $0x8] sm:$0xff]
        %497 = vset.pattern.permute.xlu0 0
        %498 = vperm.xlu0 %497, %v494
        %v499 = vpop.permute.xlu0 %498
        %502 = vset.pattern.permute.xlu0 0
        %503 = vperm.xlu0 %502, %v495
        %v504 = vpop.permute.xlu0 %503
        %v506 = vadd.f32 %v490, %v499
        %v507 = vadd.f32 %v491, %v499
        %v508 = vadd.f32 %v492, %v504
        %v509 = vadd.f32 %v493, %v504
        %v510 = vmax.f32 %v506, 0.0
        %v511 = vmax.f32 %v507, 0.0
        %v512 = vmax.f32 %v508, 0.0
        %v513 = vmax.f32 %v509, 0.0
        %514 = vst [vmem:[%s295] sm:$0xff] %v510
        %515 = vst [vmem:[%s295 + $0x8] sm:$0xff] %v511
        %516 = vst [vmem:[%s295 + $0x10] sm:$0xff] %v512
        %517 = vst [vmem:[%s295 + $0x18] sm:$0xff] %v513
        %s518 = sand.u32 %s112, 1
        %s519 = sand.u32 %s112, 1
        %s520 = smul.addr %s519, 32
        %s521 = scalar_lea.vmem [#allocation3], %s520
        // Predicated region
        $region75: #{wide_resnet_forward.10} parent=69 // pred_check
          %p522 = pneg %p122
        $region76: #{wide_resnet_forward.10} parent=69 // pred_check_branch
          %524 = sbr.rel (%p522) target = $region78
        $region77: #{wide_resnet_forward.10} parent=69 // pred_region
          %s525 = smul.u32 2, %s15
          %s526 = smul.addr %s525, 8
          %s527 = scalar_lea.vmem %s4, %s526
          // Predicated region
          $region79: #{wide_resnet_forward.10} parent=77 // pred_check
            _
          $region80: #{wide_resnet_forward.10} parent=77 // pred_check_branch
            %529 = sbr.rel (0) target = $region82
          $region81: #{wide_resnet_forward.10} parent=77 // pred_region
            // Predicated region
            $region83: #{wide_resnet_forward.10} parent=81 // pred_check
              _
            $region84: #{wide_resnet_forward.10} parent=81 // pred_check_branch
              %531 = sbr.rel (0) target = $region86
            $region85: #{wide_resnet_forward.10} parent=81 // pred_region
              loop: start=0, step=1, limit=1
              $region87: #{wide_resnet_forward.10} parent=85 // loop_pre_header
                _
              $region88: #{wide_resnet_forward.10} parent=85 // loop_header
                %s533 = sphi 0, %s537
                %p534 = scmp.ge.s32.totalorder %s533, 1
                %s538 = sphi %s521, %s521
                %s539 = sphi %s527, %s527
              $region89: #{wide_resnet_forward.10} parent=85 // loop_header_branch
                %536 = sbr.rel (%p534) target = $region93
              $region90: #{wide_resnet_forward.10} parent=85 // loop_body
                %v540 = vld [vmem:[%s538] sm:$0xff]
                %541 = vst [vmem:[%s539] sm:$0xff] %v540
                %v542 = vld [vmem:[%s538 + $0x8] sm:$0xff]
                %543 = vst [vmem:[%s539 + $0x8] sm:$0xff] %v542
                %v544 = vld [vmem:[%s538 + $0x10] sm:$0xff]
                %545 = vst [vmem:[%s539 + $0x20] sm:$0xff] %v544
                %v546 = vld [vmem:[%s538 + $0x18] sm:$0xff]
                %547 = vst [vmem:[%s539 + $0x28] sm:$0xff] %v546
              $region91: #{wide_resnet_forward.10} parent=85 // loop_footer
                %s537 = sadd.s32 1, %s533
              $region92: #{wide_resnet_forward.10} parent=85 // loop_footer_branch
                %532 = sbr.rel target = $region88
              $region93: #{wide_resnet_forward.10} parent=85 // loop_exit
                _
            $region86: #{wide_resnet_forward.10} parent=81 // pred_fallthru
              _
            // Predicated region
            $region94: #{wide_resnet_forward.10} parent=81 // pred_check
              _
            $region95: #{wide_resnet_forward.10} parent=81 // pred_check_branch
              %549 = sbr.rel target = $region97
            $region96: #{wide_resnet_forward.10} parent=81 // pred_region
              _
            $region97: #{wide_resnet_forward.10} parent=81 // pred_fallthru
              _
          $region82: #{wide_resnet_forward.10} parent=77 // pred_fallthru
            _
          %550 = vnop
        $region78: #{wide_resnet_forward.10} parent=69 // pred_fallthru
          _
      $region70: #{wide_resnet_forward.10} parent=5 // pred_fallthru
        _
      %p551 = scmp.le.s32.totalorder 2, %s10
      // Predicated region
      $region98: #{wide_resnet_forward.10} parent=5 // pred_check
        %p552 = pneg %p551
      $region99: #{wide_resnet_forward.10} parent=5 // pred_check_branch
        %554 = sbr.rel (%p552) target = $region101
      $region100: #{wide_resnet_forward.10} parent=5 // pred_region
        %s555 = ssub.s32 %s10, 2
        // Predicated region
        $region102: #{wide_resnet_forward.10} parent=100 // pred_check
          %p556 = pneg %p128
        $region103: #{wide_resnet_forward.10} parent=100 // pred_check_branch
          %558 = sbr.rel (%p556) target = $region105
        $region104: #{wide_resnet_forward.10} parent=100 // pred_region
          %s559 = sand.u32 %s113, 1
          %s560 = sand.u32 %s113, 1
          %s561 = smul.addr %s560, 32
          %s562 = scalar_lea.vmem [#allocation3], %s561
        $region105: #{wide_resnet_forward.10} parent=100 // pred_fallthru
          _
      $region101: #{wide_resnet_forward.10} parent=5 // pred_fallthru
        _
    $region6: #{wide_resnet_forward.10} parent=1 // loop_footer
      %s14 = sadd.s32 1, %s10
    $region7: #{wide_resnet_forward.10} parent=1 // loop_footer_branch
      %9 = sbr.rel target = $region3
    $region8: #{wide_resnet_forward.10} parent=1 // loop_exit
      _

// kernel: wide_resnet_forward.12
$region0: #{wide_resnet_forward.12}
  #allocation0 [shape = 'u32[]', space=smem, size = 0x4, offset = 0x4, fixed_abs, tag = 'smem constant byte address 0x4 - core index']
  #allocation1 [shape = 'u32[72,128]{1,0:T(1,128)}', space=vmem, size = 0x9000, scoped, tag = 'internal scratch']
  %s0 = inlined_call_operand.vmem [shape: bf16[144,128], index: 0, kind: input, shape index: {}]
  %s1 = inlined_call_operand.vmem [shape: bf16[26,144], index: 1, kind: input, shape index: {}]
  %s2 = inlined_call_operand.vmem [shape: f32[26,1], index: 2, kind: input, shape index: {}]
  %s3 = inlined_call_operand.vmem [shape: f32[26,1], index: 3, kind: input, shape index: {}]
  %s4 = inlined_call_operand.vmem [shape: bf16[46,16], index: 4, kind: input, shape index: {}]
  %s5 = inlined_call_operand.vmem [shape: f32[26,128], index: 5, kind: output, shape index: {0}]
  %s6 = inlined_call_operand.vmem [shape: f32[46,128], index: 6, kind: output, shape index: {1}]
  %7 = xla_tuple %s5, %s6
  %s8 = sld [smem:[#allocation0]]
  $region38: #{wide_resnet_forward.12} parent=0
    _
  %s10 = ssub.s32 1, %s8
  %s11 = scalar_select 0, %s10, %s8
  // Predicated region
  $region2: #{wide_resnet_forward.12} parent=0 // pred_check
    _
  $region3: #{wide_resnet_forward.12} parent=0 // pred_check_branch
    %13 = sbr.rel (0) target = $region5
  $region4: #{wide_resnet_forward.12} parent=0 // pred_region
    _
  $region5: #{wide_resnet_forward.12} parent=0 // pred_fallthru
    _
  // Predicated region
  $region6: #{wide_resnet_forward.12} parent=0 // pred_check
    _
  $region7: #{wide_resnet_forward.12} parent=0 // pred_check_branch
    %15 = sbr.rel (0) target = $region9
  $region8: #{wide_resnet_forward.12} parent=0 // pred_region
    _
  $region9: #{wide_resnet_forward.12} parent=0 // pred_fallthru
    _
  // Predicated region
  $region10: #{wide_resnet_forward.12} parent=0 // pred_check
    _
  $region11: #{wide_resnet_forward.12} parent=0 // pred_check_branch
    %17 = sbr.rel (0) target = $region13
  $region12: #{wide_resnet_forward.12} parent=0 // pred_region
    _
  $region13: #{wide_resnet_forward.12} parent=0 // pred_fallthru
    _
  // Predicated region
  $region14: #{wide_resnet_forward.12} parent=0 // pred_check
    _
  $region15: #{wide_resnet_forward.12} parent=0 // pred_check_branch
    %19 = sbr.rel (0) target = $region17
  $region16: #{wide_resnet_forward.12} parent=0 // pred_region
    _
  $region17: #{wide_resnet_forward.12} parent=0 // pred_fallthru
    _
  // Predicated region
  $region18: #{wide_resnet_forward.12} parent=0 // pred_check
    _
  $region19: #{wide_resnet_forward.12} parent=0 // pred_check_branch
    %21 = sbr.rel (0) target = $region21
  $region20: #{wide_resnet_forward.12} parent=0 // pred_region
    _
  $region21: #{wide_resnet_forward.12} parent=0 // pred_fallthru
    _
  %v23 = vld [vmem:[%s0] sm:$0xf]
  %v24 = vld [vmem:[%s0 + $0x4] sm:$0xf]
  %v25 = vld [vmem:[%s0 + $0x8] sm:$0xf]
  %v26 = vld [vmem:[%s0 + $0xc] sm:$0xf]
  %v27 = vld [vmem:[%s0 + $0x10] sm:$0xf]
  %v28 = vld [vmem:[%s0 + $0x14] sm:$0xf]
  %v29 = vld [vmem:[%s0 + $0x18] sm:$0xf]
  %v30 = vld [vmem:[%s0 + $0x1c] sm:$0xf]
  %v31 = vld [vmem:[%s0 + $0x20] sm:$0xf]
  %v32 = vld [vmem:[%s0 + $0x24] sm:$0xf]
  %v33 = vld [vmem:[%s0 + $0x28] sm:$0xf]
  %v34 = vld [vmem:[%s0 + $0x2c] sm:$0xf]
  %v35 = vld [vmem:[%s0 + $0x30] sm:$0xf]
  %v36 = vld [vmem:[%s0 + $0x34] sm:$0xf]
  %v37 = vld [vmem:[%s0 + $0x38] sm:$0xf]
  %v38 = vld [vmem:[%s0 + $0x3c] sm:$0xf]
  %v39 = vld [vmem:[%s0 + $0x40] sm:$0xf]
  %v40 = vld [vmem:[%s0 + $0x44] sm:$0xf]
  %v41 = vld [vmem:[%s1] sm:$0xff]
  %v42 = vld [vmem:[%s1 + $0x8] sm:$0xff]
  %v43 = vld [vmem:[%s1 + $0x10] sm:$0xff]
  %v44 = vld [vmem:[%s1 + $0x18] sm:$0x11]
  %v49 = vunpack.c.l.b16 %v41
  %v50 = vunpack.c.h.b16 %v41
  %v51 = vunpack.c.l.b16 %v42
  %v52 = vunpack.c.h.b16 %v42
  %v53 = vunpack.c.l.b16 %v43
  %v54 = vunpack.c.h.b16 %v43
  %v55 = vunpack.c.l.b16 %v44
  %v56 = vunpack.c.h.b16 %v44
  %v57 = vpack.c.b16 %v51, %v49
  %v58 = vpack.c.b16 %v52, %v50
  %v59 = vpack.c.b16 %v55, %v53
  %v60 = vpack.c.b16 %v56, %v54
  %v81 = vunpack.c.l.b16 %v23
  %v82 = vunpack.c.l.b16 %v24
  %v83 = vunpack.c.l.b16 %v25
  %v84 = vunpack.c.l.b16 %v26
  %v85 = vunpack.c.l.b16 %v27
  %v86 = vunpack.c.l.b16 %v28
  %v87 = vunpack.c.l.b16 %v29
  %v88 = vunpack.c.l.b16 %v30
  %v89 = vunpack.c.l.b16 %v31
  %v90 = vunpack.c.l.b16 %v32
  %v91 = vunpack.c.l.b16 %v33
  %v92 = vunpack.c.l.b16 %v34
  %v93 = vunpack.c.l.b16 %v35
  %v94 = vunpack.c.l.b16 %v36
  %v95 = vunpack.c.l.b16 %v37
  %v96 = vunpack.c.l.b16 %v38
  %v97 = vunpack.c.l.b16 %v39
  %v98 = vunpack.c.l.b16 %v40
  %v99 = vpack.c.b16 %v82, %v81
  %v100 = vpack.c.b16 %v84, %v83
  %v101 = vpack.c.b16 %v86, %v85
  %v102 = vpack.c.b16 %v88, %v87
  %v103 = vpack.c.b16 %v90, %v89
  %v104 = vpack.c.b16 %v92, %v91
  %v105 = vpack.c.b16 %v94, %v93
  %v106 = vpack.c.b16 %v96, %v95
  %v107 = vpack.c.b16 %v98, %v97
  %vm117 = vcmask 130048
  %v119 = vsel %vm117, %v58, 0
  %v122 = vsel %vm117, %v60, 0
  %124 = vmatpush.bf16.msra.mxu0 %v106
  %125 = vmatpush.bf16.msra.mxu0 %v105
  %126 = vmatpush.bf16.msra.mxu0 %v104
  %127 = vmatpush.bf16.msra.mxu0 %v103
  %128 = vmatpush.bf16.msra.mxu0 %v102
  %129 = vmatpush.bf16.msra.mxu0 %v101
  %130 = vmatpush.bf16.msra.mxu0 %v100
  %131 = vmatpush.bf16.msra.mxu0 %v99
  %132 = vmatmul.bf16.gmra.mxu0 %v57
  %v133 = vpop.f32.mrf.mxu0
  %v134 = vadd.f32 0.0, %v133
  %v135 = vpop.f32.mrf.mxu0
  %v136 = vadd.f32 0.0, %v135
  %137 = vmatmul.bf16.gmra.mxu0 %v59
  %v138 = vpop.f32.mrf.mxu0
  %v139 = vadd.f32 0.0, %v138
  %v140 = vpop.f32.mrf.mxu0
  %v141 = vadd.f32 0.0, %v140
  %142 = vdwg.mxu0
  %143 = vmatpush.bf16.msra.mxu0 0
  %144 = vmatpush.bf16.msra.mxu0 0
  %145 = vmatpush.bf16.msra.mxu0 0
  %146 = vmatpush.bf16.msra.mxu0 0
  %147 = vmatpush.bf16.msra.mxu0 0
  %148 = vmatpush.bf16.msra.mxu0 0
  %149 = vmatpush.bf16.msra.mxu0 0
  %150 = vmatpush.bf16.msra.mxu0 %v107
  %151 = vmatmul.bf16.gmra.mxu0 %v119
  %v152 = vpop.f32.mrf.mxu0
  %v153 = vadd.f32 %v134, %v152
  %v154 = vpop.f32.mrf.mxu0
  %v155 = vadd.f32 %v136, %v154
  %156 = vmatmul.bf16.gmra.mxu0 %v122
  %v157 = vpop.f32.mrf.mxu0
  %v158 = vadd.f32 %v139, %v157
  %v159 = vpop.f32.mrf.mxu0
  %v160 = vadd.f32 %v141, %v159
  %161 = vdwg.mxu0
  %v162 = vld [vmem:[%s2] sm:$0xff]
  %v163 = vld [vmem:[%s2 + $0x8] sm:$0xff]
  %v164 = vld [vmem:[%s2 + $0x10] sm:$0xff]
  %v165 = vld [vmem:[%s2 + $0x18] sm:$0x3]
  %167 = vset.pattern.permute.xlu0 0
  %168 = vperm.xlu0 %167, %v162
  %v169 = vpop.permute.xlu0 %168
  %172 = vset.pattern.permute.xlu0 0
  %173 = vperm.xlu0 %172, %v163
  %v174 = vpop.permute.xlu0 %173
  %177 = vset.pattern.permute.xlu0 0
  %178 = vperm.xlu0 %177, %v164
  %v179 = vpop.permute.xlu0 %178
  %182 = vset.pattern.permute.xlu0 0
  %183 = vperm.xlu0 %182, %v165
  %v184 = vpop.permute.xlu0 %183
  %v186 = vmul.f32 %v153, %v169
  %v187 = vmul.f32 %v155, %v174
  %v188 = vmul.f32 %v158, %v179
  %v189 = vmul.f32 %v160, %v184
  %v190 = vld [vmem:[%s3] sm:$0xff]
  %v191 = vld [vmem:[%s3 + $0x8] sm:$0xff]
  %v192 = vld [vmem:[%s3 + $0x10] sm:$0xff]
  %v193 = vld [vmem:[%s3 + $0x18] sm:$0x3]
  %195 = vset.pattern.permute.xlu0 0
  %196 = vperm.xlu0 %195, %v190
  %v197 = vpop.permute.xlu0 %196
  %200 = vset.pattern.permute.xlu0 0
  %201 = vperm.xlu0 %200, %v191
  %v202 = vpop.permute.xlu0 %201
  %205 = vset.pattern.permute.xlu0 0
  %206 = vperm.xlu0 %205, %v192
  %v207 = vpop.permute.xlu0 %206
  %210 = vset.pattern.permute.xlu0 0
  %211 = vperm.xlu0 %210, %v193
  %v212 = vpop.permute.xlu0 %211
  %v214 = vadd.f32 %v186, %v197
  %v215 = vadd.f32 %v187, %v202
  %v216 = vadd.f32 %v188, %v207
  %v217 = vadd.f32 %v189, %v212
  %v218 = vmax.f32 %v214, 0.0
  %v219 = vmax.f32 %v215, 0.0
  %v220 = vmax.f32 %v216, 0.0
  %v221 = vmax.f32 %v217, 0.0
  %222 = vst [vmem:[%s5] sm:$0xff] %v218
  %223 = vst [vmem:[%s5 + $0x8] sm:$0xff] %v219
  %224 = vst [vmem:[%s5 + $0x10] sm:$0xff] %v220
  %225 = vst [vmem:[%s5 + $0x18] sm:$0x3] %v221
  %v226 = vld [vmem:[%s4] sm:$0xf]
  %v227 = vld [vmem:[%s4 + $0x4] sm:$0xf]
  %v228 = vld [vmem:[%s4 + $0x8] sm:$0xf]
  %v229 = vld [vmem:[%s4 + $0xc] sm:$0xf]
  %v230 = vld [vmem:[%s4 + $0x10] sm:$0xf]
  %v231 = vld [vmem:[%s4 + $0x14] sm:$0x7]
  %v238 = vunpack.c.l.b16 %v226
  %v239 = vunpack.c.l.b16 %v227
  %v240 = vunpack.c.l.b16 %v228
  %v241 = vunpack.c.l.b16 %v229
  %v242 = vunpack.c.l.b16 %v230
  %v243 = vunpack.c.l.b16 %v231
  %v244 = vpack.c.b16 %v239, %v238
  %v245 = vpack.c.b16 %v241, %v240
  %v246 = vpack.c.b16 %v243, %v242
  %v248 = vsel %vm117, %v244, 0
  %v251 = vsel %vm117, %v245, 0
  %v254 = vsel %vm117, %v246, 0
  %256 = vmatpush.bf16.msra.mxu0 0
  %257 = vmatpush.bf16.msra.mxu0 0
  %258 = vmatpush.bf16.msra.mxu0 0
  %259 = vmatpush.bf16.msra.mxu0 0
  %260 = vmatpush.bf16.msra.mxu0 0
  %261 = vmatpush.bf16.msra.mxu0 0
  %262 = vmatpush.bf16.msra.mxu0 0
  %263 = vmatpush.bf16.msra.mxu0 %v103
  %264 = vmatmul.bf16.gmra.mxu0 %v248
  %v265 = vpop.f32.mrf.mxu0
  %v266 = vadd.f32 0.0, %v265
  %v267 = vpop.f32.mrf.mxu0
  %v268 = vadd.f32 0.0, %v267
  %269 = vmatmul.bf16.gmra.mxu0 %v251
  %v270 = vpop.f32.mrf.mxu0
  %v271 = vadd.f32 0.0, %v270
  %v272 = vpop.f32.mrf.mxu0
  %v273 = vadd.f32 0.0, %v272
  %274 = vmatmul.bf16.gmra.mxu0 %v254
  %v275 = vpop.f32.mrf.mxu0
  %v276 = vadd.f32 0.0, %v275
  %v277 = vpop.f32.mrf.mxu0
  %v278 = vadd.f32 0.0, %v277
  %279 = vdwg.mxu0
  %280 = vst [vmem:[%s6] sm:$0xff] %v266
  %281 = vst [vmem:[%s6 + $0x8] sm:$0xff] %v268
  %282 = vst [vmem:[%s6 + $0x10] sm:$0xff] %v271
  %283 = vst [vmem:[%s6 + $0x18] sm:$0xff] %v273
  %284 = vst [vmem:[%s6 + $0x20] sm:$0xff] %v276
  %285 = vst [vmem:[%s6 + $0x28] sm:$0x3f] %v278
  // Predicated region
  $region22: #{wide_resnet_forward.12} parent=0 // pred_check
    _
  $region23: #{wide_resnet_forward.12} parent=0 // pred_check_branch
    %287 = sbr.rel (0) target = $region25
  $region24: #{wide_resnet_forward.12} parent=0 // pred_region
    _
  $region25: #{wide_resnet_forward.12} parent=0 // pred_fallthru
    _
  // Predicated region
  $region26: #{wide_resnet_forward.12} parent=0 // pred_check
    _
  $region27: #{wide_resnet_forward.12} parent=0 // pred_check_branch
    %289 = sbr.rel (0) target = $region29
  $region28: #{wide_resnet_forward.12} parent=0 // pred_region
    _
  $region29: #{wide_resnet_forward.12} parent=0 // pred_fallthru
    _
  // Predicated region
  $region30: #{wide_resnet_forward.12} parent=0 // pred_check
    _
  $region31: #{wide_resnet_forward.12} parent=0 // pred_check_branch
    %291 = sbr.rel (0) target = $region33
  $region32: #{wide_resnet_forward.12} parent=0 // pred_region
    _
  $region33: #{wide_resnet_forward.12} parent=0 // pred_fallthru
    _
  // Predicated region
  $region34: #{wide_resnet_forward.12} parent=0 // pred_check
    _
  $region35: #{wide_resnet_forward.12} parent=0 // pred_check_branch
    %293 = sbr.rel (0) target = $region37
  $region36: #{wide_resnet_forward.12} parent=0 // pred_region
    _
  $region37: #{wide_resnet_forward.12} parent=0 // pred_fallthru
    _

// kernel: wide_resnet_forward.13
$region0: #{wide_resnet_forward.13}
  #allocation0 [shape = 'u32[]', space=smem, size = 0x4, offset = 0x4, fixed_abs, tag = 'smem constant byte address 0x4 - core index']
  #allocation1 [shape = 'u32[72,128]{1,0:T(1,128)}', space=vmem, size = 0x9000, scoped, tag = 'internal scratch']
  %s0 = inlined_call_operand.vmem [shape: bf16[2,64,20], index: 0, kind: input, shape index: {}]
  %s1 = inlined_call_operand.vmem [shape: bf16[2,64,20], index: 1, kind: input, shape index: {}]
  %s2 = inlined_call_operand.vmem [shape: bf16[2,64,6], index: 2, kind: input, shape index: {}]
  %s3 = inlined_call_operand.vmem [shape: f32[2,64,64], index: 3, kind: input, shape index: {}]
  %s4 = inlined_call_operand.vmem [shape: bf16[6,6], index: 4, kind: input, shape index: {}]
  %s5 = inlined_call_operand.vmem [shape: f32[1,6], index: 5, kind: input, shape index: {}]
  %s6 = inlined_call_operand.vmem [shape: f32[1,6], index: 6, kind: input, shape index: {}]
  %s7 = inlined_call_operand.vmem [shape: f32[128,6], index: 7, kind: output, shape index: {}]
  %s8 = sld [smem:[#allocation0]]
  $region38: #{wide_resnet_forward.13} parent=0
    _
  %s10 = ssub.s32 1, %s8
  %s11 = scalar_select 0, %s10, %s8
  // Predicated region
  $region2: #{wide_resnet_forward.13} parent=0 // pred_check
    _
  $region3: #{wide_resnet_forward.13} parent=0 // pred_check_branch
    %13 = sbr.rel (0) target = $region5
  $region4: #{wide_resnet_forward.13} parent=0 // pred_region
    _
  $region5: #{wide_resnet_forward.13} parent=0 // pred_fallthru
    _
  // Predicated region
  $region6: #{wide_resnet_forward.13} parent=0 // pred_check
    _
  $region7: #{wide_resnet_forward.13} parent=0 // pred_check_branch
    %15 = sbr.rel (0) target = $region9
  $region8: #{wide_resnet_forward.13} parent=0 // pred_region
    _
  $region9: #{wide_resnet_forward.13} parent=0 // pred_fallthru
    _
  // Predicated region
  $region10: #{wide_resnet_forward.13} parent=0 // pred_check
    _
  $region11: #{wide_resnet_forward.13} parent=0 // pred_check_branch
    %17 = sbr.rel (0) target = $region13
  $region12: #{wide_resnet_forward.13} parent=0 // pred_region
    _
  $region13: #{wide_resnet_forward.13} parent=0 // pred_fallthru
    _
  // Predicated region
  $region14: #{wide_resnet_forward.13} parent=0 // pred_check
    _
  $region15: #{wide_resnet_forward.13} parent=0 // pred_check_branch
    %19 = sbr.rel (0) target = $region17
  $region16: #{wide_resnet_forward.13} parent=0 // pred_region
    _
  $region17: #{wide_resnet_forward.13} parent=0 // pred_fallthru
    _
  // Predicated region
  $region18: #{wide_resnet_forward.13} parent=0 // pred_check
    _
  $region19: #{wide_resnet_forward.13} parent=0 // pred_check_branch
    %21 = sbr.rel (0) target = $region21
  $region20: #{wide_resnet_forward.13} parent=0 // pred_region
    _
  $region21: #{wide_resnet_forward.13} parent=0 // pred_fallthru
    _
  // Predicated region
  $region22: #{wide_resnet_forward.13} parent=0 // pred_check
    _
  $region23: #{wide_resnet_forward.13} parent=0 // pred_check_branch
    %23 = sbr.rel (0) target = $region25
  $region24: #{wide_resnet_forward.13} parent=0 // pred_region
    _
  $region25: #{wide_resnet_forward.13} parent=0 // pred_fallthru
    _
  // Predicated region
  $region26: #{wide_resnet_forward.13} parent=0 // pred_check
    _
  $region27: #{wide_resnet_forward.13} parent=0 // pred_check_branch
    %25 = sbr.rel (0) target = $region29
  $region28: #{wide_resnet_forward.13} parent=0 // pred_region
    _
  $region29: #{wide_resnet_forward.13} parent=0 // pred_fallthru
    _
  %v27 = vld [vmem:[%s0] sm:$0xf]
  %v28 = vld [vmem:[%s0 + $0x4] sm:$0xf]
  %v29 = vld [vmem:[%s0 + $0x8] sm:$0xf]
  %v30 = vld [vmem:[%s0 + $0xc] sm:$0xf]
  %v31 = vld [vmem:[%s0 + $0x10] sm:$0xf]
  %v32 = vld [vmem:[%s0 + $0x14] sm:$0xf]
  %v33 = vld [vmem:[%s0 + $0x18] sm:$0xf]
  %v34 = vld [vmem:[%s0 + $0x1c] sm:$0xf]
  %v35 = vld [vmem:[%s0 + $0x20] sm:$0xf]
  %v36 = vld [vmem:[%s0 + $0x24] sm:$0xf]
  %v37 = vld [vmem:[%s0 + $0x28] sm:$0xf]
  %v38 = vld [vmem:[%s0 + $0x2c] sm:$0xf]
  %v39 = vld [vmem:[%s0 + $0x30] sm:$0xf]
  %v40 = vld [vmem:[%s0 + $0x34] sm:$0xf]
  %v41 = vld [vmem:[%s0 + $0x38] sm:$0xf]
  %v42 = vld [vmem:[%s0 + $0x3c] sm:$0xf]
  %v43 = vld [vmem:[%s1] sm:$0xf]
  %v44 = vld [vmem:[%s1 + $0x4] sm:$0xf]
  %v45 = vld [vmem:[%s1 + $0x8] sm:$0xf]
  %v46 = vld [vmem:[%s1 + $0xc] sm:$0xf]
  %v47 = vld [vmem:[%s1 + $0x10] sm:$0xf]
  %v48 = vld [vmem:[%s1 + $0x14] sm:$0xf]
  %v49 = vld [vmem:[%s1 + $0x18] sm:$0xf]
  %v50 = vld [vmem:[%s1 + $0x1c] sm:$0xf]
  %v51 = vld [vmem:[%s1 + $0x20] sm:$0xf]
  %v52 = vld [vmem:[%s1 + $0x24] sm:$0xf]
  %v53 = vld [vmem:[%s1 + $0x28] sm:$0xf]
  %v54 = vld [vmem:[%s1 + $0x2c] sm:$0xf]
  %v55 = vld [vmem:[%s1 + $0x30] sm:$0xf]
  %v56 = vld [vmem:[%s1 + $0x34] sm:$0xf]
  %v57 = vld [vmem:[%s1 + $0x38] sm:$0xf]
  %v58 = vld [vmem:[%s1 + $0x3c] sm:$0xf]
  %v59 = vld [vmem:[%s3] sm:$0xff]
  %v60 = vld [vmem:[%s3 + $0x8] sm:$0xff]
  %v61 = vld [vmem:[%s3 + $0x10] sm:$0xff]
  %v62 = vld [vmem:[%s3 + $0x18] sm:$0xff]
  %v63 = vld [vmem:[%s3 + $0x20] sm:$0xff]
  %v64 = vld [vmem:[%s3 + $0x28] sm:$0xff]
  %v65 = vld [vmem:[%s3 + $0x30] sm:$0xff]
  %v66 = vld [vmem:[%s3 + $0x38] sm:$0xff]
  %v67 = vld [vmem:[%s3 + $0x40] sm:$0xff]
  %v68 = vld [vmem:[%s3 + $0x48] sm:$0xff]
  %v69 = vld [vmem:[%s3 + $0x50] sm:$0xff]
  %v70 = vld [vmem:[%s3 + $0x58] sm:$0xff]
  %v71 = vld [vmem:[%s3 + $0x60] sm:$0xff]
  %v72 = vld [vmem:[%s3 + $0x68] sm:$0xff]
  %v73 = vld [vmem:[%s3 + $0x70] sm:$0xff]
  %v74 = vld [vmem:[%s3 + $0x78] sm:$0xff]
  %v83 = vunpack.c.l.b16 %v27
  %v84 = vunpack.c.l.b16 %v28
  %v85 = vunpack.c.l.b16 %v29
  %v86 = vunpack.c.l.b16 %v30
  %v87 = vunpack.c.l.b16 %v31
  %v88 = vunpack.c.l.b16 %v32
  %v89 = vunpack.c.l.b16 %v33
  %v90 = vunpack.c.l.b16 %v34
  %v91 = vpack.c.b16 %v84, %v83
  %v92 = vpack.c.b16 %v86, %v85
  %v93 = vpack.c.b16 %v88, %v87
  %v94 = vpack.c.b16 %v90, %v89
  %v103 = vunpack.c.l.b16 %v43
  %v104 = vunpack.c.l.b16 %v44
  %v105 = vunpack.c.l.b16 %v45
  %v106 = vunpack.c.l.b16 %v46
  %v107 = vunpack.c.l.b16 %v47
  %v108 = vunpack.c.l.b16 %v48
  %v109 = vunpack.c.l.b16 %v49
  %v110 = vunpack.c.l.b16 %v50
  %v111 = vpack.c.b16 %v104, %v103
  %v112 = vpack.c.b16 %v106, %v105
  %v113 = vpack.c.b16 %v108, %v107
  %v114 = vpack.c.b16 %v110, %v109
  %vm115 = vcmask 162816
  %v117 = vsel %vm115, %v91, 0
  %v120 = vsel %vm115, %v92, 0
  %v123 = vsel %vm115, %v93, 0
  %v126 = vsel %vm115, %v94, 0
  %v129 = vsel %vm115, %v111, 0
  %v132 = vsel %vm115, %v112, 0
  %v135 = vsel %vm115, %v113, 0
  %v138 = vsel %vm115, %v114, 0
  %140 = vmatpush.bf16.xpose.msra.mxu0 0
  %141 = vmatpush.bf16.xpose.msra.mxu0 0
  %142 = vmatpush.bf16.xpose.msra.mxu0 0
  %143 = vmatpush.bf16.xpose.msra.mxu0 0
  %144 = vmatpush.bf16.xpose.msra.mxu0 %v138
  %145 = vmatpush.bf16.xpose.msra.mxu0 %v135
  %146 = vmatpush.bf16.xpose.msra.mxu0 %v132
  %147 = vmatpush.bf16.xpose.msra.mxu0 %v129
  %148 = vmatmul.bf16.gmra.mxu0 %v117
  %v149 = vpop.f32.mrf.mxu0
  %v150 = vadd.f32 %v59, %v149
  %v151 = vpop.f32.mrf.mxu0
  %v152 = vadd.f32 %v60, %v151
  %153 = vmatmul.bf16.gmra.mxu0 %v120
  %v154 = vpop.f32.mrf.mxu0
  %v155 = vadd.f32 %v61, %v154
  %v156 = vpop.f32.mrf.mxu0
  %v157 = vadd.f32 %v62, %v156
  %158 = vmatmul.bf16.gmra.mxu0 %v123
  %v159 = vpop.f32.mrf.mxu0
  %v160 = vadd.f32 %v63, %v159
  %v161 = vpop.f32.mrf.mxu0
  %v162 = vadd.f32 %v64, %v161
  %163 = vmatmul.bf16.gmra.mxu0 %v126
  %v164 = vpop.f32.mrf.mxu0
  %v165 = vadd.f32 %v65, %v164
  %v166 = vpop.f32.mrf.mxu0
  %v167 = vadd.f32 %v66, %v166
  %168 = vdwg.mxu0
  %v177 = vunpack.c.l.b16 %v35
  %v178 = vunpack.c.l.b16 %v36
  %v179 = vunpack.c.l.b16 %v37
  %v180 = vunpack.c.l.b16 %v38
  %v181 = vunpack.c.l.b16 %v39
  %v182 = vunpack.c.l.b16 %v40
  %v183 = vunpack.c.l.b16 %v41
  %v184 = vunpack.c.l.b16 %v42
  %v185 = vpack.c.b16 %v178, %v177
  %v186 = vpack.c.b16 %v180, %v179
  %v187 = vpack.c.b16 %v182, %v181
  %v188 = vpack.c.b16 %v184, %v183
  %v197 = vunpack.c.l.b16 %v51
  %v198 = vunpack.c.l.b16 %v52
  %v199 = vunpack.c.l.b16 %v53
  %v200 = vunpack.c.l.b16 %v54
  %v201 = vunpack.c.l.b16 %v55
  %v202 = vunpack.c.l.b16 %v56
  %v203 = vunpack.c.l.b16 %v57
  %v204 = vunpack.c.l.b16 %v58
  %v205 = vpack.c.b16 %v198, %v197
  %v206 = vpack.c.b16 %v200, %v199
  %v207 = vpack.c.b16 %v202, %v201
  %v208 = vpack.c.b16 %v204, %v203
  %v210 = vsel %vm115, %v185, 0
  %v213 = vsel %vm115, %v186, 0
  %v216 = vsel %vm115, %v187, 0
  %v219 = vsel %vm115, %v188, 0
  %v222 = vsel %vm115, %v205, 0
  %v225 = vsel %vm115, %v206, 0
  %v228 = vsel %vm115, %v207, 0
  %v231 = vsel %vm115, %v208, 0
  %233 = vmatpush.bf16.xpose.msra.mxu0 0
  %234 = vmatpush.bf16.xpose.msra.mxu0 0
  %235 = vmatpush.bf16.xpose.msra.mxu0 0
  %236 = vmatpush.bf16.xpose.msra.mxu0 0
  %237 = vmatpush.bf16.xpose.msra.mxu0 %v231
  %238 = vmatpush.bf16.xpose.msra.mxu0 %v228
  %239 = vmatpush.bf16.xpose.msra.mxu0 %v225
  %240 = vmatpush.bf16.xpose.msra.mxu0 %v222
  %241 = vmatmul.bf16.gmra.mxu0 %v210
  %v242 = vpop.f32.mrf.mxu0
  %v243 = vadd.f32 %v67, %v242
  %v244 = vpop.f32.mrf.mxu0
  %v245 = vadd.f32 %v68, %v244
  %246 = vmatmul.bf16.gmra.mxu0 %v213
  %v247 = vpop.f32.mrf.mxu0
  %v248 = vadd.f32 %v69, %v247
  %v249 = vpop.f32.mrf.mxu0
  %v250 = vadd.f32 %v70, %v249
  %251 = vmatmul.bf16.gmra.mxu0 %v216
  %v252 = vpop.f32.mrf.mxu0
  %v253 = vadd.f32 %v71, %v252
  %v254 = vpop.f32.mrf.mxu0
  %v255 = vadd.f32 %v72, %v254
  %256 = vmatmul.bf16.gmra.mxu0 %v219
  %v257 = vpop.f32.mrf.mxu0
  %v258 = vadd.f32 %v73, %v257
  %v259 = vpop.f32.mrf.mxu0
  %v260 = vadd.f32 %v74, %v259
  %261 = vdwg.mxu0
  %vm262 = vcmask 523264
  %v263 = vsel %vm262, %v150, -inf
  %264 = vmax.xlane.f32.xlu0 %v263
  %v265 = vpop.xlane.xlu0 %264
  %v266 = vsel %vm262, %v152, -inf
  %267 = vmax.xlane.f32.xlu0 %v266
  %v268 = vpop.xlane.xlu0 %267
  %v269 = vsel %vm262, %v155, -inf
  %270 = vmax.xlane.f32.xlu0 %v269
  %v271 = vpop.xlane.xlu0 %270
  %v272 = vsel %vm262, %v157, -inf
  %273 = vmax.xlane.f32.xlu0 %v272
  %v274 = vpop.xlane.xlu0 %273
  %v275 = vsel %vm262, %v160, -inf
  %276 = vmax.xlane.f32.xlu0 %v275
  %v277 = vpop.xlane.xlu0 %276
  %v278 = vsel %vm262, %v162, -inf
  %279 = vmax.xlane.f32.xlu0 %v278
  %v280 = vpop.xlane.xlu0 %279
  %v281 = vsel %vm262, %v165, -inf
  %282 = vmax.xlane.f32.xlu0 %v281
  %v283 = vpop.xlane.xlu0 %282
  %v284 = vsel %vm262, %v167, -inf
  %285 = vmax.xlane.f32.xlu0 %v284
  %v286 = vpop.xlane.xlu0 %285
  %v287 = vsel %vm262, %v243, -inf
  %288 = vmax.xlane.f32.xlu0 %v287
  %v289 = vpop.xlane.xlu0 %288
  %v290 = vsel %vm262, %v245, -inf
  %291 = vmax.xlane.f32.xlu0 %v290
  %v292 = vpop.xlane.xlu0 %291
  %v293 = vsel %vm262, %v248, -inf
  %294 = vmax.xlane.f32.xlu0 %v293
  %v295 = vpop.xlane.xlu0 %294
  %v296 = vsel %vm262, %v250, -inf
  %297 = vmax.xlane.f32.xlu0 %v296
  %v298 = vpop.xlane.xlu0 %297
  %v299 = vsel %vm262, %v253, -inf
  %300 = vmax.xlane.f32.xlu0 %v299
  %v301 = vpop.xlane.xlu0 %300
  %v302 = vsel %vm262, %v255, -inf
  %303 = vmax.xlane.f32.xlu0 %v302
  %v304 = vpop.xlane.xlu0 %303
  %v305 = vsel %vm262, %v258, -inf
  %306 = vmax.xlane.f32.xlu0 %v305
  %v307 = vpop.xlane.xlu0 %306
  %v308 = vsel %vm262, %v260, -inf
  %309 = vmax.xlane.f32.xlu0 %v308
  %v310 = vpop.xlane.xlu0 %309
  %v311 = vsub.f32 %v150, %v265
  %v312 = vsub.f32 %v152, %v268
  %v313 = vsub.f32 %v155, %v271
  %v314 = vsub.f32 %v157, %v274
  %v315 = vsub.f32 %v160, %v277
  %v316 = vsub.f32 %v162, %v280
  %v317 = vsub.f32 %v165, %v283
  %v318 = vsub.f32 %v167, %v286
  %v319 = vsub.f32 %v243, %v289
  %v320 = vsub.f32 %v245, %v292
  %v321 = vsub.f32 %v248, %v295
  %v322 = vsub.f32 %v250, %v298
  %v323 = vsub.f32 %v253, %v301
  %v324 = vsub.f32 %v255, %v304
  %v325 = vsub.f32 %v258, %v307
  %v326 = vsub.f32 %v260, %v310
  %v327 = vmul.f32 %v311, 1.442695
  %v328 = vpow.pop %v327
  %v329 = vmul.f32 %v312, 1.442695
  %v330 = vpow.pop %v329
  %v331 = vmul.f32 %v313, 1.442695
  %v332 = vpow.pop %v331
  %v333 = vmul.f32 %v314, 1.442695
  %v334 = vpow.pop %v333
  %v335 = vmul.f32 %v315, 1.442695
  %v336 = vpow.pop %v335
  %v337 = vmul.f32 %v316, 1.442695
  %v338 = vpow.pop %v337
  %v339 = vmul.f32 %v317, 1.442695
  %v340 = vpow.pop %v339
  %v341 = vmul.f32 %v318, 1.442695
  %v342 = vpow.pop %v341
  %v343 = vmul.f32 %v319, 1.442695
  %v344 = vpow.pop %v343
  %v345 = vmul.f32 %v320, 1.442695
  %v346 = vpow.pop %v345
  %v347 = vmul.f32 %v321, 1.442695
  %v348 = vpow.pop %v347
  %v349 = vmul.f32 %v322, 1.442695
  %v350 = vpow.pop %v349
  %v351 = vmul.f32 %v323, 1.442695
  %v352 = vpow.pop %v351
  %v353 = vmul.f32 %v324, 1.442695
  %v354 = vpow.pop %v353
  %v355 = vmul.f32 %v325, 1.442695
  %v356 = vpow.pop %v355
  %v357 = vmul.f32 %v326, 1.442695
  %v358 = vpow.pop %v357
  %v359 = vsel %vm262, %v328, 0.0
  %360 = vadd.xlane.f32.xlu0 %v359
  %v361 = vpop.xlane.xlu0 %360
  %v362 = vsel %vm262, %v330, 0.0
  %363 = vadd.xlane.f32.xlu0 %v362
  %v364 = vpop.xlane.xlu0 %363
  %v365 = vsel %vm262, %v332, 0.0
  %366 = vadd.xlane.f32.xlu0 %v365
  %v367 = vpop.xlane.xlu0 %366
  %v368 = vsel %vm262, %v334, 0.0
  %369 = vadd.xlane.f32.xlu0 %v368
  %v370 = vpop.xlane.xlu0 %369
  %v371 = vsel %vm262, %v336, 0.0
  %372 = vadd.xlane.f32.xlu0 %v371
  %v373 = vpop.xlane.xlu0 %372
  %v374 = vsel %vm262, %v338, 0.0
  %375 = vadd.xlane.f32.xlu0 %v374
  %v376 = vpop.xlane.xlu0 %375
  %v377 = vsel %vm262, %v340, 0.0
  %378 = vadd.xlane.f32.xlu0 %v377
  %v379 = vpop.xlane.xlu0 %378
  %v380 = vsel %vm262, %v342, 0.0
  %381 = vadd.xlane.f32.xlu0 %v380
  %v382 = vpop.xlane.xlu0 %381
  %v383 = vsel %vm262, %v344, 0.0
  %384 = vadd.xlane.f32.xlu0 %v383
  %v385 = vpop.xlane.xlu0 %384
  %v386 = vsel %vm262, %v346, 0.0
  %387 = vadd.xlane.f32.xlu0 %v386
  %v388 = vpop.xlane.xlu0 %387
  %v389 = vsel %vm262, %v348, 0.0
  %390 = vadd.xlane.f32.xlu0 %v389
  %v391 = vpop.xlane.xlu0 %390
  %v392 = vsel %vm262, %v350, 0.0
  %393 = vadd.xlane.f32.xlu0 %v392
  %v394 = vpop.xlane.xlu0 %393
  %v395 = vsel %vm262, %v352, 0.0
  %396 = vadd.xlane.f32.xlu0 %v395
  %v397 = vpop.xlane.xlu0 %396
  %v398 = vsel %vm262, %v354, 0.0
  %399 = vadd.xlane.f32.xlu0 %v398
  %v400 = vpop.xlane.xlu0 %399
  %v401 = vsel %vm262, %v356, 0.0
  %402 = vadd.xlane.f32.xlu0 %v401
  %v403 = vpop.xlane.xlu0 %402
  %v404 = vsel %vm262, %v358, 0.0
  %405 = vadd.xlane.f32.xlu0 %v404
  %v406 = vpop.xlane.xlu0 %405
  %v407 = vrcp.pop %v361
  %v408 = vrcp.pop %v364
  %v409 = vrcp.pop %v367
  %v410 = vrcp.pop %v370
  %v411 = vrcp.pop %v373
  %v412 = vrcp.pop %v376
  %v413 = vrcp.pop %v379
  %v414 = vrcp.pop %v382
  %v415 = vrcp.pop %v385
  %v416 = vrcp.pop %v388
  %v417 = vrcp.pop %v391
  %v418 = vrcp.pop %v394
  %v419 = vrcp.pop %v397
  %v420 = vrcp.pop %v400
  %v421 = vrcp.pop %v403
  %v422 = vrcp.pop %v406
  %v423 = vmul.f32 %v328, %v407
  %v424 = vmul.f32 %v330, %v408
  %v425 = vmul.f32 %v332, %v409
  %v426 = vmul.f32 %v334, %v410
  %v427 = vmul.f32 %v336, %v411
  %v428 = vmul.f32 %v338, %v412
  %v429 = vmul.f32 %v340, %v413
  %v430 = vmul.f32 %v342, %v414
  %v431 = vmul.f32 %v344, %v415
  %v432 = vmul.f32 %v346, %v416
  %v433 = vmul.f32 %v348, %v417
  %v434 = vmul.f32 %v350, %v418
  %v435 = vmul.f32 %v352, %v419
  %v436 = vmul.f32 %v354, %v420
  %v437 = vmul.f32 %v356, %v421
  %v438 = vmul.f32 %v358, %v422
  %v439 = vpack.c.bf16 %v423, %v423
  %v440 = vpack.c.bf16 %v424, %v424
  %v441 = vpack.c.bf16 %v425, %v425
  %v442 = vpack.c.bf16 %v426, %v426
  %v443 = vpack.c.bf16 %v427, %v427
  %v444 = vpack.c.bf16 %v428, %v428
  %v445 = vpack.c.bf16 %v429, %v429
  %v446 = vpack.c.bf16 %v430, %v430
  %v447 = vpack.c.bf16 %v431, %v431
  %v448 = vpack.c.bf16 %v432, %v432
  %v449 = vpack.c.bf16 %v433, %v433
  %v450 = vpack.c.bf16 %v434, %v434
  %v451 = vpack.c.bf16 %v435, %v435
  %v452 = vpack.c.bf16 %v436, %v436
  %v453 = vpack.c.bf16 %v437, %v437
  %v454 = vpack.c.bf16 %v438, %v438
  %v455 = vld [vmem:[%s2] sm:$0xf]
  %v456 = vld [vmem:[%s2 + $0x4] sm:$0xf]
  %v457 = vld [vmem:[%s2 + $0x8] sm:$0xf]
  %v458 = vld [vmem:[%s2 + $0xc] sm:$0xf]
  %v459 = vld [vmem:[%s2 + $0x10] sm:$0xf]
  %v460 = vld [vmem:[%s2 + $0x14] sm:$0xf]
  %v461 = vld [vmem:[%s2 + $0x18] sm:$0xf]
  %v462 = vld [vmem:[%s2 + $0x1c] sm:$0xf]
  %v463 = vld [vmem:[%s2 + $0x20] sm:$0xf]
  %v464 = vld [vmem:[%s2 + $0x24] sm:$0xf]
  %v465 = vld [vmem:[%s2 + $0x28] sm:$0xf]
  %v466 = vld [vmem:[%s2 + $0x2c] sm:$0xf]
  %v467 = vld [vmem:[%s2 + $0x30] sm:$0xf]
  %v468 = vld [vmem:[%s2 + $0x34] sm:$0xf]
  %v469 = vld [vmem:[%s2 + $0x38] sm:$0xf]
  %v470 = vld [vmem:[%s2 + $0x3c] sm:$0xf]
  %v479 = vunpack.c.l.b16 %v439
  %v480 = vunpack.c.l.b16 %v440
  %v481 = vunpack.c.l.b16 %v441
  %v482 = vunpack.c.l.b16 %v442
  %v483 = vunpack.c.l.b16 %v443
  %v484 = vunpack.c.l.b16 %v444
  %v485 = vunpack.c.l.b16 %v445
  %v486 = vunpack.c.l.b16 %v446
  %v487 = vpack.c.b16 %v480, %v479
  %v488 = vpack.c.b16 %v482, %v481
  %v489 = vpack.c.b16 %v484, %v483
  %v490 = vpack.c.b16 %v486, %v485
  %v499 = vunpack.c.l.b16 %v455
  %v500 = vunpack.c.l.b16 %v456
  %v501 = vunpack.c.l.b16 %v457
  %v502 = vunpack.c.l.b16 %v458
  %v503 = vunpack.c.l.b16 %v459
  %v504 = vunpack.c.l.b16 %v460
  %v505 = vunpack.c.l.b16 %v461
  %v506 = vunpack.c.l.b16 %v462
  %v507 = vpack.c.b16 %v500, %v499
  %v508 = vpack.c.b16 %v502, %v501
  %v509 = vpack.c.b16 %v504, %v503
  %v510 = vpack.c.b16 %v506, %v505
  %v516 = vsel %vm262, %v487, 0
  %v519 = vsel %vm262, %v488, 0
  %v522 = vsel %vm262, %v489, 0
  %v525 = vsel %vm262, %v490, 0
  %527 = vmatpush.bf16.msra.mxu0 0
  %528 = vmatpush.bf16.msra.mxu0 0
  %529 = vmatpush.bf16.msra.mxu0 0
  %530 = vmatpush.bf16.msra.mxu0 0
  %531 = vmatpush.bf16.msra.mxu0 %v510
  %532 = vmatpush.bf16.msra.mxu0 %v509
  %533 = vmatpush.bf16.msra.mxu0 %v508
  %534 = vmatpush.bf16.msra.mxu0 %v507
  %535 = vmatmul.bf16.gmra.mxu0 %v516
  %v536 = vpop.f32.mrf.mxu0
  %v537 = vadd.f32 0.0, %v536
  %v538 = vpop.f32.mrf.mxu0
  %v539 = vadd.f32 0.0, %v538
  %540 = vmatmul.bf16.gmra.mxu0 %v519
  %v541 = vpop.f32.mrf.mxu0
  %v542 = vadd.f32 0.0, %v541
  %v543 = vpop.f32.mrf.mxu0
  %v544 = vadd.f32 0.0, %v543
  %545 = vmatmul.bf16.gmra.mxu0 %v522
  %v546 = vpop.f32.mrf.mxu0
  %v547 = vadd.f32 0.0, %v546
  %v548 = vpop.f32.mrf.mxu0
  %v549 = vadd.f32 0.0, %v548
  %550 = vmatmul.bf16.gmra.mxu0 %v525
  %v551 = vpop.f32.mrf.mxu0
  %v552 = vadd.f32 0.0, %v551
  %v553 = vpop.f32.mrf.mxu0
  %v554 = vadd.f32 0.0, %v553
  %555 = vdwg.mxu0
  %v564 = vunpack.c.l.b16 %v447
  %v565 = vunpack.c.l.b16 %v448
  %v566 = vunpack.c.l.b16 %v449
  %v567 = vunpack.c.l.b16 %v450
  %v568 = vunpack.c.l.b16 %v451
  %v569 = vunpack.c.l.b16 %v452
  %v570 = vunpack.c.l.b16 %v453
  %v571 = vunpack.c.l.b16 %v454
  %v572 = vpack.c.b16 %v565, %v564
  %v573 = vpack.c.b16 %v567, %v566
  %v574 = vpack.c.b16 %v569, %v568
  %v575 = vpack.c.b16 %v571, %v570
  %v584 = vunpack.c.l.b16 %v463
  %v585 = vunpack.c.l.b16 %v464
  %v586 = vunpack.c.l.b16 %v465
  %v587 = vunpack.c.l.b16 %v466
  %v588 = vunpack.c.l.b16 %v467
  %v589 = vunpack.c.l.b16 %v468
  %v590 = vunpack.c.l.b16 %v469
  %v591 = vunpack.c.l.b16 %v470
  %v592 = vpack.c.b16 %v585, %v584
  %v593 = vpack.c.b16 %v587, %v586
  %v594 = vpack.c.b16 %v589, %v588
  %v595 = vpack.c.b16 %v591, %v590
  %v601 = vsel %vm262, %v572, 0
  %v604 = vsel %vm262, %v573, 0
  %v607 = vsel %vm262, %v574, 0
  %v610 = vsel %vm262, %v575, 0
  %612 = vmatpush.bf16.msra.mxu0 0
  %613 = vmatpush.bf16.msra.mxu0 0
  %614 = vmatpush.bf16.msra.mxu0 0
  %615 = vmatpush.bf16.msra.mxu0 0
  %616 = vmatpush.bf16.msra.mxu0 %v595
  %617 = vmatpush.bf16.msra.mxu0 %v594
  %618 = vmatpush.bf16.msra.mxu0 %v593
  %619 = vmatpush.bf16.msra.mxu0 %v592
  %620 = vmatmul.bf16.gmra.mxu0 %v601
  %v621 = vpop.f32.mrf.mxu0
  %v622 = vadd.f32 0.0, %v621
  %v623 = vpop.f32.mrf.mxu0
  %v624 = vadd.f32 0.0, %v623
  %625 = vmatmul.bf16.gmra.mxu0 %v604
  %v626 = vpop.f32.mrf.mxu0
  %v627 = vadd.f32 0.0, %v626
  %v628 = vpop.f32.mrf.mxu0
  %v629 = vadd.f32 0.0, %v628
  %630 = vmatmul.bf16.gmra.mxu0 %v607
  %v631 = vpop.f32.mrf.mxu0
  %v632 = vadd.f32 0.0, %v631
  %v633 = vpop.f32.mrf.mxu0
  %v634 = vadd.f32 0.0, %v633
  %635 = vmatmul.bf16.gmra.mxu0 %v610
  %v636 = vpop.f32.mrf.mxu0
  %v637 = vadd.f32 0.0, %v636
  %v638 = vpop.f32.mrf.mxu0
  %v639 = vadd.f32 0.0, %v638
  %640 = vdwg.mxu0
  %v641 = vpack.c.bf16 %v539, %v537
  %v642 = vpack.c.bf16 %v544, %v542
  %v643 = vpack.c.bf16 %v549, %v547
  %v644 = vpack.c.bf16 %v554, %v552
  %v645 = vpack.c.bf16 %v624, %v622
  %v646 = vpack.c.bf16 %v629, %v627
  %v647 = vpack.c.bf16 %v634, %v632
  %v648 = vpack.c.bf16 %v639, %v637
  %v649 = vld [vmem:[%s4] sm:$0x7]
  %vm650 = vcmask 48128
  %v652 = vsel %vm650, %v641, 0
  %v655 = vsel %vm650, %v642, 0
  %v658 = vsel %vm650, %v643, 0
  %v661 = vsel %vm650, %v644, 0
  %v664 = vsel %vm650, %v645, 0
  %v667 = vsel %vm650, %v646, 0
  %v670 = vsel %vm650, %v647, 0
  %v673 = vsel %vm650, %v648, 0
  %vm675 = vcmask 1042432
  %v677 = vsel %vm675, %v649, 0
  %679 = vmatpush.bf16.msra.mxu0 0
  %680 = vmatpush.bf16.msra.mxu0 0
  %681 = vmatpush.bf16.msra.mxu0 0
  %682 = vmatpush.bf16.msra.mxu0 0
  %683 = vmatpush.bf16.msra.mxu0 0
  %684 = vmatpush.bf16.msra.mxu0 0
  %685 = vmatpush.bf16.msra.mxu0 0
  %686 = vmatpush.bf16.msra.mxu0 %v677
  %687 = vmatmul.bf16.gmra.mxu0 %v652
  %v688 = vpop.f32.mrf.mxu0
  %v689 = vadd.f32 0.0, %v688
  %v690 = vpop.f32.mrf.mxu0
  %v691 = vadd.f32 0.0, %v690
  %692 = vmatmul.bf16.gmra.mxu0 %v655
  %v693 = vpop.f32.mrf.mxu0
  %v694 = vadd.f32 0.0, %v693
  %v695 = vpop.f32.mrf.mxu0
  %v696 = vadd.f32 0.0, %v695
  %697 = vmatmul.bf16.gmra.mxu0 %v658
  %v698 = vpop.f32.mrf.mxu0
  %v699 = vadd.f32 0.0, %v698
  %v700 = vpop.f32.mrf.mxu0
  %v701 = vadd.f32 0.0, %v700
  %702 = vmatmul.bf16.gmra.mxu0 %v661
  %v703 = vpop.f32.mrf.mxu0
  %v704 = vadd.f32 0.0, %v703
  %v705 = vpop.f32.mrf.mxu0
  %v706 = vadd.f32 0.0, %v705
  %707 = vmatmul.bf16.gmra.mxu0 %v664
  %v708 = vpop.f32.mrf.mxu0
  %v709 = vadd.f32 0.0, %v708
  %v710 = vpop.f32.mrf.mxu0
  %v711 = vadd.f32 0.0, %v710
  %712 = vmatmul.bf16.gmra.mxu0 %v667
  %v713 = vpop.f32.mrf.mxu0
  %v714 = vadd.f32 0.0, %v713
  %v715 = vpop.f32.mrf.mxu0
  %v716 = vadd.f32 0.0, %v715
  %717 = vmatmul.bf16.gmra.mxu0 %v670
  %v718 = vpop.f32.mrf.mxu0
  %v719 = vadd.f32 0.0, %v718
  %v720 = vpop.f32.mrf.mxu0
  %v721 = vadd.f32 0.0, %v720
  %722 = vmatmul.bf16.gmra.mxu0 %v673
  %v723 = vpop.f32.mrf.mxu0
  %v724 = vadd.f32 0.0, %v723
  %v725 = vpop.f32.mrf.mxu0
  %v726 = vadd.f32 0.0, %v725
  %727 = vdwg.mxu0
  %v728 = vld [vmem:[%s5] sm:$0x1]
  %v730 = vperm.slane %v728, 0
  %v732 = vmul.f32 %v689, %v730
  %v733 = vmul.f32 %v691, %v730
  %v734 = vmul.f32 %v694, %v730
  %v735 = vmul.f32 %v696, %v730
  %v736 = vmul.f32 %v699, %v730
  %v737 = vmul.f32 %v701, %v730
  %v738 = vmul.f32 %v704, %v730
  %v739 = vmul.f32 %v706, %v730
  %v740 = vmul.f32 %v709, %v730
  %v741 = vmul.f32 %v711, %v730
  %v742 = vmul.f32 %v714, %v730
  %v743 = vmul.f32 %v716, %v730
  %v744 = vmul.f32 %v719, %v730
  %v745 = vmul.f32 %v721, %v730
  %v746 = vmul.f32 %v724, %v730
  %v747 = vmul.f32 %v726, %v730
  %v748 = vld [vmem:[%s6] sm:$0x1]
  %v750 = vperm.slane %v748, 0
  %v752 = vadd.f32 %v732, %v750
  %v753 = vadd.f32 %v733, %v750
  %v754 = vadd.f32 %v734, %v750
  %v755 = vadd.f32 %v735, %v750
  %v756 = vadd.f32 %v736, %v750
  %v757 = vadd.f32 %v737, %v750
  %v758 = vadd.f32 %v738, %v750
  %v759 = vadd.f32 %v739, %v750
  %v760 = vadd.f32 %v740, %v750
  %v761 = vadd.f32 %v741, %v750
  %v762 = vadd.f32 %v742, %v750
  %v763 = vadd.f32 %v743, %v750
  %v764 = vadd.f32 %v744, %v750
  %v765 = vadd.f32 %v745, %v750
  %v766 = vadd.f32 %v746, %v750
  %v767 = vadd.f32 %v747, %v750
  %v768 = vmax.f32 %v752, 0.0
  %v769 = vmax.f32 %v753, 0.0
  %v770 = vmax.f32 %v754, 0.0
  %v771 = vmax.f32 %v755, 0.0
  %v772 = vmax.f32 %v756, 0.0
  %v773 = vmax.f32 %v757, 0.0
  %v774 = vmax.f32 %v758, 0.0
  %v775 = vmax.f32 %v759, 0.0
  %v776 = vmax.f32 %v760, 0.0
  %v777 = vmax.f32 %v761, 0.0
  %v778 = vmax.f32 %v762, 0.0
  %v779 = vmax.f32 %v763, 0.0
  %v780 = vmax.f32 %v764, 0.0
  %v781 = vmax.f32 %v765, 0.0
  %v782 = vmax.f32 %v766, 0.0
  %v783 = vmax.f32 %v767, 0.0
  %784 = vst.msk [vmem:[%s7] sm:$0xff] %vm650, %v768
  %785 = vst.msk [vmem:[%s7 + $0x8] sm:$0xff] %vm650, %v769
  %786 = vst.msk [vmem:[%s7 + $0x10] sm:$0xff] %vm650, %v770
  %787 = vst.msk [vmem:[%s7 + $0x18] sm:$0xff] %vm650, %v771
  %788 = vst.msk [vmem:[%s7 + $0x20] sm:$0xff] %vm650, %v772
  %789 = vst.msk [vmem:[%s7 + $0x28] sm:$0xff] %vm650, %v773
  %790 = vst.msk [vmem:[%s7 + $0x30] sm:$0xff] %vm650, %v774
  %791 = vst.msk [vmem:[%s7 + $0x38] sm:$0xff] %vm650, %v775
  %792 = vst.msk [vmem:[%s7 + $0x40] sm:$0xff] %vm650, %v776
  %793 = vst.msk [vmem:[%s7 + $0x48] sm:$0xff] %vm650, %v777
  %794 = vst.msk [vmem:[%s7 + $0x50] sm:$0xff] %vm650, %v778
  %795 = vst.msk [vmem:[%s7 + $0x58] sm:$0xff] %vm650, %v779
  %796 = vst.msk [vmem:[%s7 + $0x60] sm:$0xff] %vm650, %v780
  %797 = vst.msk [vmem:[%s7 + $0x68] sm:$0xff] %vm650, %v781
  %798 = vst.msk [vmem:[%s7 + $0x70] sm:$0xff] %vm650, %v782
  %799 = vst.msk [vmem:[%s7 + $0x78] sm:$0xff] %vm650, %v783
  // Predicated region
  $region30: #{wide_resnet_forward.13} parent=0 // pred_check
    _
  $region31: #{wide_resnet_forward.13} parent=0 // pred_check_branch
    %801 = sbr.rel (0) target = $region33
  $region32: #{wide_resnet_forward.13} parent=0 // pred_region
    _
  $region33: #{wide_resnet_forward.13} parent=0 // pred_fallthru
    _
  // Predicated region
  $region34: #{wide_resnet_forward.13} parent=0 // pred_check
    _
  $region35: #{wide_resnet_forward.13} parent=0 // pred_check_branch
    %803 = sbr.rel (0) target = $region37
  $region36: #{wide_resnet_forward.13} parent=0 // pred_region
    _
  $region37: #{wide_resnet_forward.13} parent=0 // pred_fallthru
    _

// kernel: wide_resnet_forward.14
$region0: #{wide_resnet_forward.14}
  #allocation0 [shape = 'u32[]', space=smem, size = 0x4, offset = 0x4, fixed_abs, tag = 'smem constant byte address 0x4 - core index']
  #allocation1 [shape = 'u32[72,128]{1,0:T(1,128)}', space=vmem, size = 0x9000, scoped, tag = 'internal scratch']
  %s0 = inlined_call_operand.vmem [shape: bf16[288,128], index: 0, kind: input, shape index: {}]
  %s1 = inlined_call_operand.vmem [shape: bf16[32,288], index: 1, kind: input, shape index: {}]
  %s2 = inlined_call_operand.vmem [shape: f32[32,1], index: 2, kind: input, shape index: {}]
  %s3 = inlined_call_operand.vmem [shape: f32[32,1], index: 3, kind: input, shape index: {}]
  %s4 = inlined_call_operand.vmem [shape: bf16[16,128], index: 4, kind: input, shape index: {}]
  %s5 = inlined_call_operand.vmem [shape: bf16[32,16], index: 5, kind: input, shape index: {}]
  %s6 = inlined_call_operand.vmem [shape: f32[32,1], index: 6, kind: input, shape index: {}]
  %s7 = inlined_call_operand.vmem [shape: f32[32,1], index: 7, kind: input, shape index: {}]
  %s8 = inlined_call_operand.vmem [shape: f32[32,128], index: 8, kind: output, shape index: {}]
  %s9 = sld [smem:[#allocation0]]
  $region42: #{wide_resnet_forward.14} parent=0
    _
  %s11 = ssub.s32 1, %s9
  %s12 = scalar_select 0, %s11, %s9
  // Predicated region
  $region2: #{wide_resnet_forward.14} parent=0 // pred_check
    _
  $region3: #{wide_resnet_forward.14} parent=0 // pred_check_branch
    %14 = sbr.rel (0) target = $region5
  $region4: #{wide_resnet_forward.14} parent=0 // pred_region
    _
  $region5: #{wide_resnet_forward.14} parent=0 // pred_fallthru
    _
  // Predicated region
  $region6: #{wide_resnet_forward.14} parent=0 // pred_check
    _
  $region7: #{wide_resnet_forward.14} parent=0 // pred_check_branch
    %16 = sbr.rel (0) target = $region9
  $region8: #{wide_resnet_forward.14} parent=0 // pred_region
    _
  $region9: #{wide_resnet_forward.14} parent=0 // pred_fallthru
    _
  // Predicated region
  $region10: #{wide_resnet_forward.14} parent=0 // pred_check
    _
  $region11: #{wide_resnet_forward.14} parent=0 // pred_check_branch
    %18 = sbr.rel (0) target = $region13
  $region12: #{wide_resnet_forward.14} parent=0 // pred_region
    _
  $region13: #{wide_resnet_forward.14} parent=0 // pred_fallthru
    _
  // Predicated region
  $region14: #{wide_resnet_forward.14} parent=0 // pred_check
    _
  $region15: #{wide_resnet_forward.14} parent=0 // pred_check_branch
    %20 = sbr.rel (0) target = $region17
  $region16: #{wide_resnet_forward.14} parent=0 // pred_region
    _
  $region17: #{wide_resnet_forward.14} parent=0 // pred_fallthru
    _
  // Predicated region
  $region18: #{wide_resnet_forward.14} parent=0 // pred_check
    _
  $region19: #{wide_resnet_forward.14} parent=0 // pred_check_branch
    %22 = sbr.rel (0) target = $region21
  $region20: #{wide_resnet_forward.14} parent=0 // pred_region
    _
  $region21: #{wide_resnet_forward.14} parent=0 // pred_fallthru
    _
  // Predicated region
  $region22: #{wide_resnet_forward.14} parent=0 // pred_check
    _
  $region23: #{wide_resnet_forward.14} parent=0 // pred_check_branch
    %24 = sbr.rel (0) target = $region25
  $region24: #{wide_resnet_forward.14} parent=0 // pred_region
    _
  $region25: #{wide_resnet_forward.14} parent=0 // pred_fallthru
    _
  // Predicated region
  $region26: #{wide_resnet_forward.14} parent=0 // pred_check
    _
  $region27: #{wide_resnet_forward.14} parent=0 // pred_check_branch
    %26 = sbr.rel (0) target = $region29
  $region28: #{wide_resnet_forward.14} parent=0 // pred_region
    _
  $region29: #{wide_resnet_forward.14} parent=0 // pred_fallthru
    _
  // Predicated region
  $region30: #{wide_resnet_forward.14} parent=0 // pred_check
    _
  $region31: #{wide_resnet_forward.14} parent=0 // pred_check_branch
    %28 = sbr.rel (0) target = $region33
  $region32: #{wide_resnet_forward.14} parent=0 // pred_region
    _
  $region33: #{wide_resnet_forward.14} parent=0 // pred_fallthru
    _
  %v30 = vld [vmem:[%s1] sm:$0xff]
  %v31 = vld [vmem:[%s1 + $0x8] sm:$0xf]
  %v32 = vld [vmem:[%s1 + $0xc] sm:$0xff]
  %v33 = vld [vmem:[%s1 + $0x14] sm:$0xf]
  %v34 = vld [vmem:[%s1 + $0x18] sm:$0xff]
  %v35 = vld [vmem:[%s1 + $0x20] sm:$0xf]
  %v36 = vld [vmem:[%s1 + $0x24] sm:$0xff]
  %v37 = vld [vmem:[%s1 + $0x2c] sm:$0xf]
  %v38 = vld [vmem:[%s0] sm:$0xf]
  %v39 = vld [vmem:[%s0 + $0x4] sm:$0xf]
  %v40 = vld [vmem:[%s0 + $0x8] sm:$0xf]
  %v41 = vld [vmem:[%s0 + $0xc] sm:$0xf]
  %v42 = vld [vmem:[%s0 + $0x10] sm:$0xf]
  %v43 = vld [vmem:[%s0 + $0x14] sm:$0xf]
  %v44 = vld [vmem:[%s0 + $0x18] sm:$0xf]
  %v45 = vld [vmem:[%s0 + $0x1c] sm:$0xf]
  %v46 = vld [vmem:[%s0 + $0x20] sm:$0xf]
  %v47 = vld [vmem:[%s0 + $0x24] sm:$0xf]
  %v48 = vld [vmem:[%s0 + $0x28] sm:$0xf]
  %v49 = vld [vmem:[%s0 + $0x2c] sm:$0xf]
  %v50 = vld [vmem:[%s0 + $0x30] sm:$0xf]
  %v51 = vld [vmem:[%s0 + $0x34] sm:$0xf]
  %v52 = vld [vmem:[%s0 + $0x38] sm:$0xf]
  %v53 = vld [vmem:[%s0 + $0x3c] sm:$0xf]
  %v54 = vld [vmem:[%s0 + $0x40] sm:$0xf]
  %v55 = vld [vmem:[%s0 + $0x44] sm:$0xf]
  %v56 = vld [vmem:[%s0 + $0x48] sm:$0xf]
  %v57 = vld [vmem:[%s0 + $0x4c] sm:$0xf]
  %v58 = vld [vmem:[%s0 + $0x50] sm:$0xf]
  %v59 = vld [vmem:[%s0 + $0x54] sm:$0xf]
  %v60 = vld [vmem:[%s0 + $0x58] sm:$0xf]
  %v61 = vld [vmem:[%s0 + $0x5c] sm:$0xf]
  %v62 = vld [vmem:[%s0 + $0x60] sm:$0xf]
  %v63 = vld [vmem:[%s0 + $0x64] sm:$0xf]
  %v64 = vld [vmem:[%s0 + $0x68] sm:$0xf]
  %v65 = vld [vmem:[%s0 + $0x6c] sm:$0xf]
  %v66 = vld [vmem:[%s0 + $0x70] sm:$0xf]
  %v67 = vld [vmem:[%s0 + $0x74] sm:$0xf]
  %v68 = vld [vmem:[%s0 + $0x78] sm:$0xf]
  %v69 = vld [vmem:[%s0 + $0x7c] sm:$0xf]
  %v70 = vld [vmem:[%s0 + $0x80] sm:$0xf]
  %v71 = vld [vmem:[%s0 + $0x84] sm:$0xf]
  %v72 = vld [vmem:[%s0 + $0x88] sm:$0xf]
  %v73 = vld [vmem:[%s0 + $0x8c] sm:$0xf]
  %v82 = vunpack.c.l.b16 %v30
  %v83 = vunpack.c.h.b16 %v30
  %v84 = vunpack.c.l.b16 %v31
  %v85 = vunpack.c.l.b16 %v32
  %v86 = vunpack.c.h.b16 %v32
  %v87 = vunpack.c.l.b16 %v33
  %v88 = vunpack.c.l.b16 %v34
  %v89 = vunpack.c.h.b16 %v34
  %v90 = vunpack.c.l.b16 %v35
  %v91 = vunpack.c.l.b16 %v36
  %v92 = vunpack.c.h.b16 %v36
  %v93 = vunpack.c.l.b16 %v37
  %v94 = vpack.c.b16 %v85, %v82
  %v95 = vpack.c.b16 %v86, %v83
  %v96 = vpack.c.b16 %v87, %v84
  %v97 = vpack.c.b16 %v91, %v88
  %v98 = vpack.c.b16 %v92, %v89
  %v99 = vpack.c.b16 %v93, %v90
  %v140 = vunpack.c.l.b16 %v38
  %v141 = vunpack.c.l.b16 %v39
  %v142 = vunpack.c.l.b16 %v40
  %v143 = vunpack.c.l.b16 %v41
  %v144 = vunpack.c.l.b16 %v42
  %v145 = vunpack.c.l.b16 %v43
  %v146 = vunpack.c.l.b16 %v44
  %v147 = vunpack.c.l.b16 %v45
  %v148 = vunpack.c.l.b16 %v46
  %v149 = vunpack.c.l.b16 %v47
  %v150 = vunpack.c.l.b16 %v48
  %v151 = vunpack.c.l.b16 %v49
  %v152 = vunpack.c.l.b16 %v50
  %v153 = vunpack.c.l.b16 %v51
  %v154 = vunpack.c.l.b16 %v52
  %v155 = vunpack.c.l.b16 %v53
  %v156 = vunpack.c.l.b16 %v54
  %v157 = vunpack.c.l.b16 %v55
  %v158 = vunpack.c.l.b16 %v56
  %v159 = vunpack.c.l.b16 %v57
  %v160 = vunpack.c.l.b16 %v58
  %v161 = vunpack.c.l.b16 %v59
  %v162 = vunpack.c.l.b16 %v60
  %v163 = vunpack.c.l.b16 %v61
  %v164 = vunpack.c.l.b16 %v62
  %v165 = vunpack.c.l.b16 %v63
  %v166 = vunpack.c.l.b16 %v64
  %v167 = vunpack.c.l.b16 %v65
  %v168 = vunpack.c.l.b16 %v66
  %v169 = vunpack.c.l.b16 %v67
  %v170 = vunpack.c.l.b16 %v68
  %v171 = vunpack.c.l.b16 %v69
  %v172 = vunpack.c.l.b16 %v70
  %v173 = vunpack.c.l.b16 %v71
  %v174 = vunpack.c.l.b16 %v72
  %v175 = vunpack.c.l.b16 %v73
  %v176 = vpack.c.b16 %v141, %v140
  %v177 = vpack.c.b16 %v143, %v142
  %v178 = vpack.c.b16 %v145, %v144
  %v179 = vpack.c.b16 %v147, %v146
  %v180 = vpack.c.b16 %v149, %v148
  %v181 = vpack.c.b16 %v151, %v150
  %v182 = vpack.c.b16 %v153, %v152
  %v183 = vpack.c.b16 %v155, %v154
  %v184 = vpack.c.b16 %v157, %v156
  %v185 = vpack.c.b16 %v159, %v158
  %v186 = vpack.c.b16 %v161, %v160
  %v187 = vpack.c.b16 %v163, %v162
  %v188 = vpack.c.b16 %v165, %v164
  %v189 = vpack.c.b16 %v167, %v166
  %v190 = vpack.c.b16 %v169, %v168
  %v191 = vpack.c.b16 %v171, %v170
  %v192 = vpack.c.b16 %v173, %v172
  %v193 = vpack.c.b16 %v175, %v174
  %vm212 = vcmask 261120
  %v214 = vsel %vm212, %v96, 0
  %v217 = vsel %vm212, %v99, 0
  %219 = vmatpush.bf16.msra.mxu0 %v183
  %220 = vmatpush.bf16.msra.mxu0 %v182
  %221 = vmatpush.bf16.msra.mxu0 %v181
  %222 = vmatpush.bf16.msra.mxu0 %v180
  %223 = vmatpush.bf16.msra.mxu0 %v179
  %224 = vmatpush.bf16.msra.mxu0 %v178
  %225 = vmatpush.bf16.msra.mxu0 %v177
  %226 = vmatpush.bf16.msra.mxu0 %v176
  %227 = vmatmul.bf16.gmra.mxu0 %v94
  %v228 = vpop.f32.mrf.mxu0
  %v229 = vadd.f32 0.0, %v228
  %v230 = vpop.f32.mrf.mxu0
  %v231 = vadd.f32 0.0, %v230
  %232 = vmatmul.bf16.gmra.mxu0 %v97
  %v233 = vpop.f32.mrf.mxu0
  %v234 = vadd.f32 0.0, %v233
  %v235 = vpop.f32.mrf.mxu0
  %v236 = vadd.f32 0.0, %v235
  %237 = vdwg.mxu0
  %238 = vmatpush.bf16.msra.mxu0 %v191
  %239 = vmatpush.bf16.msra.mxu0 %v190
  %240 = vmatpush.bf16.msra.mxu0 %v189
  %241 = vmatpush.bf16.msra.mxu0 %v188
  %242 = vmatpush.bf16.msra.mxu0 %v187
  %243 = vmatpush.bf16.msra.mxu0 %v186
  %244 = vmatpush.bf16.msra.mxu0 %v185
  %245 = vmatpush.bf16.msra.mxu0 %v184
  %246 = vmatmul.bf16.gmra.mxu0 %v95
  %v247 = vpop.f32.mrf.mxu0
  %v248 = vadd.f32 %v229, %v247
  %v249 = vpop.f32.mrf.mxu0
  %v250 = vadd.f32 %v231, %v249
  %251 = vmatmul.bf16.gmra.mxu0 %v98
  %v252 = vpop.f32.mrf.mxu0
  %v253 = vadd.f32 %v234, %v252
  %v254 = vpop.f32.mrf.mxu0
  %v255 = vadd.f32 %v236, %v254
  %256 = vdwg.mxu0
  %257 = vmatpush.bf16.msra.mxu0 0
  %258 = vmatpush.bf16.msra.mxu0 0
  %259 = vmatpush.bf16.msra.mxu0 0
  %260 = vmatpush.bf16.msra.mxu0 0
  %261 = vmatpush.bf16.msra.mxu0 0
  %262 = vmatpush.bf16.msra.mxu0 0
  %263 = vmatpush.bf16.msra.mxu0 %v193
  %264 = vmatpush.bf16.msra.mxu0 %v192
  %265 = vmatmul.bf16.gmra.mxu0 %v214
  %v266 = vpop.f32.mrf.mxu0
  %v267 = vadd.f32 %v248, %v266
  %v268 = vpop.f32.mrf.mxu0
  %v269 = vadd.f32 %v250, %v268
  %270 = vmatmul.bf16.gmra.mxu0 %v217
  %v271 = vpop.f32.mrf.mxu0
  %v272 = vadd.f32 %v253, %v271
  %v273 = vpop.f32.mrf.mxu0
  %v274 = vadd.f32 %v255, %v273
  %275 = vdwg.mxu0
  %v276 = vld [vmem:[%s2] sm:$0xff]
  %v277 = vld [vmem:[%s2 + $0x8] sm:$0xff]
  %v278 = vld [vmem:[%s2 + $0x10] sm:$0xff]
  %v279 = vld [vmem:[%s2 + $0x18] sm:$0xff]
  %281 = vset.pattern.permute.xlu0 0
  %282 = vperm.xlu0 %281, %v276
  %v283 = vpop.permute.xlu0 %282
  %286 = vset.pattern.permute.xlu0 0
  %287 = vperm.xlu0 %286, %v277
  %v288 = vpop.permute.xlu0 %287
  %291 = vset.pattern.permute.xlu0 0
  %292 = vperm.xlu0 %291, %v278
  %v293 = vpop.permute.xlu0 %292
  %296 = vset.pattern.permute.xlu0 0
  %297 = vperm.xlu0 %296, %v279
  %v298 = vpop.permute.xlu0 %297
  %v300 = vmul.f32 %v267, %v283
  %v301 = vmul.f32 %v269, %v288
  %v302 = vmul.f32 %v272, %v293
  %v303 = vmul.f32 %v274, %v298
  %v304 = vld [vmem:[%s3] sm:$0xff]
  %v305 = vld [vmem:[%s3 + $0x8] sm:$0xff]
  %v306 = vld [vmem:[%s3 + $0x10] sm:$0xff]
  %v307 = vld [vmem:[%s3 + $0x18] sm:$0xff]
  %309 = vset.pattern.permute.xlu0 0
  %310 = vperm.xlu0 %309, %v304
  %v311 = vpop.permute.xlu0 %310
  %314 = vset.pattern.permute.xlu0 0
  %315 = vperm.xlu0 %314, %v305
  %v316 = vpop.permute.xlu0 %315
  %319 = vset.pattern.permute.xlu0 0
  %320 = vperm.xlu0 %319, %v306
  %v321 = vpop.permute.xlu0 %320
  %324 = vset.pattern.permute.xlu0 0
  %325 = vperm.xlu0 %324, %v307
  %v326 = vpop.permute.xlu0 %325
  %v328 = vadd.f32 %v300, %v311
  %v329 = vadd.f32 %v301, %v316
  %v330 = vadd.f32 %v302, %v321
  %v331 = vadd.f32 %v303, %v326
  %v332 = vld [vmem:[%s5] sm:$0xf]
  %v333 = vld [vmem:[%s5 + $0x4] sm:$0xf]
  %v334 = vld [vmem:[%s5 + $0x8] sm:$0xf]
  %v335 = vld [vmem:[%s5 + $0xc] sm:$0xf]
  %v336 = vld [vmem:[%s4] sm:$0xf]
  %v337 = vld [vmem:[%s4 + $0x4] sm:$0xf]
  %v342 = vunpack.c.l.b16 %v332
  %v343 = vunpack.c.l.b16 %v333
  %v344 = vunpack.c.l.b16 %v334
  %v345 = vunpack.c.l.b16 %v335
  %v346 = vpack.c.b16 %v343, %v342
  %v347 = vpack.c.b16 %v345, %v344
  %v350 = vunpack.c.l.b16 %v336
  %v351 = vunpack.c.l.b16 %v337
  %v352 = vpack.c.b16 %v351, %v350
  %vm354 = vcmask 130048
  %v356 = vsel %vm354, %v346, 0
  %v359 = vsel %vm354, %v347, 0
  %361 = vmatpush.bf16.msra.mxu0 0
  %362 = vmatpush.bf16.msra.mxu0 0
  %363 = vmatpush.bf16.msra.mxu0 0
  %364 = vmatpush.bf16.msra.mxu0 0
  %365 = vmatpush.bf16.msra.mxu0 0
  %366 = vmatpush.bf16.msra.mxu0 0
  %367 = vmatpush.bf16.msra.mxu0 0
  %368 = vmatpush.bf16.msra.mxu0 %v352
  %369 = vmatmul.bf16.gmra.mxu0 %v356
  %v370 = vpop.f32.mrf.mxu0
  %v371 = vadd.f32 0.0, %v370
  %v372 = vpop.f32.mrf.mxu0
  %v373 = vadd.f32 0.0, %v372
  %374 = vmatmul.bf16.gmra.mxu0 %v359
  %v375 = vpop.f32.mrf.mxu0
  %v376 = vadd.f32 0.0, %v375
  %v377 = vpop.f32.mrf.mxu0
  %v378 = vadd.f32 0.0, %v377
  %379 = vdwg.mxu0
  %v380 = vld [vmem:[%s6] sm:$0xff]
  %v381 = vld [vmem:[%s6 + $0x8] sm:$0xff]
  %v382 = vld [vmem:[%s6 + $0x10] sm:$0xff]
  %v383 = vld [vmem:[%s6 + $0x18] sm:$0xff]
  %385 = vset.pattern.permute.xlu0 0
  %386 = vperm.xlu0 %385, %v380
  %v387 = vpop.permute.xlu0 %386
  %390 = vset.pattern.permute.xlu0 0
  %391 = vperm.xlu0 %390, %v381
  %v392 = vpop.permute.xlu0 %391
  %395 = vset.pattern.permute.xlu0 0
  %396 = vperm.xlu0 %395, %v382
  %v397 = vpop.permute.xlu0 %396
  %400 = vset.pattern.permute.xlu0 0
  %401 = vperm.xlu0 %400, %v383
  %v402 = vpop.permute.xlu0 %401
  %v404 = vmul.f32 %v371, %v387
  %v405 = vmul.f32 %v373, %v392
  %v406 = vmul.f32 %v376, %v397
  %v407 = vmul.f32 %v378, %v402
  %v408 = vld [vmem:[%s7] sm:$0xff]
  %v409 = vld [vmem:[%s7 + $0x8] sm:$0xff]
  %v410 = vld [vmem:[%s7 + $0x10] sm:$0xff]
  %v411 = vld [vmem:[%s7 + $0x18] sm:$0xff]
  %413 = vset.pattern.permute.xlu0 0
  %414 = vperm.xlu0 %413, %v408
  %v415 = vpop.permute.xlu0 %414
  %418 = vset.pattern.permute.xlu0 0
  %419 = vperm.xlu0 %418, %v409
  %v420 = vpop.permute.xlu0 %419
  %423 = vset.pattern.permute.xlu0 0
  %424 = vperm.xlu0 %423, %v410
  %v425 = vpop.permute.xlu0 %424
  %428 = vset.pattern.permute.xlu0 0
  %429 = vperm.xlu0 %428, %v411
  %v430 = vpop.permute.xlu0 %429
  %v432 = vadd.f32 %v404, %v415
  %v433 = vadd.f32 %v405, %v420
  %v434 = vadd.f32 %v406, %v425
  %v435 = vadd.f32 %v407, %v430
  %v436 = vadd.f32 %v328, %v432
  %v437 = vadd.f32 %v329, %v433
  %v438 = vadd.f32 %v330, %v434
  %v439 = vadd.f32 %v331, %v435
  %v440 = vmax.f32 %v436, 0.0
  %v441 = vmax.f32 %v437, 0.0
  %v442 = vmax.f32 %v438, 0.0
  %v443 = vmax.f32 %v439, 0.0
  %444 = vst [vmem:[%s8] sm:$0xff] %v440
  %445 = vst [vmem:[%s8 + $0x8] sm:$0xff] %v441
  %446 = vst [vmem:[%s8 + $0x10] sm:$0xff] %v442
  %447 = vst [vmem:[%s8 + $0x18] sm:$0xff] %v443
  // Predicated region
  $region34: #{wide_resnet_forward.14} parent=0 // pred_check
    _
  $region35: #{wide_resnet_forward.14} parent=0 // pred_check_branch
    %449 = sbr.rel (0) target = $region37
  $region36: #{wide_resnet_forward.14} parent=0 // pred_region
    _
  $region37: #{wide_resnet_forward.14} parent=0 // pred_fallthru
    _
  // Predicated region
  $region38: #{wide_resnet_forward.14} parent=0 // pred_check
    _
  $region39: #{wide_resnet_forward.14} parent=0 // pred_check_branch
    %451 = sbr.rel (0) target = $region41
  $region40: #{wide_resnet_forward.14} parent=0 // pred_region
    _
  $region41: #{wide_resnet_forward.14} parent=0 // pred_fallthru
    _

// kernel: wide_resnet_forward.15
$region0: #{wide_resnet_forward.15}
  #allocation0 [shape = 'u32[]', space=smem, size = 0x4, offset = 0x4, fixed_abs, tag = 'smem constant byte address 0x4 - core index']
  #allocation1 [shape = 'u32[72,128]{1,0:T(1,128)}', space=vmem, size = 0x9000, scoped, tag = 'internal scratch']
  %s0 = inlined_call_operand.vmem [shape: bf16[288,32], index: 0, kind: input, shape index: {}]
  %s1 = inlined_call_operand.vmem [shape: bf16[52,288], index: 1, kind: input, shape index: {}]
  %s2 = inlined_call_operand.vmem [shape: f32[52,1], index: 2, kind: input, shape index: {}]
  %s3 = inlined_call_operand.vmem [shape: f32[52,1], index: 3, kind: input, shape index: {}]
  %s4 = inlined_call_operand.vmem [shape: bf16[52,32], index: 4, kind: input, shape index: {}]
  %s5 = inlined_call_operand.vmem [shape: f32[52,32], index: 5, kind: output, shape index: {0}]
  %s6 = inlined_call_operand.vmem [shape: f32[52,32], index: 6, kind: output, shape index: {1}]
  %7 = xla_tuple %s5, %s6
  %s8 = sld [smem:[#allocation0]]
  $region38: #{wide_resnet_forward.15} parent=0
    _
  %s10 = ssub.s32 1, %s8
  %s11 = scalar_select 0, %s10, %s8
  // Predicated region
  $region2: #{wide_resnet_forward.15} parent=0 // pred_check
    _
  $region3: #{wide_resnet_forward.15} parent=0 // pred_check_branch
    %13 = sbr.rel (0) target = $region5
  $region4: #{wide_resnet_forward.15} parent=0 // pred_region
    _
  $region5: #{wide_resnet_forward.15} parent=0 // pred_fallthru
    _
  // Predicated region
  $region6: #{wide_resnet_forward.15} parent=0 // pred_check
    _
  $region7: #{wide_resnet_forward.15} parent=0 // pred_check_branch
    %15 = sbr.rel (0) target = $region9
  $region8: #{wide_resnet_forward.15} parent=0 // pred_region
    _
  $region9: #{wide_resnet_forward.15} parent=0 // pred_fallthru
    _
  // Predicated region
  $region10: #{wide_resnet_forward.15} parent=0 // pred_check
    _
  $region11: #{wide_resnet_forward.15} parent=0 // pred_check_branch
    %17 = sbr.rel (0) target = $region13
  $region12: #{wide_resnet_forward.15} parent=0 // pred_region
    _
  $region13: #{wide_resnet_forward.15} parent=0 // pred_fallthru
    _
  // Predicated region
  $region14: #{wide_resnet_forward.15} parent=0 // pred_check
    _
  $region15: #{wide_resnet_forward.15} parent=0 // pred_check_branch
    %19 = sbr.rel (0) target = $region17
  $region16: #{wide_resnet_forward.15} parent=0 // pred_region
    _
  $region17: #{wide_resnet_forward.15} parent=0 // pred_fallthru
    _
  // Predicated region
  $region18: #{wide_resnet_forward.15} parent=0 // pred_check
    _
  $region19: #{wide_resnet_forward.15} parent=0 // pred_check_branch
    %21 = sbr.rel (0) target = $region21
  $region20: #{wide_resnet_forward.15} parent=0 // pred_region
    _
  $region21: #{wide_resnet_forward.15} parent=0 // pred_fallthru
    _
  %v23 = vld [vmem:[%s0] sm:$0xf]
  %v24 = vld [vmem:[%s0 + $0x4] sm:$0xf]
  %v25 = vld [vmem:[%s0 + $0x8] sm:$0xf]
  %v26 = vld [vmem:[%s0 + $0xc] sm:$0xf]
  %v27 = vld [vmem:[%s0 + $0x10] sm:$0xf]
  %v28 = vld [vmem:[%s0 + $0x14] sm:$0xf]
  %v29 = vld [vmem:[%s0 + $0x18] sm:$0xf]
  %v30 = vld [vmem:[%s0 + $0x1c] sm:$0xf]
  %v31 = vld [vmem:[%s0 + $0x20] sm:$0xf]
  %v32 = vld [vmem:[%s0 + $0x24] sm:$0xf]
  %v33 = vld [vmem:[%s0 + $0x28] sm:$0xf]
  %v34 = vld [vmem:[%s0 + $0x2c] sm:$0xf]
  %v35 = vld [vmem:[%s0 + $0x30] sm:$0xf]
  %v36 = vld [vmem:[%s0 + $0x34] sm:$0xf]
  %v37 = vld [vmem:[%s0 + $0x38] sm:$0xf]
  %v38 = vld [vmem:[%s0 + $0x3c] sm:$0xf]
  %v39 = vld [vmem:[%s0 + $0x40] sm:$0xf]
  %v40 = vld [vmem:[%s0 + $0x44] sm:$0xf]
  %v41 = vld [vmem:[%s0 + $0x48] sm:$0xf]
  %v42 = vld [vmem:[%s0 + $0x4c] sm:$0xf]
  %v43 = vld [vmem:[%s0 + $0x50] sm:$0xf]
  %v44 = vld [vmem:[%s0 + $0x54] sm:$0xf]
  %v45 = vld [vmem:[%s0 + $0x58] sm:$0xf]
  %v46 = vld [vmem:[%s0 + $0x5c] sm:$0xf]
  %v47 = vld [vmem:[%s0 + $0x60] sm:$0xf]
  %v48 = vld [vmem:[%s0 + $0x64] sm:$0xf]
  %v49 = vld [vmem:[%s0 + $0x68] sm:$0xf]
  %v50 = vld [vmem:[%s0 + $0x6c] sm:$0xf]
  %v51 = vld [vmem:[%s0 + $0x70] sm:$0xf]
  %v52 = vld [vmem:[%s0 + $0x74] sm:$0xf]
  %v53 = vld [vmem:[%s0 + $0x78] sm:$0xf]
  %v54 = vld [vmem:[%s0 + $0x7c] sm:$0xf]
  %v55 = vld [vmem:[%s0 + $0x80] sm:$0xf]
  %v56 = vld [vmem:[%s0 + $0x84] sm:$0xf]
  %v57 = vld [vmem:[%s0 + $0x88] sm:$0xf]
  %v58 = vld [vmem:[%s0 + $0x8c] sm:$0xf]
  %v59 = vld [vmem:[%s1] sm:$0xff]
  %v60 = vld [vmem:[%s1 + $0x8] sm:$0xf]
  %v61 = vld [vmem:[%s1 + $0xc] sm:$0xff]
  %v62 = vld [vmem:[%s1 + $0x14] sm:$0xf]
  %v63 = vld [vmem:[%s1 + $0x18] sm:$0xff]
  %v64 = vld [vmem:[%s1 + $0x20] sm:$0xf]
  %v65 = vld [vmem:[%s1 + $0x24] sm:$0xff]
  %v66 = vld [vmem:[%s1 + $0x2c] sm:$0xf]
  %v67 = vld [vmem:[%s1 + $0x30] sm:$0xff]
  %v68 = vld [vmem:[%s1 + $0x38] sm:$0xf]
  %v69 = vld [vmem:[%s1 + $0x3c] sm:$0xff]
  %v70 = vld [vmem:[%s1 + $0x44] sm:$0xf]
  %v71 = vld [vmem:[%s1 + $0x48] sm:$0x33]
  %v72 = vld [vmem:[%s1 + $0x50] sm:$0x3]
  %v87 = vunpack.c.l.b16 %v59
  %v88 = vunpack.c.h.b16 %v59
  %v89 = vunpack.c.l.b16 %v60
  %v90 = vunpack.c.l.b16 %v61
  %v91 = vunpack.c.h.b16 %v61
  %v92 = vunpack.c.l.b16 %v62
  %v93 = vunpack.c.l.b16 %v63
  %v94 = vunpack.c.h.b16 %v63
  %v95 = vunpack.c.l.b16 %v64
  %v96 = vunpack.c.l.b16 %v65
  %v97 = vunpack.c.h.b16 %v65
  %v98 = vunpack.c.l.b16 %v66
  %v99 = vunpack.c.l.b16 %v67
  %v100 = vunpack.c.h.b16 %v67
  %v101 = vunpack.c.l.b16 %v68
  %v102 = vunpack.c.l.b16 %v69
  %v103 = vunpack.c.h.b16 %v69
  %v104 = vunpack.c.l.b16 %v70
  %v105 = vunpack.c.l.b16 %v71
  %v106 = vunpack.c.h.b16 %v71
  %v107 = vunpack.c.l.b16 %v72
  %v108 = vpack.c.b16 %v90, %v87
  %v109 = vpack.c.b16 %v91, %v88
  %v110 = vpack.c.b16 %v92, %v89
  %v111 = vpack.c.b16 %v96, %v93
  %v112 = vpack.c.b16 %v97, %v94
  %v113 = vpack.c.b16 %v98, %v95
  %v114 = vpack.c.b16 %v102, %v99
  %v115 = vpack.c.b16 %v103, %v100
  %v116 = vpack.c.b16 %v104, %v101
  %v117 = vpack.c.b16 %v105, %v105
  %v118 = vpack.c.b16 %v106, %v106
  %v119 = vpack.c.b16 %v107, %v107
  %v164 = vunpack.c.l.b16 %v23
  %v165 = vunpack.c.l.b16 %v24
  %v166 = vunpack.c.l.b16 %v25
  %v167 = vunpack.c.l.b16 %v26
  %v168 = vunpack.c.l.b16 %v27
  %v169 = vunpack.c.l.b16 %v28
  %v170 = vunpack.c.l.b16 %v29
  %v171 = vunpack.c.l.b16 %v30
  %v172 = vunpack.c.l.b16 %v31
  %v173 = vunpack.c.l.b16 %v32
  %v174 = vunpack.c.l.b16 %v33
  %v175 = vunpack.c.l.b16 %v34
  %v176 = vunpack.c.l.b16 %v35
  %v177 = vunpack.c.l.b16 %v36
  %v178 = vunpack.c.l.b16 %v37
  %v179 = vunpack.c.l.b16 %v38
  %v180 = vunpack.c.l.b16 %v39
  %v181 = vunpack.c.l.b16 %v40
  %v182 = vunpack.c.l.b16 %v41
  %v183 = vunpack.c.l.b16 %v42
  %v184 = vunpack.c.l.b16 %v43
  %v185 = vunpack.c.l.b16 %v44
  %v186 = vunpack.c.l.b16 %v45
  %v187 = vunpack.c.l.b16 %v46
  %v188 = vunpack.c.l.b16 %v47
  %v189 = vunpack.c.l.b16 %v48
  %v190 = vunpack.c.l.b16 %v49
  %v191 = vunpack.c.l.b16 %v50
  %v192 = vunpack.c.l.b16 %v51
  %v193 = vunpack.c.l.b16 %v52
  %v194 = vunpack.c.l.b16 %v53
  %v195 = vunpack.c.l.b16 %v54
  %v196 = vunpack.c.l.b16 %v55
  %v197 = vunpack.c.l.b16 %v56
  %v198 = vunpack.c.l.b16 %v57
  %v199 = vunpack.c.l.b16 %v58
  %v200 = vpack.c.b16 %v165, %v164
  %v201 = vpack.c.b16 %v167, %v166
  %v202 = vpack.c.b16 %v169, %v168
  %v203 = vpack.c.b16 %v171, %v170
  %v204 = vpack.c.b16 %v173, %v172
  %v205 = vpack.c.b16 %v175, %v174
  %v206 = vpack.c.b16 %v177, %v176
  %v207 = vpack.c.b16 %v179, %v178
  %v208 = vpack.c.b16 %v181, %v180
  %v209 = vpack.c.b16 %v183, %v182
  %v210 = vpack.c.b16 %v185, %v184
  %v211 = vpack.c.b16 %v187, %v186
  %v212 = vpack.c.b16 %v189, %v188
  %v213 = vpack.c.b16 %v191, %v190
  %v214 = vpack.c.b16 %v193, %v192
  %v215 = vpack.c.b16 %v195, %v194
  %v216 = vpack.c.b16 %v197, %v196
  %v217 = vpack.c.b16 %v199, %v198
  %vm236 = vcmask 261120
  %v238 = vsel %vm236, %v110, 0
  %v241 = vsel %vm236, %v113, 0
  %v244 = vsel %vm236, %v116, 0
  %v247 = vsel %vm236, %v119, 0
  %249 = vmatpush.bf16.msra.mxu0 %v207
  %250 = vmatpush.bf16.msra.mxu0 %v206
  %251 = vmatpush.bf16.msra.mxu0 %v205
  %252 = vmatpush.bf16.msra.mxu0 %v204
  %253 = vmatpush.bf16.msra.mxu0 %v203
  %254 = vmatpush.bf16.msra.mxu0 %v202
  %255 = vmatpush.bf16.msra.mxu0 %v201
  %256 = vmatpush.bf16.msra.mxu0 %v200
  %257 = vmatmul.bf16.gmra.mxu0 %v108
  %v258 = vpop.f32.mrf.mxu0
  %v259 = vadd.f32 0.0, %v258
  %v260 = vpop.f32.mrf.mxu0
  %v261 = vadd.f32 0.0, %v260
  %262 = vmatmul.bf16.gmra.mxu0 %v111
  %v263 = vpop.f32.mrf.mxu0
  %v264 = vadd.f32 0.0, %v263
  %v265 = vpop.f32.mrf.mxu0
  %v266 = vadd.f32 0.0, %v265
  %267 = vmatmul.bf16.gmra.mxu0 %v114
  %v268 = vpop.f32.mrf.mxu0
  %v269 = vadd.f32 0.0, %v268
  %v270 = vpop.f32.mrf.mxu0
  %v271 = vadd.f32 0.0, %v270
  %272 = vmatmul.bf16.gmra.mxu0 %v117
  %v273 = vpop.f32.mrf.mxu0
  %v274 = vadd.f32 0.0, %v273
  %v275 = vpop.f32.mrf.mxu0
  %276 = vdwg.mxu0
  %277 = vmatpush.bf16.msra.mxu0 %v215
  %278 = vmatpush.bf16.msra.mxu0 %v214
  %279 = vmatpush.bf16.msra.mxu0 %v213
  %280 = vmatpush.bf16.msra.mxu0 %v212
  %281 = vmatpush.bf16.msra.mxu0 %v211
  %282 = vmatpush.bf16.msra.mxu0 %v210
  %283 = vmatpush.bf16.msra.mxu0 %v209
  %284 = vmatpush.bf16.msra.mxu0 %v208
  %285 = vmatmul.bf16.gmra.mxu0 %v109
  %v286 = vpop.f32.mrf.mxu0
  %v287 = vadd.f32 %v259, %v286
  %v288 = vpop.f32.mrf.mxu0
  %v289 = vadd.f32 %v261, %v288
  %290 = vmatmul.bf16.gmra.mxu0 %v112
  %v291 = vpop.f32.mrf.mxu0
  %v292 = vadd.f32 %v264, %v291
  %v293 = vpop.f32.mrf.mxu0
  %v294 = vadd.f32 %v266, %v293
  %295 = vmatmul.bf16.gmra.mxu0 %v115
  %v296 = vpop.f32.mrf.mxu0
  %v297 = vadd.f32 %v269, %v296
  %v298 = vpop.f32.mrf.mxu0
  %v299 = vadd.f32 %v271, %v298
  %300 = vmatmul.bf16.gmra.mxu0 %v118
  %v301 = vpop.f32.mrf.mxu0
  %v302 = vadd.f32 %v274, %v301
  %v303 = vpop.f32.mrf.mxu0
  %304 = vdwg.mxu0
  %305 = vmatpush.bf16.msra.mxu0 0
  %306 = vmatpush.bf16.msra.mxu0 0
  %307 = vmatpush.bf16.msra.mxu0 0
  %308 = vmatpush.bf16.msra.mxu0 0
  %309 = vmatpush.bf16.msra.mxu0 0
  %310 = vmatpush.bf16.msra.mxu0 0
  %311 = vmatpush.bf16.msra.mxu0 %v217
  %312 = vmatpush.bf16.msra.mxu0 %v216
  %313 = vmatmul.bf16.gmra.mxu0 %v238
  %v314 = vpop.f32.mrf.mxu0
  %v315 = vadd.f32 %v287, %v314
  %v316 = vpop.f32.mrf.mxu0
  %v317 = vadd.f32 %v289, %v316
  %318 = vmatmul.bf16.gmra.mxu0 %v241
  %v319 = vpop.f32.mrf.mxu0
  %v320 = vadd.f32 %v292, %v319
  %v321 = vpop.f32.mrf.mxu0
  %v322 = vadd.f32 %v294, %v321
  %323 = vmatmul.bf16.gmra.mxu0 %v244
  %v324 = vpop.f32.mrf.mxu0
  %v325 = vadd.f32 %v297, %v324
  %v326 = vpop.f32.mrf.mxu0
  %v327 = vadd.f32 %v299, %v326
  %328 = vmatmul.bf16.gmra.mxu0 %v247
  %v329 = vpop.f32.mrf.mxu0
  %v330 = vadd.f32 %v302, %v329
  %v331 = vpop.f32.mrf.mxu0
  %332 = vdwg.mxu0
  %v333 = vld [vmem:[%s2] sm:$0xff]
  %v334 = vld [vmem:[%s2 + $0x8] sm:$0xff]
  %v335 = vld [vmem:[%s2 + $0x10] sm:$0xff]
  %v336 = vld [vmem:[%s2 + $0x18] sm:$0xff]
  %v337 = vld [vmem:[%s2 + $0x20] sm:$0xff]
  %v338 = vld [vmem:[%s2 + $0x28] sm:$0xff]
  %v339 = vld [vmem:[%s2 + $0x30] sm:$0xf]
  %341 = vset.pattern.permute.xlu0 0
  %342 = vperm.xlu0 %341, %v333
  %v343 = vpop.permute.xlu0 %342
  %346 = vset.pattern.permute.xlu0 0
  %347 = vperm.xlu0 %346, %v334
  %v348 = vpop.permute.xlu0 %347
  %351 = vset.pattern.permute.xlu0 0
  %352 = vperm.xlu0 %351, %v335
  %v353 = vpop.permute.xlu0 %352
  %356 = vset.pattern.permute.xlu0 0
  %357 = vperm.xlu0 %356, %v336
  %v358 = vpop.permute.xlu0 %357
  %361 = vset.pattern.permute.xlu0 0
  %362 = vperm.xlu0 %361, %v337
  %v363 = vpop.permute.xlu0 %362
  %366 = vset.pattern.permute.xlu0 0
  %367 = vperm.xlu0 %366, %v338
  %v368 = vpop.permute.xlu0 %367
  %371 = vset.pattern.permute.xlu0 0
  %372 = vperm.xlu0 %371, %v339
  %v373 = vpop.permute.xlu0 %372
  %v375 = vmul.f32 %v315, %v343
  %v376 = vmul.f32 %v317, %v348
  %v377 = vmul.f32 %v320, %v353
  %v378 = vmul.f32 %v322, %v358
  %v379 = vmul.f32 %v325, %v363
  %v380 = vmul.f32 %v327, %v368
  %v381 = vmul.f32 %v330, %v373
  %v382 = vld [vmem:[%s3] sm:$0xff]
  %v383 = vld [vmem:[%s3 + $0x8] sm:$0xff]
  %v384 = vld [vmem:[%s3 + $0x10] sm:$0xff]
  %v385 = vld [vmem:[%s3 + $0x18] sm:$0xff]
  %v386 = vld [vmem:[%s3 + $0x20] sm:$0xff]
  %v387 = vld [vmem:[%s3 + $0x28] sm:$0xff]
  %v388 = vld [vmem:[%s3 + $0x30] sm:$0xf]
  %390 = vset.pattern.permute.xlu0 0
  %391 = vperm.xlu0 %390, %v382
  %v392 = vpop.permute.xlu0 %391
  %395 = vset.pattern.permute.xlu0 0
  %396 = vperm.xlu0 %395, %v383
  %v397 = vpop.permute.xlu0 %396
  %400 = vset.pattern.permute.xlu0 0
  %401 = vperm.xlu0 %400, %v384
  %v402 = vpop.permute.xlu0 %401
  %405 = vset.pattern.permute.xlu0 0
  %406 = vperm.xlu0 %405, %v385
  %v407 = vpop.permute.xlu0 %406
  %410 = vset.pattern.permute.xlu0 0
  %411 = vperm.xlu0 %410, %v386
  %v412 = vpop.permute.xlu0 %411
  %415 = vset.pattern.permute.xlu0 0
  %416 = vperm.xlu0 %415, %v387
  %v417 = vpop.permute.xlu0 %416
  %420 = vset.pattern.permute.xlu0 0
  %421 = vperm.xlu0 %420, %v388
  %v422 = vpop.permute.xlu0 %421
  %v424 = vadd.f32 %v375, %v392
  %v425 = vadd.f32 %v376, %v397
  %v426 = vadd.f32 %v377, %v402
  %v427 = vadd.f32 %v378, %v407
  %v428 = vadd.f32 %v379, %v412
  %v429 = vadd.f32 %v380, %v417
  %v430 = vadd.f32 %v381, %v422
  %v431 = vmax.f32 %v424, 0.0
  %v432 = vmax.f32 %v425, 0.0
  %v433 = vmax.f32 %v426, 0.0
  %v434 = vmax.f32 %v427, 0.0
  %v435 = vmax.f32 %v428, 0.0
  %v436 = vmax.f32 %v429, 0.0
  %v437 = vmax.f32 %v430, 0.0
  %438 = vst.msk [vmem:[%s5] sm:$0xff] %vm236, %v431
  %439 = vst.msk [vmem:[%s5 + $0x8] sm:$0xff] %vm236, %v432
  %440 = vst.msk [vmem:[%s5 + $0x10] sm:$0xff] %vm236, %v433
  %441 = vst.msk [vmem:[%s5 + $0x18] sm:$0xff] %vm236, %v434
  %442 = vst.msk [vmem:[%s5 + $0x20] sm:$0xff] %vm236, %v435
  %443 = vst.msk [vmem:[%s5 + $0x28] sm:$0xff] %vm236, %v436
  %vm444 = vcmask 257024
  %445 = vst.msk [vmem:[%s5 + $0x30] sm:$0xf] %vm444, %v437
  %v446 = vld [vmem:[%s4] sm:$0xf]
  %v447 = vld [vmem:[%s4 + $0x4] sm:$0xf]
  %v448 = vld [vmem:[%s4 + $0x8] sm:$0xf]
  %v449 = vld [vmem:[%s4 + $0xc] sm:$0xf]
  %v450 = vld [vmem:[%s4 + $0x10] sm:$0xf]
  %v451 = vld [vmem:[%s4 + $0x14] sm:$0xf]
  %v452 = vld [vmem:[%s4 + $0x18] sm:$0x3]
  %v460 = vunpack.c.l.b16 %v446
  %v461 = vunpack.c.l.b16 %v447
  %v462 = vunpack.c.l.b16 %v448
  %v463 = vunpack.c.l.b16 %v449
  %v464 = vunpack.c.l.b16 %v450
  %v465 = vunpack.c.l.b16 %v451
  %v466 = vunpack.c.l.b16 %v452
  %v467 = vpack.c.b16 %v461, %v460
  %v468 = vpack.c.b16 %v463, %v462
  %v469 = vpack.c.b16 %v465, %v464
  %v470 = vpack.c.b16 %v466, %v466
  %v472 = vsel %vm236, %v467, 0
  %v475 = vsel %vm236, %v468, 0
  %v478 = vsel %vm236, %v469, 0
  %v481 = vsel %vm236, %v470, 0
  %483 = vmatpush.bf16.msra.mxu0 0
  %484 = vmatpush.bf16.msra.mxu0 0
  %485 = vmatpush.bf16.msra.mxu0 0
  %486 = vmatpush.bf16.msra.mxu0 0
  %487 = vmatpush.bf16.msra.mxu0 0
  %488 = vmatpush.bf16.msra.mxu0 0
  %489 = vmatpush.bf16.msra.mxu0 %v209
  %490 = vmatpush.bf16.msra.mxu0 %v208
  %491 = vmatmul.bf16.gmra.mxu0 %v472
  %v492 = vpop.f32.mrf.mxu0
  %v493 = vadd.f32 0.0, %v492
  %v494 = vpop.f32.mrf.mxu0
  %v495 = vadd.f32 0.0, %v494
  %496 = vmatmul.bf16.gmra.mxu0 %v475
  %v497 = vpop.f32.mrf.mxu0
  %v498 = vadd.f32 0.0, %v497
  %v499 = vpop.f32.mrf.mxu0
  %v500 = vadd.f32 0.0, %v499
  %501 = vmatmul.bf16.gmra.mxu0 %v478
  %v502 = vpop.f32.mrf.mxu0
  %v503 = vadd.f32 0.0, %v502
  %v504 = vpop.f32.mrf.mxu0
  %v505 = vadd.f32 0.0, %v504
  %506 = vmatmul.bf16.gmra.mxu0 %v481
  %v507 = vpop.f32.mrf.mxu0
  %v508 = vadd.f32 0.0, %v507
  %v509 = vpop.f32.mrf.mxu0
  %510 = vdwg.mxu0
  %511 = vst.msk [vmem:[%s6] sm:$0xff] %vm236, %v493
  %512 = vst.msk [vmem:[%s6 + $0x8] sm:$0xff] %vm236, %v495
  %513 = vst.msk [vmem:[%s6 + $0x10] sm:$0xff] %vm236, %v498
  %514 = vst.msk [vmem:[%s6 + $0x18] sm:$0xff] %vm236, %v500
  %515 = vst.msk [vmem:[%s6 + $0x20] sm:$0xff] %vm236, %v503
  %516 = vst.msk [vmem:[%s6 + $0x28] sm:$0xff] %vm236, %v505
  %517 = vst.msk [vmem:[%s6 + $0x30] sm:$0xf] %vm444, %v508
  // Predicated region
  $region22: #{wide_resnet_forward.15} parent=0 // pred_check
    _
  $region23: #{wide_resnet_forward.15} parent=0 // pred_check_branch
    %519 = sbr.rel (0) target = $region25
  $region24: #{wide_resnet_forward.15} parent=0 // pred_region
    _
  $region25: #{wide_resnet_forward.15} parent=0 // pred_fallthru
    _
  // Predicated region
  $region26: #{wide_resnet_forward.15} parent=0 // pred_check
    _
  $region27: #{wide_resnet_forward.15} parent=0 // pred_check_branch
    %521 = sbr.rel (0) target = $region29
  $region28: #{wide_resnet_forward.15} parent=0 // pred_region
    _
  $region29: #{wide_resnet_forward.15} parent=0 // pred_fallthru
    _
  // Predicated region
  $region30: #{wide_resnet_forward.15} parent=0 // pred_check
    _
  $region31: #{wide_resnet_forward.15} parent=0 // pred_check_branch
    %523 = sbr.rel (0) target = $region33
  $region32: #{wide_resnet_forward.15} parent=0 // pred_region
    _
  $region33: #{wide_resnet_forward.15} parent=0 // pred_fallthru
    _
  // Predicated region
  $region34: #{wide_resnet_forward.15} parent=0 // pred_check
    _
  $region35: #{wide_resnet_forward.15} parent=0 // pred_check_branch
    %525 = sbr.rel (0) target = $region37
  $region36: #{wide_resnet_forward.15} parent=0 // pred_region
    _
  $region37: #{wide_resnet_forward.15} parent=0 // pred_fallthru
    _

// kernel: wide_resnet_forward.16
$region0: #{wide_resnet_forward.16}
  #allocation0 [shape = 'u32[]', space=smem, size = 0x4, offset = 0x4, fixed_abs, tag = 'smem constant byte address 0x4 - core index']
  #allocation1 [shape = 'u32[72,128]{1,0:T(1,128)}', space=vmem, size = 0x9000, scoped, tag = 'internal scratch']
  %s0 = inlined_call_operand.vmem [shape: bf16[2,16,20], index: 0, kind: input, shape index: {}]
  %s1 = inlined_call_operand.vmem [shape: bf16[2,16,20], index: 1, kind: input, shape index: {}]
  %s2 = inlined_call_operand.vmem [shape: bf16[2,16,12], index: 2, kind: input, shape index: {}]
  %s3 = inlined_call_operand.vmem [shape: f32[2,16,16], index: 3, kind: input, shape index: {}]
  %s4 = inlined_call_operand.vmem [shape: bf16[12,12], index: 4, kind: input, shape index: {}]
  %s5 = inlined_call_operand.vmem [shape: f32[1,12], index: 5, kind: input, shape index: {}]
  %s6 = inlined_call_operand.vmem [shape: f32[1,12], index: 6, kind: input, shape index: {}]
  %s7 = inlined_call_operand.vmem [shape: f32[32,12], index: 7, kind: output, shape index: {}]
  %s8 = sld [smem:[#allocation0]]
  $region38: #{wide_resnet_forward.16} parent=0
    _
  %s10 = ssub.s32 1, %s8
  %s11 = scalar_select 0, %s10, %s8
  // Predicated region
  $region2: #{wide_resnet_forward.16} parent=0 // pred_check
    _
  $region3: #{wide_resnet_forward.16} parent=0 // pred_check_branch
    %13 = sbr.rel (0) target = $region5
  $region4: #{wide_resnet_forward.16} parent=0 // pred_region
    _
  $region5: #{wide_resnet_forward.16} parent=0 // pred_fallthru
    _
  // Predicated region
  $region6: #{wide_resnet_forward.16} parent=0 // pred_check
    _
  $region7: #{wide_resnet_forward.16} parent=0 // pred_check_branch
    %15 = sbr.rel (0) target = $region9
  $region8: #{wide_resnet_forward.16} parent=0 // pred_region
    _
  $region9: #{wide_resnet_forward.16} parent=0 // pred_fallthru
    _
  // Predicated region
  $region10: #{wide_resnet_forward.16} parent=0 // pred_check
    _
  $region11: #{wide_resnet_forward.16} parent=0 // pred_check_branch
    %17 = sbr.rel (0) target = $region13
  $region12: #{wide_resnet_forward.16} parent=0 // pred_region
    _
  $region13: #{wide_resnet_forward.16} parent=0 // pred_fallthru
    _
  // Predicated region
  $region14: #{wide_resnet_forward.16} parent=0 // pred_check
    _
  $region15: #{wide_resnet_forward.16} parent=0 // pred_check_branch
    %19 = sbr.rel (0) target = $region17
  $region16: #{wide_resnet_forward.16} parent=0 // pred_region
    _
  $region17: #{wide_resnet_forward.16} parent=0 // pred_fallthru
    _
  // Predicated region
  $region18: #{wide_resnet_forward.16} parent=0 // pred_check
    _
  $region19: #{wide_resnet_forward.16} parent=0 // pred_check_branch
    %21 = sbr.rel (0) target = $region21
  $region20: #{wide_resnet_forward.16} parent=0 // pred_region
    _
  $region21: #{wide_resnet_forward.16} parent=0 // pred_fallthru
    _
  // Predicated region
  $region22: #{wide_resnet_forward.16} parent=0 // pred_check
    _
  $region23: #{wide_resnet_forward.16} parent=0 // pred_check_branch
    %23 = sbr.rel (0) target = $region25
  $region24: #{wide_resnet_forward.16} parent=0 // pred_region
    _
  $region25: #{wide_resnet_forward.16} parent=0 // pred_fallthru
    _
  // Predicated region
  $region26: #{wide_resnet_forward.16} parent=0 // pred_check
    _
  $region27: #{wide_resnet_forward.16} parent=0 // pred_check_branch
    %25 = sbr.rel (0) target = $region29
  $region28: #{wide_resnet_forward.16} parent=0 // pred_region
    _
  $region29: #{wide_resnet_forward.16} parent=0 // pred_fallthru
    _
  %v27 = vld [vmem:[%s0] sm:$0xf]
  %v28 = vld [vmem:[%s0 + $0x4] sm:$0xf]
  %v29 = vld [vmem:[%s0 + $0x8] sm:$0xf]
  %v30 = vld [vmem:[%s0 + $0xc] sm:$0xf]
  %v31 = vld [vmem:[%s1] sm:$0xf]
  %v32 = vld [vmem:[%s1 + $0x4] sm:$0xf]
  %v33 = vld [vmem:[%s1 + $0x8] sm:$0xf]
  %v34 = vld [vmem:[%s1 + $0xc] sm:$0xf]
  %v35 = vld [vmem:[%s3] sm:$0xff]
  %v36 = vld [vmem:[%s3 + $0x8] sm:$0xff]
  %v37 = vld [vmem:[%s3 + $0x10] sm:$0xff]
  %v38 = vld [vmem:[%s3 + $0x18] sm:$0xff]
  %v41 = vunpack.c.l.b16 %v27
  %v42 = vunpack.c.l.b16 %v28
  %v43 = vpack.c.b16 %v42, %v41
  %v46 = vunpack.c.l.b16 %v31
  %v47 = vunpack.c.l.b16 %v32
  %v48 = vpack.c.b16 %v47, %v46
  %vm49 = vcmask 162816
  %v51 = vsel %vm49, %v43, 0
  %v54 = vsel %vm49, %v48, 0
  %56 = vmatpush.bf16.xpose.msra.mxu0 0
  %57 = vmatpush.bf16.xpose.msra.mxu0 0
  %58 = vmatpush.bf16.xpose.msra.mxu0 0
  %59 = vmatpush.bf16.xpose.msra.mxu0 0
  %60 = vmatpush.bf16.xpose.msra.mxu0 0
  %61 = vmatpush.bf16.xpose.msra.mxu0 0
  %62 = vmatpush.bf16.xpose.msra.mxu0 0
  %63 = vmatpush.bf16.xpose.msra.mxu0 %v54
  %64 = vmatmul.bf16.gmra.mxu0 %v51
  %v65 = vpop.f32.mrf.mxu0
  %v66 = vadd.f32 %v35, %v65
  %v67 = vpop.f32.mrf.mxu0
  %v68 = vadd.f32 %v36, %v67
  %69 = vdwg.mxu0
  %v72 = vunpack.c.l.b16 %v29
  %v73 = vunpack.c.l.b16 %v30
  %v74 = vpack.c.b16 %v73, %v72
  %v77 = vunpack.c.l.b16 %v33
  %v78 = vunpack.c.l.b16 %v34
  %v79 = vpack.c.b16 %v78, %v77
  %v81 = vsel %vm49, %v74, 0
  %v84 = vsel %vm49, %v79, 0
  %86 = vmatpush.bf16.xpose.msra.mxu0 0
  %87 = vmatpush.bf16.xpose.msra.mxu0 0
  %88 = vmatpush.bf16.xpose.msra.mxu0 0
  %89 = vmatpush.bf16.xpose.msra.mxu0 0
  %90 = vmatpush.bf16.xpose.msra.mxu0 0
  %91 = vmatpush.bf16.xpose.msra.mxu0 0
  %92 = vmatpush.bf16.xpose.msra.mxu0 0
  %93 = vmatpush.bf16.xpose.msra.mxu0 %v84
  %94 = vmatmul.bf16.gmra.mxu0 %v81
  %v95 = vpop.f32.mrf.mxu0
  %v96 = vadd.f32 %v37, %v95
  %v97 = vpop.f32.mrf.mxu0
  %v98 = vadd.f32 %v38, %v97
  %99 = vdwg.mxu0
  %vm100 = vcmask 130048
  %v101 = vsel %vm100, %v66, -inf
  %102 = vmax.xlane.f32.xlu0 %v101
  %v103 = vpop.xlane.xlu0 %102
  %v104 = vsel %vm100, %v68, -inf
  %105 = vmax.xlane.f32.xlu0 %v104
  %v106 = vpop.xlane.xlu0 %105
  %v107 = vsel %vm100, %v96, -inf
  %108 = vmax.xlane.f32.xlu0 %v107
  %v109 = vpop.xlane.xlu0 %108
  %v110 = vsel %vm100, %v98, -inf
  %111 = vmax.xlane.f32.xlu0 %v110
  %v112 = vpop.xlane.xlu0 %111
  %v113 = vsub.f32 %v66, %v103
  %v114 = vsub.f32 %v68, %v106
  %v115 = vsub.f32 %v96, %v109
  %v116 = vsub.f32 %v98, %v112
  %v117 = vmul.f32 %v113, 1.442695
  %v118 = vpow.pop %v117
  %v119 = vmul.f32 %v114, 1.442695
  %v120 = vpow.pop %v119
  %v121 = vmul.f32 %v115, 1.442695
  %v122 = vpow.pop %v121
  %v123 = vmul.f32 %v116, 1.442695
  %v124 = vpow.pop %v123
  %v125 = vsel %vm100, %v118, 0.0
  %126 = vadd.xlane.f32.xlu0 %v125
  %v127 = vpop.xlane.xlu0 %126
  %v128 = vsel %vm100, %v120, 0.0
  %129 = vadd.xlane.f32.xlu0 %v128
  %v130 = vpop.xlane.xlu0 %129
  %v131 = vsel %vm100, %v122, 0.0
  %132 = vadd.xlane.f32.xlu0 %v131
  %v133 = vpop.xlane.xlu0 %132
  %v134 = vsel %vm100, %v124, 0.0
  %135 = vadd.xlane.f32.xlu0 %v134
  %v136 = vpop.xlane.xlu0 %135
  %v137 = vrcp.pop %v127
  %v138 = vrcp.pop %v130
  %v139 = vrcp.pop %v133
  %v140 = vrcp.pop %v136
  %v141 = vmul.f32 %v118, %v137
  %v142 = vmul.f32 %v120, %v138
  %v143 = vmul.f32 %v122, %v139
  %v144 = vmul.f32 %v124, %v140
  %v145 = vpack.c.bf16 %v141, %v141
  %v146 = vpack.c.bf16 %v142, %v142
  %v147 = vpack.c.bf16 %v143, %v143
  %v148 = vpack.c.bf16 %v144, %v144
  %v149 = vld [vmem:[%s2] sm:$0xf]
  %v150 = vld [vmem:[%s2 + $0x4] sm:$0xf]
  %v151 = vld [vmem:[%s2 + $0x8] sm:$0xf]
  %v152 = vld [vmem:[%s2 + $0xc] sm:$0xf]
  %v155 = vunpack.c.l.b16 %v145
  %v156 = vunpack.c.l.b16 %v146
  %v157 = vpack.c.b16 %v156, %v155
  %v160 = vunpack.c.l.b16 %v149
  %v161 = vunpack.c.l.b16 %v150
  %v162 = vpack.c.b16 %v161, %v160
  %v165 = vsel %vm100, %v157, 0
  %167 = vmatpush.bf16.msra.mxu0 0
  %168 = vmatpush.bf16.msra.mxu0 0
  %169 = vmatpush.bf16.msra.mxu0 0
  %170 = vmatpush.bf16.msra.mxu0 0
  %171 = vmatpush.bf16.msra.mxu0 0
  %172 = vmatpush.bf16.msra.mxu0 0
  %173 = vmatpush.bf16.msra.mxu0 0
  %174 = vmatpush.bf16.msra.mxu0 %v162
  %175 = vmatmul.bf16.gmra.mxu0 %v165
  %v176 = vpop.f32.mrf.mxu0
  %v177 = vadd.f32 0.0, %v176
  %v178 = vpop.f32.mrf.mxu0
  %v179 = vadd.f32 0.0, %v178
  %180 = vdwg.mxu0
  %v183 = vunpack.c.l.b16 %v147
  %v184 = vunpack.c.l.b16 %v148
  %v185 = vpack.c.b16 %v184, %v183
  %v188 = vunpack.c.l.b16 %v151
  %v189 = vunpack.c.l.b16 %v152
  %v190 = vpack.c.b16 %v189, %v188
  %v193 = vsel %vm100, %v185, 0
  %195 = vmatpush.bf16.msra.mxu0 0
  %196 = vmatpush.bf16.msra.mxu0 0
  %197 = vmatpush.bf16.msra.mxu0 0
  %198 = vmatpush.bf16.msra.mxu0 0
  %199 = vmatpush.bf16.msra.mxu0 0
  %200 = vmatpush.bf16.msra.mxu0 0
  %201 = vmatpush.bf16.msra.mxu0 0
  %202 = vmatpush.bf16.msra.mxu0 %v190
  %203 = vmatmul.bf16.gmra.mxu0 %v193
  %v204 = vpop.f32.mrf.mxu0
  %v205 = vadd.f32 0.0, %v204
  %v206 = vpop.f32.mrf.mxu0
  %v207 = vadd.f32 0.0, %v206
  %208 = vdwg.mxu0
  %v209 = vpack.c.bf16 %v179, %v177
  %v210 = vpack.c.bf16 %v207, %v205
  %v211 = vld [vmem:[%s4] sm:$0xf]
  %v212 = vld [vmem:[%s4 + $0x4] sm:$0x3]
  %v215 = vunpack.c.l.b16 %v211
  %v216 = vunpack.c.l.b16 %v212
  %v217 = vpack.c.b16 %v216, %v215
  %vm218 = vcmask 97280
  %v220 = vsel %vm218, %v209, 0
  %v223 = vsel %vm218, %v210, 0
  %vm225 = vcmask 1045504
  %v227 = vsel %vm225, %v217, 0
  %229 = vmatpush.bf16.msra.mxu0 0
  %230 = vmatpush.bf16.msra.mxu0 0
  %231 = vmatpush.bf16.msra.mxu0 0
  %232 = vmatpush.bf16.msra.mxu0 0
  %233 = vmatpush.bf16.msra.mxu0 0
  %234 = vmatpush.bf16.msra.mxu0 0
  %235 = vmatpush.bf16.msra.mxu0 0
  %236 = vmatpush.bf16.msra.mxu0 %v227
  %237 = vmatmul.bf16.gmra.mxu0 %v220
  %v238 = vpop.f32.mrf.mxu0
  %v239 = vadd.f32 0.0, %v238
  %v240 = vpop.f32.mrf.mxu0
  %v241 = vadd.f32 0.0, %v240
  %242 = vmatmul.bf16.gmra.mxu0 %v223
  %v243 = vpop.f32.mrf.mxu0
  %v244 = vadd.f32 0.0, %v243
  %v245 = vpop.f32.mrf.mxu0
  %v246 = vadd.f32 0.0, %v245
  %247 = vdwg.mxu0
  %v248 = vld [vmem:[%s5] sm:$0x1]
  %v250 = vperm.slane %v248, 0
  %v252 = vmul.f32 %v239, %v250
  %v253 = vmul.f32 %v241, %v250
  %v254 = vmul.f32 %v244, %v250
  %v255 = vmul.f32 %v246, %v250
  %v256 = vld [vmem:[%s6] sm:$0x1]
  %v258 = vperm.slane %v256, 0
  %v260 = vadd.f32 %v252, %v258
  %v261 = vadd.f32 %v253, %v258
  %v262 = vadd.f32 %v254, %v258
  %v263 = vadd.f32 %v255, %v258
  %v264 = vmax.f32 %v260, 0.0
  %v265 = vmax.f32 %v261, 0.0
  %v266 = vmax.f32 %v262, 0.0
  %v267 = vmax.f32 %v263, 0.0
  %268 = vst.msk [vmem:[%s7] sm:$0xff] %vm218, %v264
  %269 = vst.msk [vmem:[%s7 + $0x8] sm:$0xff] %vm218, %v265
  %270 = vst.msk [vmem:[%s7 + $0x10] sm:$0xff] %vm218, %v266
  %271 = vst.msk [vmem:[%s7 + $0x18] sm:$0xff] %vm218, %v267
  // Predicated region
  $region30: #{wide_resnet_forward.16} parent=0 // pred_check
    _
  $region31: #{wide_resnet_forward.16} parent=0 // pred_check_branch
    %273 = sbr.rel (0) target = $region33
  $region32: #{wide_resnet_forward.16} parent=0 // pred_region
    _
  $region33: #{wide_resnet_forward.16} parent=0 // pred_fallthru
    _
  // Predicated region
  $region34: #{wide_resnet_forward.16} parent=0 // pred_check
    _
  $region35: #{wide_resnet_forward.16} parent=0 // pred_check_branch
    %275 = sbr.rel (0) target = $region37
  $region36: #{wide_resnet_forward.16} parent=0 // pred_region
    _
  $region37: #{wide_resnet_forward.16} parent=0 // pred_fallthru
    _

// kernel: wide_resnet_forward.17
$region0: #{wide_resnet_forward.17}
  #allocation0 [shape = 'u32[]', space=smem, size = 0x4, offset = 0x4, fixed_abs, tag = 'smem constant byte address 0x4 - core index']
  #allocation1 [shape = 'u32[72,128]{1,0:T(1,128)}', space=vmem, size = 0x9000, scoped, tag = 'internal scratch']
  %s0 = inlined_call_operand.vmem [shape: bf16[576,32], index: 0, kind: input, shape index: {}]
  %s1 = inlined_call_operand.vmem [shape: bf16[64,576], index: 1, kind: input, shape index: {}]
  %s2 = inlined_call_operand.vmem [shape: f32[64,1], index: 2, kind: input, shape index: {}]
  %s3 = inlined_call_operand.vmem [shape: f32[64,1], index: 3, kind: input, shape index: {}]
  %s4 = inlined_call_operand.vmem [shape: bf16[32,32], index: 4, kind: input, shape index: {}]
  %s5 = inlined_call_operand.vmem [shape: bf16[64,32], index: 5, kind: input, shape index: {}]
  %s6 = inlined_call_operand.vmem [shape: f32[64,1], index: 6, kind: input, shape index: {}]
  %s7 = inlined_call_operand.vmem [shape: f32[64,1], index: 7, kind: input, shape index: {}]
  %s8 = inlined_call_operand.vmem [shape: f32[32,2], index: 8, kind: input, shape index: {}]
  %s9 = inlined_call_operand.vmem [shape: f32[10,64], index: 9, kind: input, shape index: {}]
  %s10 = inlined_call_operand.vmem [shape: f32[10,1], index: 10, kind: input, shape index: {}]
  %s11 = inlined_call_operand.vmem [shape: f32[10,2], index: 11, kind: output, shape index: {}]
  %s12 = sld [smem:[#allocation0]]
  $region54: #{wide_resnet_forward.17} parent=0
    _
  %s14 = ssub.s32 1, %s12
  %s15 = scalar_select 0, %s14, %s12
  // Predicated region
  $region2: #{wide_resnet_forward.17} parent=0 // pred_check
    _
  $region3: #{wide_resnet_forward.17} parent=0 // pred_check_branch
    %17 = sbr.rel (0) target = $region5
  $region4: #{wide_resnet_forward.17} parent=0 // pred_region
    _
  $region5: #{wide_resnet_forward.17} parent=0 // pred_fallthru
    _
  // Predicated region
  $region6: #{wide_resnet_forward.17} parent=0 // pred_check
    _
  $region7: #{wide_resnet_forward.17} parent=0 // pred_check_branch
    %19 = sbr.rel (0) target = $region9
  $region8: #{wide_resnet_forward.17} parent=0 // pred_region
    _
  $region9: #{wide_resnet_forward.17} parent=0 // pred_fallthru
    _
  // Predicated region
  $region10: #{wide_resnet_forward.17} parent=0 // pred_check
    _
  $region11: #{wide_resnet_forward.17} parent=0 // pred_check_branch
    %21 = sbr.rel (0) target = $region13
  $region12: #{wide_resnet_forward.17} parent=0 // pred_region
    _
  $region13: #{wide_resnet_forward.17} parent=0 // pred_fallthru
    _
  // Predicated region
  $region14: #{wide_resnet_forward.17} parent=0 // pred_check
    _
  $region15: #{wide_resnet_forward.17} parent=0 // pred_check_branch
    %23 = sbr.rel (0) target = $region17
  $region16: #{wide_resnet_forward.17} parent=0 // pred_region
    _
  $region17: #{wide_resnet_forward.17} parent=0 // pred_fallthru
    _
  // Predicated region
  $region18: #{wide_resnet_forward.17} parent=0 // pred_check
    _
  $region19: #{wide_resnet_forward.17} parent=0 // pred_check_branch
    %25 = sbr.rel (0) target = $region21
  $region20: #{wide_resnet_forward.17} parent=0 // pred_region
    _
  $region21: #{wide_resnet_forward.17} parent=0 // pred_fallthru
    _
  // Predicated region
  $region22: #{wide_resnet_forward.17} parent=0 // pred_check
    _
  $region23: #{wide_resnet_forward.17} parent=0 // pred_check_branch
    %27 = sbr.rel (0) target = $region25
  $region24: #{wide_resnet_forward.17} parent=0 // pred_region
    _
  $region25: #{wide_resnet_forward.17} parent=0 // pred_fallthru
    _
  // Predicated region
  $region26: #{wide_resnet_forward.17} parent=0 // pred_check
    _
  $region27: #{wide_resnet_forward.17} parent=0 // pred_check_branch
    %29 = sbr.rel (0) target = $region29
  $region28: #{wide_resnet_forward.17} parent=0 // pred_region
    _
  $region29: #{wide_resnet_forward.17} parent=0 // pred_fallthru
    _
  // Predicated region
  $region30: #{wide_resnet_forward.17} parent=0 // pred_check
    _
  $region31: #{wide_resnet_forward.17} parent=0 // pred_check_branch
    %31 = sbr.rel (0) target = $region33
  $region32: #{wide_resnet_forward.17} parent=0 // pred_region
    _
  $region33: #{wide_resnet_forward.17} parent=0 // pred_fallthru
    _
  // Predicated region
  $region34: #{wide_resnet_forward.17} parent=0 // pred_check
    _
  $region35: #{wide_resnet_forward.17} parent=0 // pred_check_branch
    %33 = sbr.rel (0) target = $region37
  $region36: #{wide_resnet_forward.17} parent=0 // pred_region
    _
  $region37: #{wide_resnet_forward.17} parent=0 // pred_fallthru
    _
  // Predicated region
  $region38: #{wide_resnet_forward.17} parent=0 // pred_check
    _
  $region39: #{wide_resnet_forward.17} parent=0 // pred_check_branch
    %35 = sbr.rel (0) target = $region41
  $region40: #{wide_resnet_forward.17} parent=0 // pred_region
    _
  $region41: #{wide_resnet_forward.17} parent=0 // pred_fallthru
    _
  // Predicated region
  $region42: #{wide_resnet_forward.17} parent=0 // pred_check
    _
  $region43: #{wide_resnet_forward.17} parent=0 // pred_check_branch
    %37 = sbr.rel (0) target = $region45
  $region44: #{wide_resnet_forward.17} parent=0 // pred_region
    _
  $region45: #{wide_resnet_forward.17} parent=0 // pred_fallthru
    _
  %v39 = vld [vmem:[%s1] sm:$0xff]
  %v40 = vld [vmem:[%s1 + $0x8] sm:$0xff]
  %v41 = vld [vmem:[%s1 + $0x10] sm:$0xf]
  %v42 = vld [vmem:[%s1 + $0x14] sm:$0xff]
  %v43 = vld [vmem:[%s1 + $0x1c] sm:$0xff]
  %v44 = vld [vmem:[%s1 + $0x24] sm:$0xf]
  %v45 = vld [vmem:[%s1 + $0x28] sm:$0xff]
  %v46 = vld [vmem:[%s1 + $0x30] sm:$0xff]
  %v47 = vld [vmem:[%s1 + $0x38] sm:$0xf]
  %v48 = vld [vmem:[%s1 + $0x3c] sm:$0xff]
  %v49 = vld [vmem:[%s1 + $0x44] sm:$0xff]
  %v50 = vld [vmem:[%s1 + $0x4c] sm:$0xf]
  %v51 = vld [vmem:[%s1 + $0x50] sm:$0xff]
  %v52 = vld [vmem:[%s1 + $0x58] sm:$0xff]
  %v53 = vld [vmem:[%s1 + $0x60] sm:$0xf]
  %v54 = vld [vmem:[%s1 + $0x64] sm:$0xff]
  %v55 = vld [vmem:[%s1 + $0x6c] sm:$0xff]
  %v56 = vld [vmem:[%s1 + $0x74] sm:$0xf]
  %v57 = vld [vmem:[%s1 + $0x78] sm:$0xff]
  %v58 = vld [vmem:[%s1 + $0x80] sm:$0xff]
  %v59 = vld [vmem:[%s1 + $0x88] sm:$0xf]
  %v60 = vld [vmem:[%s1 + $0x8c] sm:$0xff]
  %v61 = vld [vmem:[%s1 + $0x94] sm:$0xff]
  %v62 = vld [vmem:[%s1 + $0x9c] sm:$0xf]
  %v63 = vld [vmem:[%s0] sm:$0xf]
  %v64 = vld [vmem:[%s0 + $0x4] sm:$0xf]
  %v65 = vld [vmem:[%s0 + $0x8] sm:$0xf]
  %v66 = vld [vmem:[%s0 + $0xc] sm:$0xf]
  %v67 = vld [vmem:[%s0 + $0x10] sm:$0xf]
  %v68 = vld [vmem:[%s0 + $0x14] sm:$0xf]
  %v69 = vld [vmem:[%s0 + $0x18] sm:$0xf]
  %v70 = vld [vmem:[%s0 + $0x1c] sm:$0xf]
  %v71 = vld [vmem:[%s0 + $0x20] sm:$0xf]
  %v72 = vld [vmem:[%s0 + $0x24] sm:$0xf]
  %v73 = vld [vmem:[%s0 + $0x28] sm:$0xf]
  %v74 = vld [vmem:[%s0 + $0x2c] sm:$0xf]
  %v75 = vld [vmem:[%s0 + $0x30] sm:$0xf]
  %v76 = vld [vmem:[%s0 + $0x34] sm:$0xf]
  %v77 = vld [vmem:[%s0 + $0x38] sm:$0xf]
  %v78 = vld [vmem:[%s0 + $0x3c] sm:$0xf]
  %v79 = vld [vmem:[%s0 + $0x40] sm:$0xf]
  %v80 = vld [vmem:[%s0 + $0x44] sm:$0xf]
  %v81 = vld [vmem:[%s0 + $0x48] sm:$0xf]
  %v82 = vld [vmem:[%s0 + $0x4c] sm:$0xf]
  %v83 = vld [vmem:[%s0 + $0x50] sm:$0xf]
  %v84 = vld [vmem:[%s0 + $0x54] sm:$0xf]
  %v85 = vld [vmem:[%s0 + $0x58] sm:$0xf]
  %v86 = vld [vmem:[%s0 + $0x5c] sm:$0xf]
  %v87 = vld [vmem:[%s0 + $0x60] sm:$0xf]
  %v88 = vld [vmem:[%s0 + $0x64] sm:$0xf]
  %v89 = vld [vmem:[%s0 + $0x68] sm:$0xf]
  %v90 = vld [vmem:[%s0 + $0x6c] sm:$0xf]
  %v91 = vld [vmem:[%s0 + $0x70] sm:$0xf]
  %v92 = vld [vmem:[%s0 + $0x74] sm:$0xf]
  %v93 = vld [vmem:[%s0 + $0x78] sm:$0xf]
  %v94 = vld [vmem:[%s0 + $0x7c] sm:$0xf]
  %v95 = vld [vmem:[%s0 + $0x80] sm:$0xf]
  %v96 = vld [vmem:[%s0 + $0x84] sm:$0xf]
  %v97 = vld [vmem:[%s0 + $0x88] sm:$0xf]
  %v98 = vld [vmem:[%s0 + $0x8c] sm:$0xf]
  %v99 = vld [vmem:[%s0 + $0x90] sm:$0xf]
  %v100 = vld [vmem:[%s0 + $0x94] sm:$0xf]
  %v101 = vld [vmem:[%s0 + $0x98] sm:$0xf]
  %v102 = vld [vmem:[%s0 + $0x9c] sm:$0xf]
  %v103 = vld [vmem:[%s0 + $0xa0] sm:$0xf]
  %v104 = vld [vmem:[%s0 + $0xa4] sm:$0xf]
  %v105 = vld [vmem:[%s0 + $0xa8] sm:$0xf]
  %v106 = vld [vmem:[%s0 + $0xac] sm:$0xf]
  %v107 = vld [vmem:[%s0 + $0xb0] sm:$0xf]
  %v108 = vld [vmem:[%s0 + $0xb4] sm:$0xf]
  %v109 = vld [vmem:[%s0 + $0xb8] sm:$0xf]
  %v110 = vld [vmem:[%s0 + $0xbc] sm:$0xf]
  %v111 = vld [vmem:[%s0 + $0xc0] sm:$0xf]
  %v112 = vld [vmem:[%s0 + $0xc4] sm:$0xf]
  %v113 = vld [vmem:[%s0 + $0xc8] sm:$0xf]
  %v114 = vld [vmem:[%s0 + $0xcc] sm:$0xf]
  %v115 = vld [vmem:[%s0 + $0xd0] sm:$0xf]
  %v116 = vld [vmem:[%s0 + $0xd4] sm:$0xf]
  %v117 = vld [vmem:[%s0 + $0xd8] sm:$0xf]
  %v118 = vld [vmem:[%s0 + $0xdc] sm:$0xf]
  %v119 = vld [vmem:[%s0 + $0xe0] sm:$0xf]
  %v120 = vld [vmem:[%s0 + $0xe4] sm:$0xf]
  %v121 = vld [vmem:[%s0 + $0xe8] sm:$0xf]
  %v122 = vld [vmem:[%s0 + $0xec] sm:$0xf]
  %v123 = vld [vmem:[%s0 + $0xf0] sm:$0xf]
  %v124 = vld [vmem:[%s0 + $0xf4] sm:$0xf]
  %v125 = vld [vmem:[%s0 + $0xf8] sm:$0xf]
  %v126 = vld [vmem:[%s0 + $0xfc] sm:$0xf]
  %v127 = vld [vmem:[%s0 + $0x100] sm:$0xf]
  %v128 = vld [vmem:[%s0 + $0x104] sm:$0xf]
  %v129 = vld [vmem:[%s0 + $0x108] sm:$0xf]
  %v130 = vld [vmem:[%s0 + $0x10c] sm:$0xf]
  %v131 = vld [vmem:[%s0 + $0x110] sm:$0xf]
  %v132 = vld [vmem:[%s0 + $0x114] sm:$0xf]
  %v133 = vld [vmem:[%s0 + $0x118] sm:$0xf]
  %v134 = vld [vmem:[%s0 + $0x11c] sm:$0xf]
  %v159 = vunpack.c.l.b16 %v39
  %v160 = vunpack.c.h.b16 %v39
  %v161 = vunpack.c.l.b16 %v40
  %v162 = vunpack.c.h.b16 %v40
  %v163 = vunpack.c.l.b16 %v41
  %v164 = vunpack.c.l.b16 %v42
  %v165 = vunpack.c.h.b16 %v42
  %v166 = vunpack.c.l.b16 %v43
  %v167 = vunpack.c.h.b16 %v43
  %v168 = vunpack.c.l.b16 %v44
  %v169 = vunpack.c.l.b16 %v45
  %v170 = vunpack.c.h.b16 %v45
  %v171 = vunpack.c.l.b16 %v46
  %v172 = vunpack.c.h.b16 %v46
  %v173 = vunpack.c.l.b16 %v47
  %v174 = vunpack.c.l.b16 %v48
  %v175 = vunpack.c.h.b16 %v48
  %v176 = vunpack.c.l.b16 %v49
  %v177 = vunpack.c.h.b16 %v49
  %v178 = vunpack.c.l.b16 %v50
  %v179 = vunpack.c.l.b16 %v51
  %v180 = vunpack.c.h.b16 %v51
  %v181 = vunpack.c.l.b16 %v52
  %v182 = vunpack.c.h.b16 %v52
  %v183 = vunpack.c.l.b16 %v53
  %v184 = vunpack.c.l.b16 %v54
  %v185 = vunpack.c.h.b16 %v54
  %v186 = vunpack.c.l.b16 %v55
  %v187 = vunpack.c.h.b16 %v55
  %v188 = vunpack.c.l.b16 %v56
  %v189 = vunpack.c.l.b16 %v57
  %v190 = vunpack.c.h.b16 %v57
  %v191 = vunpack.c.l.b16 %v58
  %v192 = vunpack.c.h.b16 %v58
  %v193 = vunpack.c.l.b16 %v59
  %v194 = vunpack.c.l.b16 %v60
  %v195 = vunpack.c.h.b16 %v60
  %v196 = vunpack.c.l.b16 %v61
  %v197 = vunpack.c.h.b16 %v61
  %v198 = vunpack.c.l.b16 %v62
  %v199 = vpack.c.b16 %v164, %v159
  %v200 = vpack.c.b16 %v165, %v160
  %v201 = vpack.c.b16 %v166, %v161
  %v202 = vpack.c.b16 %v167, %v162
  %v203 = vpack.c.b16 %v168, %v163
  %v204 = vpack.c.b16 %v174, %v169
  %v205 = vpack.c.b16 %v175, %v170
  %v206 = vpack.c.b16 %v176, %v171
  %v207 = vpack.c.b16 %v177, %v172
  %v208 = vpack.c.b16 %v178, %v173
  %v209 = vpack.c.b16 %v184, %v179
  %v210 = vpack.c.b16 %v185, %v180
  %v211 = vpack.c.b16 %v186, %v181
  %v212 = vpack.c.b16 %v187, %v182
  %v213 = vpack.c.b16 %v188, %v183
  %v214 = vpack.c.b16 %v194, %v189
  %v215 = vpack.c.b16 %v195, %v190
  %v216 = vpack.c.b16 %v196, %v191
  %v217 = vpack.c.b16 %v197, %v192
  %v218 = vpack.c.b16 %v198, %v193
  %v307 = vunpack.c.l.b16 %v63
  %v308 = vunpack.c.l.b16 %v64
  %v309 = vunpack.c.l.b16 %v65
  %v310 = vunpack.c.l.b16 %v66
  %v311 = vunpack.c.l.b16 %v67
  %v312 = vunpack.c.l.b16 %v68
  %v313 = vunpack.c.l.b16 %v69
  %v314 = vunpack.c.l.b16 %v70
  %v315 = vunpack.c.l.b16 %v71
  %v316 = vunpack.c.l.b16 %v72
  %v317 = vunpack.c.l.b16 %v73
  %v318 = vunpack.c.l.b16 %v74
  %v319 = vunpack.c.l.b16 %v75
  %v320 = vunpack.c.l.b16 %v76
  %v321 = vunpack.c.l.b16 %v77
  %v322 = vunpack.c.l.b16 %v78
  %v323 = vunpack.c.l.b16 %v79
  %v324 = vunpack.c.l.b16 %v80
  %v325 = vunpack.c.l.b16 %v81
  %v326 = vunpack.c.l.b16 %v82
  %v327 = vunpack.c.l.b16 %v83
  %v328 = vunpack.c.l.b16 %v84
  %v329 = vunpack.c.l.b16 %v85
  %v330 = vunpack.c.l.b16 %v86
  %v331 = vunpack.c.l.b16 %v87
  %v332 = vunpack.c.l.b16 %v88
  %v333 = vunpack.c.l.b16 %v89
  %v334 = vunpack.c.l.b16 %v90
  %v335 = vunpack.c.l.b16 %v91
  %v336 = vunpack.c.l.b16 %v92
  %v337 = vunpack.c.l.b16 %v93
  %v338 = vunpack.c.l.b16 %v94
  %v339 = vunpack.c.l.b16 %v95
  %v340 = vunpack.c.l.b16 %v96
  %v341 = vunpack.c.l.b16 %v97
  %v342 = vunpack.c.l.b16 %v98
  %v343 = vunpack.c.l.b16 %v99
  %v344 = vunpack.c.l.b16 %v100
  %v345 = vunpack.c.l.b16 %v101
  %v346 = vunpack.c.l.b16 %v102
  %v347 = vunpack.c.l.b16 %v103
  %v348 = vunpack.c.l.b16 %v104
  %v349 = vunpack.c.l.b16 %v105
  %v350 = vunpack.c.l.b16 %v106
  %v351 = vunpack.c.l.b16 %v107
  %v352 = vunpack.c.l.b16 %v108
  %v353 = vunpack.c.l.b16 %v109
  %v354 = vunpack.c.l.b16 %v110
  %v355 = vunpack.c.l.b16 %v111
  %v356 = vunpack.c.l.b16 %v112
  %v357 = vunpack.c.l.b16 %v113
  %v358 = vunpack.c.l.b16 %v114
  %v359 = vunpack.c.l.b16 %v115
  %v360 = vunpack.c.l.b16 %v116
  %v361 = vunpack.c.l.b16 %v117
  %v362 = vunpack.c.l.b16 %v118
  %v363 = vunpack.c.l.b16 %v119
  %v364 = vunpack.c.l.b16 %v120
  %v365 = vunpack.c.l.b16 %v121
  %v366 = vunpack.c.l.b16 %v122
  %v367 = vunpack.c.l.b16 %v123
  %v368 = vunpack.c.l.b16 %v124
  %v369 = vunpack.c.l.b16 %v125
  %v370 = vunpack.c.l.b16 %v126
  %v371 = vunpack.c.l.b16 %v127
  %v372 = vunpack.c.l.b16 %v128
  %v373 = vunpack.c.l.b16 %v129
  %v374 = vunpack.c.l.b16 %v130
  %v375 = vunpack.c.l.b16 %v131
  %v376 = vunpack.c.l.b16 %v132
  %v377 = vunpack.c.l.b16 %v133
  %v378 = vunpack.c.l.b16 %v134
  %v379 = vpack.c.b16 %v308, %v307
  %v380 = vpack.c.b16 %v310, %v309
  %v381 = vpack.c.b16 %v312, %v311
  %v382 = vpack.c.b16 %v314, %v313
  %v383 = vpack.c.b16 %v316, %v315
  %v384 = vpack.c.b16 %v318, %v317
  %v385 = vpack.c.b16 %v320, %v319
  %v386 = vpack.c.b16 %v322, %v321
  %v387 = vpack.c.b16 %v324, %v323
  %v388 = vpack.c.b16 %v326, %v325
  %v389 = vpack.c.b16 %v328, %v327
  %v390 = vpack.c.b16 %v330, %v329
  %v391 = vpack.c.b16 %v332, %v331
  %v392 = vpack.c.b16 %v334, %v333
  %v393 = vpack.c.b16 %v336, %v335
  %v394 = vpack.c.b16 %v338, %v337
  %v395 = vpack.c.b16 %v340, %v339
  %v396 = vpack.c.b16 %v342, %v341
  %v397 = vpack.c.b16 %v344, %v343
  %v398 = vpack.c.b16 %v346, %v345
  %v399 = vpack.c.b16 %v348, %v347
  %v400 = vpack.c.b16 %v350, %v349
  %v401 = vpack.c.b16 %v352, %v351
  %v402 = vpack.c.b16 %v354, %v353
  %v403 = vpack.c.b16 %v356, %v355
  %v404 = vpack.c.b16 %v358, %v357
  %v405 = vpack.c.b16 %v360, %v359
  %v406 = vpack.c.b16 %v362, %v361
  %v407 = vpack.c.b16 %v364, %v363
  %v408 = vpack.c.b16 %v366, %v365
  %v409 = vpack.c.b16 %v368, %v367
  %v410 = vpack.c.b16 %v370, %v369
  %v411 = vpack.c.b16 %v372, %v371
  %v412 = vpack.c.b16 %v374, %v373
  %v413 = vpack.c.b16 %v376, %v375
  %v414 = vpack.c.b16 %v378, %v377
  %vm451 = vcmask 523264
  %v453 = vsel %vm451, %v203, 0
  %v456 = vsel %vm451, %v208, 0
  %v459 = vsel %vm451, %v213, 0
  %v462 = vsel %vm451, %v218, 0
  %464 = vmatpush.bf16.msra.mxu0 %v386
  %465 = vmatpush.bf16.msra.mxu0 %v385
  %466 = vmatpush.bf16.msra.mxu0 %v384
  %467 = vmatpush.bf16.msra.mxu0 %v383
  %468 = vmatpush.bf16.msra.mxu0 %v382
  %469 = vmatpush.bf16.msra.mxu0 %v381
  %470 = vmatpush.bf16.msra.mxu0 %v380
  %471 = vmatpush.bf16.msra.mxu0 %v379
  %472 = vmatmul.bf16.gmra.mxu0 %v199
  %v473 = vpop.f32.mrf.mxu0
  %v474 = vadd.f32 0.0, %v473
  %v475 = vpop.f32.mrf.mxu0
  %v476 = vadd.f32 0.0, %v475
  %477 = vmatmul.bf16.gmra.mxu0 %v204
  %v478 = vpop.f32.mrf.mxu0
  %v479 = vadd.f32 0.0, %v478
  %v480 = vpop.f32.mrf.mxu0
  %v481 = vadd.f32 0.0, %v480
  %482 = vmatmul.bf16.gmra.mxu0 %v209
  %v483 = vpop.f32.mrf.mxu0
  %v484 = vadd.f32 0.0, %v483
  %v485 = vpop.f32.mrf.mxu0
  %v486 = vadd.f32 0.0, %v485
  %487 = vmatmul.bf16.gmra.mxu0 %v214
  %v488 = vpop.f32.mrf.mxu0
  %v489 = vadd.f32 0.0, %v488
  %v490 = vpop.f32.mrf.mxu0
  %v491 = vadd.f32 0.0, %v490
  %492 = vdwg.mxu0
  %493 = vmatpush.bf16.msra.mxu0 %v394
  %494 = vmatpush.bf16.msra.mxu0 %v393
  %495 = vmatpush.bf16.msra.mxu0 %v392
  %496 = vmatpush.bf16.msra.mxu0 %v391
  %497 = vmatpush.bf16.msra.mxu0 %v390
  %498 = vmatpush.bf16.msra.mxu0 %v389
  %499 = vmatpush.bf16.msra.mxu0 %v388
  %500 = vmatpush.bf16.msra.mxu0 %v387
  %501 = vmatmul.bf16.gmra.mxu0 %v200
  %v502 = vpop.f32.mrf.mxu0
  %v503 = vadd.f32 %v474, %v502
  %v504 = vpop.f32.mrf.mxu0
  %v505 = vadd.f32 %v476, %v504
  %506 = vmatmul.bf16.gmra.mxu0 %v205
  %v507 = vpop.f32.mrf.mxu0
  %v508 = vadd.f32 %v479, %v507
  %v509 = vpop.f32.mrf.mxu0
  %v510 = vadd.f32 %v481, %v509
  %511 = vmatmul.bf16.gmra.mxu0 %v210
  %v512 = vpop.f32.mrf.mxu0
  %v513 = vadd.f32 %v484, %v512
  %v514 = vpop.f32.mrf.mxu0
  %v515 = vadd.f32 %v486, %v514
  %516 = vmatmul.bf16.gmra.mxu0 %v215
  %v517 = vpop.f32.mrf.mxu0
  %v518 = vadd.f32 %v489, %v517
  %v519 = vpop.f32.mrf.mxu0
  %v520 = vadd.f32 %v491, %v519
  %521 = vdwg.mxu0
  %522 = vmatpush.bf16.msra.mxu0 %v402
  %523 = vmatpush.bf16.msra.mxu0 %v401
  %524 = vmatpush.bf16.msra.mxu0 %v400
  %525 = vmatpush.bf16.msra.mxu0 %v399
  %526 = vmatpush.bf16.msra.mxu0 %v398
  %527 = vmatpush.bf16.msra.mxu0 %v397
  %528 = vmatpush.bf16.msra.mxu0 %v396
  %529 = vmatpush.bf16.msra.mxu0 %v395
  %530 = vmatmul.bf16.gmra.mxu0 %v201
  %v531 = vpop.f32.mrf.mxu0
  %v532 = vadd.f32 %v503, %v531
  %v533 = vpop.f32.mrf.mxu0
  %v534 = vadd.f32 %v505, %v533
  %535 = vmatmul.bf16.gmra.mxu0 %v206
  %v536 = vpop.f32.mrf.mxu0
  %v537 = vadd.f32 %v508, %v536
  %v538 = vpop.f32.mrf.mxu0
  %v539 = vadd.f32 %v510, %v538
  %540 = vmatmul.bf16.gmra.mxu0 %v211
  %v541 = vpop.f32.mrf.mxu0
  %v542 = vadd.f32 %v513, %v541
  %v543 = vpop.f32.mrf.mxu0
  %v544 = vadd.f32 %v515, %v543
  %545 = vmatmul.bf16.gmra.mxu0 %v216
  %v546 = vpop.f32.mrf.mxu0
  %v547 = vadd.f32 %v518, %v546
  %v548 = vpop.f32.mrf.mxu0
  %v549 = vadd.f32 %v520, %v548
  %550 = vdwg.mxu0
  %551 = vmatpush.bf16.msra.mxu0 %v410
  %552 = vmatpush.bf16.msra.mxu0 %v409
  %553 = vmatpush.bf16.msra.mxu0 %v408
  %554 = vmatpush.bf16.msra.mxu0 %v407
  %555 = vmatpush.bf16.msra.mxu0 %v406
  %556 = vmatpush.bf16.msra.mxu0 %v405
  %557 = vmatpush.bf16.msra.mxu0 %v404
  %558 = vmatpush.bf16.msra.mxu0 %v403
  %559 = vmatmul.bf16.gmra.mxu0 %v202
  %v560 = vpop.f32.mrf.mxu0
  %v561 = vadd.f32 %v532, %v560
  %v562 = vpop.f32.mrf.mxu0
  %v563 = vadd.f32 %v534, %v562
  %564 = vmatmul.bf16.gmra.mxu0 %v207
  %v565 = vpop.f32.mrf.mxu0
  %v566 = vadd.f32 %v537, %v565
  %v567 = vpop.f32.mrf.mxu0
  %v568 = vadd.f32 %v539, %v567
  %569 = vmatmul.bf16.gmra.mxu0 %v212
  %v570 = vpop.f32.mrf.mxu0
  %v571 = vadd.f32 %v542, %v570
  %v572 = vpop.f32.mrf.mxu0
  %v573 = vadd.f32 %v544, %v572
  %574 = vmatmul.bf16.gmra.mxu0 %v217
  %v575 = vpop.f32.mrf.mxu0
  %v576 = vadd.f32 %v547, %v575
  %v577 = vpop.f32.mrf.mxu0
  %v578 = vadd.f32 %v549, %v577
  %579 = vdwg.mxu0
  %580 = vmatpush.bf16.msra.mxu0 0
  %581 = vmatpush.bf16.msra.mxu0 0
  %582 = vmatpush.bf16.msra.mxu0 0
  %583 = vmatpush.bf16.msra.mxu0 0
  %584 = vmatpush.bf16.msra.mxu0 %v414
  %585 = vmatpush.bf16.msra.mxu0 %v413
  %586 = vmatpush.bf16.msra.mxu0 %v412
  %587 = vmatpush.bf16.msra.mxu0 %v411
  %588 = vmatmul.bf16.gmra.mxu0 %v453
  %v589 = vpop.f32.mrf.mxu0
  %v590 = vadd.f32 %v561, %v589
  %v591 = vpop.f32.mrf.mxu0
  %v592 = vadd.f32 %v563, %v591
  %593 = vmatmul.bf16.gmra.mxu0 %v456
  %v594 = vpop.f32.mrf.mxu0
  %v595 = vadd.f32 %v566, %v594
  %v596 = vpop.f32.mrf.mxu0
  %v597 = vadd.f32 %v568, %v596
  %598 = vmatmul.bf16.gmra.mxu0 %v459
  %v599 = vpop.f32.mrf.mxu0
  %v600 = vadd.f32 %v571, %v599
  %v601 = vpop.f32.mrf.mxu0
  %v602 = vadd.f32 %v573, %v601
  %603 = vmatmul.bf16.gmra.mxu0 %v462
  %v604 = vpop.f32.mrf.mxu0
  %v605 = vadd.f32 %v576, %v604
  %v606 = vpop.f32.mrf.mxu0
  %v607 = vadd.f32 %v578, %v606
  %608 = vdwg.mxu0
  %v609 = vld [vmem:[%s2] sm:$0xff]
  %v610 = vld [vmem:[%s2 + $0x8] sm:$0xff]
  %v611 = vld [vmem:[%s2 + $0x10] sm:$0xff]
  %v612 = vld [vmem:[%s2 + $0x18] sm:$0xff]
  %v613 = vld [vmem:[%s2 + $0x20] sm:$0xff]
  %v614 = vld [vmem:[%s2 + $0x28] sm:$0xff]
  %v615 = vld [vmem:[%s2 + $0x30] sm:$0xff]
  %v616 = vld [vmem:[%s2 + $0x38] sm:$0xff]
  %618 = vset.pattern.permute.xlu0 0
  %619 = vperm.xlu0 %618, %v609
  %v620 = vpop.permute.xlu0 %619
  %623 = vset.pattern.permute.xlu0 0
  %624 = vperm.xlu0 %623, %v610
  %v625 = vpop.permute.xlu0 %624
  %628 = vset.pattern.permute.xlu0 0
  %629 = vperm.xlu0 %628, %v611
  %v630 = vpop.permute.xlu0 %629
  %633 = vset.pattern.permute.xlu0 0
  %634 = vperm.xlu0 %633, %v612
  %v635 = vpop.permute.xlu0 %634
  %638 = vset.pattern.permute.xlu0 0
  %639 = vperm.xlu0 %638, %v613
  %v640 = vpop.permute.xlu0 %639
  %643 = vset.pattern.permute.xlu0 0
  %644 = vperm.xlu0 %643, %v614
  %v645 = vpop.permute.xlu0 %644
  %648 = vset.pattern.permute.xlu0 0
  %649 = vperm.xlu0 %648, %v615
  %v650 = vpop.permute.xlu0 %649
  %653 = vset.pattern.permute.xlu0 0
  %654 = vperm.xlu0 %653, %v616
  %v655 = vpop.permute.xlu0 %654
  %v657 = vmul.f32 %v590, %v620
  %v658 = vmul.f32 %v592, %v625
  %v659 = vmul.f32 %v595, %v630
  %v660 = vmul.f32 %v597, %v635
  %v661 = vmul.f32 %v600, %v640
  %v662 = vmul.f32 %v602, %v645
  %v663 = vmul.f32 %v605, %v650
  %v664 = vmul.f32 %v607, %v655
  %v665 = vld [vmem:[%s3] sm:$0xff]
  %v666 = vld [vmem:[%s3 + $0x8] sm:$0xff]
  %v667 = vld [vmem:[%s3 + $0x10] sm:$0xff]
  %v668 = vld [vmem:[%s3 + $0x18] sm:$0xff]
  %v669 = vld [vmem:[%s3 + $0x20] sm:$0xff]
  %v670 = vld [vmem:[%s3 + $0x28] sm:$0xff]
  %v671 = vld [vmem:[%s3 + $0x30] sm:$0xff]
  %v672 = vld [vmem:[%s3 + $0x38] sm:$0xff]
  %674 = vset.pattern.permute.xlu0 0
  %675 = vperm.xlu0 %674, %v665
  %v676 = vpop.permute.xlu0 %675
  %679 = vset.pattern.permute.xlu0 0
  %680 = vperm.xlu0 %679, %v666
  %v681 = vpop.permute.xlu0 %680
  %684 = vset.pattern.permute.xlu0 0
  %685 = vperm.xlu0 %684, %v667
  %v686 = vpop.permute.xlu0 %685
  %689 = vset.pattern.permute.xlu0 0
  %690 = vperm.xlu0 %689, %v668
  %v691 = vpop.permute.xlu0 %690
  %694 = vset.pattern.permute.xlu0 0
  %695 = vperm.xlu0 %694, %v669
  %v696 = vpop.permute.xlu0 %695
  %699 = vset.pattern.permute.xlu0 0
  %700 = vperm.xlu0 %699, %v670
  %v701 = vpop.permute.xlu0 %700
  %704 = vset.pattern.permute.xlu0 0
  %705 = vperm.xlu0 %704, %v671
  %v706 = vpop.permute.xlu0 %705
  %709 = vset.pattern.permute.xlu0 0
  %710 = vperm.xlu0 %709, %v672
  %v711 = vpop.permute.xlu0 %710
  %v713 = vadd.f32 %v657, %v676
  %v714 = vadd.f32 %v658, %v681
  %v715 = vadd.f32 %v659, %v686
  %v716 = vadd.f32 %v660, %v691
  %v717 = vadd.f32 %v661, %v696
  %v718 = vadd.f32 %v662, %v701
  %v719 = vadd.f32 %v663, %v706
  %v720 = vadd.f32 %v664, %v711
  %v721 = vld [vmem:[%s5] sm:$0xf]
  %v722 = vld [vmem:[%s5 + $0x4] sm:$0xf]
  %v723 = vld [vmem:[%s5 + $0x8] sm:$0xf]
  %v724 = vld [vmem:[%s5 + $0xc] sm:$0xf]
  %v725 = vld [vmem:[%s5 + $0x10] sm:$0xf]
  %v726 = vld [vmem:[%s5 + $0x14] sm:$0xf]
  %v727 = vld [vmem:[%s5 + $0x18] sm:$0xf]
  %v728 = vld [vmem:[%s5 + $0x1c] sm:$0xf]
  %v729 = vld [vmem:[%s4] sm:$0xf]
  %v730 = vld [vmem:[%s4 + $0x4] sm:$0xf]
  %v731 = vld [vmem:[%s4 + $0x8] sm:$0xf]
  %v732 = vld [vmem:[%s4 + $0xc] sm:$0xf]
  %v741 = vunpack.c.l.b16 %v721
  %v742 = vunpack.c.l.b16 %v722
  %v743 = vunpack.c.l.b16 %v723
  %v744 = vunpack.c.l.b16 %v724
  %v745 = vunpack.c.l.b16 %v725
  %v746 = vunpack.c.l.b16 %v726
  %v747 = vunpack.c.l.b16 %v727
  %v748 = vunpack.c.l.b16 %v728
  %v749 = vpack.c.b16 %v742, %v741
  %v750 = vpack.c.b16 %v744, %v743
  %v751 = vpack.c.b16 %v746, %v745
  %v752 = vpack.c.b16 %v748, %v747
  %v757 = vunpack.c.l.b16 %v729
  %v758 = vunpack.c.l.b16 %v730
  %v759 = vunpack.c.l.b16 %v731
  %v760 = vunpack.c.l.b16 %v732
  %v761 = vpack.c.b16 %v758, %v757
  %v762 = vpack.c.b16 %v760, %v759
  %vm765 = vcmask 261120
  %v767 = vsel %vm765, %v749, 0
  %v770 = vsel %vm765, %v750, 0
  %v773 = vsel %vm765, %v751, 0
  %v776 = vsel %vm765, %v752, 0
  %778 = vmatpush.bf16.msra.mxu0 0
  %779 = vmatpush.bf16.msra.mxu0 0
  %780 = vmatpush.bf16.msra.mxu0 0
  %781 = vmatpush.bf16.msra.mxu0 0
  %782 = vmatpush.bf16.msra.mxu0 0
  %783 = vmatpush.bf16.msra.mxu0 0
  %784 = vmatpush.bf16.msra.mxu0 %v762
  %785 = vmatpush.bf16.msra.mxu0 %v761
  %786 = vmatmul.bf16.gmra.mxu0 %v767
  %v787 = vpop.f32.mrf.mxu0
  %v788 = vadd.f32 0.0, %v787
  %v789 = vpop.f32.mrf.mxu0
  %v790 = vadd.f32 0.0, %v789
  %791 = vmatmul.bf16.gmra.mxu0 %v770
  %v792 = vpop.f32.mrf.mxu0
  %v793 = vadd.f32 0.0, %v792
  %v794 = vpop.f32.mrf.mxu0
  %v795 = vadd.f32 0.0, %v794
  %796 = vmatmul.bf16.gmra.mxu0 %v773
  %v797 = vpop.f32.mrf.mxu0
  %v798 = vadd.f32 0.0, %v797
  %v799 = vpop.f32.mrf.mxu0
  %v800 = vadd.f32 0.0, %v799
  %801 = vmatmul.bf16.gmra.mxu0 %v776
  %v802 = vpop.f32.mrf.mxu0
  %v803 = vadd.f32 0.0, %v802
  %v804 = vpop.f32.mrf.mxu0
  %v805 = vadd.f32 0.0, %v804
  %806 = vdwg.mxu0
  %v807 = vld [vmem:[%s6] sm:$0xff]
  %v808 = vld [vmem:[%s6 + $0x8] sm:$0xff]
  %v809 = vld [vmem:[%s6 + $0x10] sm:$0xff]
  %v810 = vld [vmem:[%s6 + $0x18] sm:$0xff]
  %v811 = vld [vmem:[%s6 + $0x20] sm:$0xff]
  %v812 = vld [vmem:[%s6 + $0x28] sm:$0xff]
  %v813 = vld [vmem:[%s6 + $0x30] sm:$0xff]
  %v814 = vld [vmem:[%s6 + $0x38] sm:$0xff]
  %816 = vset.pattern.permute.xlu0 0
  %817 = vperm.xlu0 %816, %v807
  %v818 = vpop.permute.xlu0 %817
  %821 = vset.pattern.permute.xlu0 0
  %822 = vperm.xlu0 %821, %v808
  %v823 = vpop.permute.xlu0 %822
  %826 = vset.pattern.permute.xlu0 0
  %827 = vperm.xlu0 %826, %v809
  %v828 = vpop.permute.xlu0 %827
  %831 = vset.pattern.permute.xlu0 0
  %832 = vperm.xlu0 %831, %v810
  %v833 = vpop.permute.xlu0 %832
  %836 = vset.pattern.permute.xlu0 0
  %837 = vperm.xlu0 %836, %v811
  %v838 = vpop.permute.xlu0 %837
  %841 = vset.pattern.permute.xlu0 0
  %842 = vperm.xlu0 %841, %v812
  %v843 = vpop.permute.xlu0 %842
  %846 = vset.pattern.permute.xlu0 0
  %847 = vperm.xlu0 %846, %v813
  %v848 = vpop.permute.xlu0 %847
  %851 = vset.pattern.permute.xlu0 0
  %852 = vperm.xlu0 %851, %v814
  %v853 = vpop.permute.xlu0 %852
  %v855 = vmul.f32 %v788, %v818
  %v856 = vmul.f32 %v790, %v823
  %v857 = vmul.f32 %v793, %v828
  %v858 = vmul.f32 %v795, %v833
  %v859 = vmul.f32 %v798, %v838
  %v860 = vmul.f32 %v800, %v843
  %v861 = vmul.f32 %v803, %v848
  %v862 = vmul.f32 %v805, %v853
  %v863 = vld [vmem:[%s7] sm:$0xff]
  %v864 = vld [vmem:[%s7 + $0x8] sm:$0xff]
  %v865 = vld [vmem:[%s7 + $0x10] sm:$0xff]
  %v866 = vld [vmem:[%s7 + $0x18] sm:$0xff]
  %v867 = vld [vmem:[%s7 + $0x20] sm:$0xff]
  %v868 = vld [vmem:[%s7 + $0x28] sm:$0xff]
  %v869 = vld [vmem:[%s7 + $0x30] sm:$0xff]
  %v870 = vld [vmem:[%s7 + $0x38] sm:$0xff]
  %872 = vset.pattern.permute.xlu0 0
  %873 = vperm.xlu0 %872, %v863
  %v874 = vpop.permute.xlu0 %873
  %877 = vset.pattern.permute.xlu0 0
  %878 = vperm.xlu0 %877, %v864
  %v879 = vpop.permute.xlu0 %878
  %882 = vset.pattern.permute.xlu0 0
  %883 = vperm.xlu0 %882, %v865
  %v884 = vpop.permute.xlu0 %883
  %887 = vset.pattern.permute.xlu0 0
  %888 = vperm.xlu0 %887, %v866
  %v889 = vpop.permute.xlu0 %888
  %892 = vset.pattern.permute.xlu0 0
  %893 = vperm.xlu0 %892, %v867
  %v894 = vpop.permute.xlu0 %893
  %897 = vset.pattern.permute.xlu0 0
  %898 = vperm.xlu0 %897, %v868
  %v899 = vpop.permute.xlu0 %898
  %902 = vset.pattern.permute.xlu0 0
  %903 = vperm.xlu0 %902, %v869
  %v904 = vpop.permute.xlu0 %903
  %907 = vset.pattern.permute.xlu0 0
  %908 = vperm.xlu0 %907, %v870
  %v909 = vpop.permute.xlu0 %908
  %v911 = vadd.f32 %v855, %v874
  %v912 = vadd.f32 %v856, %v879
  %v913 = vadd.f32 %v857, %v884
  %v914 = vadd.f32 %v858, %v889
  %v915 = vadd.f32 %v859, %v894
  %v916 = vadd.f32 %v860, %v899
  %v917 = vadd.f32 %v861, %v904
  %v918 = vadd.f32 %v862, %v909
  %v919 = vadd.f32 %v713, %v911
  %v920 = vadd.f32 %v714, %v912
  %v921 = vadd.f32 %v715, %v913
  %v922 = vadd.f32 %v716, %v914
  %v923 = vadd.f32 %v717, %v915
  %v924 = vadd.f32 %v718, %v916
  %v925 = vadd.f32 %v719, %v917
  %v926 = vadd.f32 %v720, %v918
  %v927 = vmax.f32 %v919, 0.0
  %v928 = vmax.f32 %v920, 0.0
  %v929 = vmax.f32 %v921, 0.0
  %v930 = vmax.f32 %v922, 0.0
  %v931 = vmax.f32 %v923, 0.0
  %v932 = vmax.f32 %v924, 0.0
  %v933 = vmax.f32 %v925, 0.0
  %v934 = vmax.f32 %v926, 0.0
  %v935 = vld [vmem:[%s8] sm:$0xff]
  %v936 = vld [vmem:[%s8 + $0x8] sm:$0xff]
  %v937 = vld [vmem:[%s8 + $0x10] sm:$0xff]
  %v938 = vld [vmem:[%s8 + $0x18] sm:$0xff]
  %v940 = vsel %vm765, %v927, 0
  %v943 = vsel %vm765, %v928, 0
  %v946 = vsel %vm765, %v929, 0
  %v949 = vsel %vm765, %v930, 0
  %v952 = vsel %vm765, %v931, 0
  %v955 = vsel %vm765, %v932, 0
  %v958 = vsel %vm765, %v933, 0
  %v961 = vsel %vm765, %v934, 0
  %963 = vmatpush.msra.mxu0 0.0
  %964 = vmatpush.msra.mxu0 0.0
  %965 = vmatpush.msra.mxu0 0.0
  %966 = vmatpush.msra.mxu0 0.0
  %967 = vmatpush.msra.mxu0 0.0
  %968 = vmatpush.msra.mxu0 0.0
  %969 = vmatpush.msra.mxu0 0.0
  %970 = vmatpush.msra.mxu0 0.0
  %971 = vmatpush.msra.mxu0 0.0
  %972 = vmatpush.msra.mxu0 0.0
  %973 = vmatpush.msra.mxu0 0.0
  %974 = vmatpush.msra.mxu0 0.0
  %975 = vmatpush.msra.mxu0 %v938
  %976 = vmatpush.msra.mxu0 %v937
  %977 = vmatpush.msra.mxu0 %v936
  %978 = vmatpush.msra.mxu0 %v935
  %979 = vmatmul.f32.gmra.mxu0 %v940
  %v980 = vpop.f32.mrf.mxu0
  %v981 = vadd.f32 0.0, %v980
  %982 = vmatmul.f32.gmra.mxu0 %v943
  %v983 = vpop.f32.mrf.mxu0
  %v984 = vadd.f32 0.0, %v983
  %985 = vmatmul.f32.gmra.mxu0 %v946
  %v986 = vpop.f32.mrf.mxu0
  %v987 = vadd.f32 0.0, %v986
  %988 = vmatmul.f32.gmra.mxu0 %v949
  %v989 = vpop.f32.mrf.mxu0
  %v990 = vadd.f32 0.0, %v989
  %991 = vmatmul.f32.gmra.mxu0 %v952
  %v992 = vpop.f32.mrf.mxu0
  %v993 = vadd.f32 0.0, %v992
  %994 = vmatmul.f32.gmra.mxu0 %v955
  %v995 = vpop.f32.mrf.mxu0
  %v996 = vadd.f32 0.0, %v995
  %997 = vmatmul.f32.gmra.mxu0 %v958
  %v998 = vpop.f32.mrf.mxu0
  %v999 = vadd.f32 0.0, %v998
  %1000 = vmatmul.f32.gmra.mxu0 %v961
  %v1001 = vpop.f32.mrf.mxu0
  %v1002 = vadd.f32 0.0, %v1001
  %1003 = vdwg.mxu0
  %v1004 = vld [vmem:[%s9] sm:$0xff]
  %v1005 = vld [vmem:[%s9 + $0x8] sm:$0x3]
  %v1006 = vld [vmem:[%s10] sm:$0xff]
  %v1007 = vld [vmem:[%s10 + $0x8] sm:$0x3]
  %1009 = vset.pattern.permute.xlu0 0
  %1010 = vperm.xlu0 %1009, %v1006
  %v1011 = vpop.permute.xlu0 %1010
  %1014 = vset.pattern.permute.xlu0 0
  %1015 = vperm.xlu0 %1014, %v1007
  %v1016 = vpop.permute.xlu0 %1015
  %v1019 = vsel %vm451, %v1004, 0
  %v1022 = vsel %vm451, %v1005, 0
  %1024 = vmatpush.msra.mxu0 0.0
  %1025 = vmatpush.msra.mxu0 0.0
  %1026 = vmatpush.msra.mxu0 0.0
  %1027 = vmatpush.msra.mxu0 0.0
  %1028 = vmatpush.msra.mxu0 0.0
  %1029 = vmatpush.msra.mxu0 0.0
  %1030 = vmatpush.msra.mxu0 0.0
  %1031 = vmatpush.msra.mxu0 0.0
  %1032 = vmatpush.msra.mxu0 %v1002
  %1033 = vmatpush.msra.mxu0 %v999
  %1034 = vmatpush.msra.mxu0 %v996
  %1035 = vmatpush.msra.mxu0 %v993
  %1036 = vmatpush.msra.mxu0 %v990
  %1037 = vmatpush.msra.mxu0 %v987
  %1038 = vmatpush.msra.mxu0 %v984
  %1039 = vmatpush.msra.mxu0 %v981
  %1040 = vmatmul.f32.gmra.mxu0 %v1019
  %v1041 = vpop.f32.mrf.mxu0
  %v1042 = vadd.f32 %v1011, %v1041
  %1043 = vmatmul.f32.gmra.mxu0 %v1022
  %v1044 = vpop.f32.mrf.mxu0
  %v1045 = vadd.f32 %v1016, %v1044
  %1046 = vdwg.mxu0
  %vm1047 = vcmask 15360
  %1048 = vst.msk [vmem:[%s11] sm:$0xff] %vm1047, %v1042
  %vm1049 = vcmask 9216
  %1050 = vst.msk [vmem:[%s11 + $0x8] sm:$0x3] %vm1049, %v1045
  // Predicated region
  $region46: #{wide_resnet_forward.17} parent=0 // pred_check
    _
  $region47: #{wide_resnet_forward.17} parent=0 // pred_check_branch
    %1052 = sbr.rel (0) target = $region49
  $region48: #{wide_resnet_forward.17} parent=0 // pred_region
    _
  $region49: #{wide_resnet_forward.17} parent=0 // pred_fallthru
    _
  // Predicated region
  $region50: #{wide_resnet_forward.17} parent=0 // pred_check
    _
  $region51: #{wide_resnet_forward.17} parent=0 // pred_check_branch
    %1054 = sbr.rel (0) target = $region53
  $region52: #{wide_resnet_forward.17} parent=0 // pred_region
    _
  $region53: #{wide_resnet_forward.17} parent=0 // pred_fallthru
    _

</llo_original>
